<compile_context>
chip_gen: v5e
topology: v5e:2x2
jax: 0.10.0
libtpu: 0.0.40
codegen_flags: <defaults>
</compile_context>

<pallas_src>
import functools

import jax
import jax.numpy as jnp
from jax.experimental import pallas as pl
from jax.experimental.pallas import tpu as pltpu


# ----------------------------------------------------------------------------
# Padding helpers (zero padding is inert for the GRU recurrence)
# ----------------------------------------------------------------------------
def _round_up(x, m):
    return ((x + m - 1) // m) * m


def _pad_axis(a, axis, new_size):
    pads = [(0, 0)] * a.ndim
    pads[axis] = (0, new_size - a.shape[axis])
    return jnp.pad(a, pads)


def _pad_gates(w, h, hp):
    """(..., 3h) -> (..., 3hp): zero-pad each of the r/z/n gate blocks to hp."""
    parts = [_pad_axis(w[..., g * h:(g + 1) * h], -1, hp) for g in range(3)]
    return jnp.concatenate(parts, axis=-1)


# ----------------------------------------------------------------------------
# Fused kernel: num_layers GRU layers + final Linear, one batch tile per program
# ----------------------------------------------------------------------------
def _make_gru_kernel(num_layers, seq_len, b_tile, hp):
    three_h = 3 * hp
    use_fori = seq_len > 32          # bound live ranges / code size for long T

    def kernel(*args):
        x_ref = args[0]                                    # (T, b_tile, Dp) bf16
        layer_refs = args[1:1 + 4 * num_layers]
        wfc_ref = args[1 + 4 * num_layers]                 # (Hp, Op)  f32
        bfc_ref = args[2 + 4 * num_layers]                 # (1, Op)   f32
        out_ref = args[3 + 4 * num_layers]                 # (b_tile, Op)
        gi_scr = args[4 + 4 * num_layers]                  # (T, b_tile, 3Hp) f32
        seq_scr = args[5 + 4 * num_layers] if num_layers > 1 else None

        h = jnp.zeros((b_tile, hp), jnp.float32)
        for layer in range(num_layers):
            wih_ref, whh_ref, bih_ref, bhh_ref = layer_refs[4 * layer:4 * layer + 4]

            # ---- Hoisted input projection for ALL timesteps (one MXU matmul) ----
            # inp is bf16; time-major so the (T*B, in) reshape is a free relabel.
            inp = x_ref[...] if layer == 0 else seq_scr[...]
            in_dim = inp.shape[-1]
            gi_all = (
                jnp.dot(inp.reshape(seq_len * b_tile, in_dim), wih_ref[...],
                        preferred_element_type=jnp.float32)
                + bih_ref[...]
            )
            gi_scr[...] = gi_all.reshape(seq_len, b_tile, three_h)

            # Hoist the bias broadcast out of the time loop.
            bhh = jnp.broadcast_to(bhh_ref[...], (b_tile, three_h))
            write_seq = layer < num_layers - 1

            # ---- Serial recurrence: only h @ W_hh per step ----
            def step(t, h_prev):
                gi = gi_scr[t]                                    # (B, 3Hp) contig
                gh = jnp.dot(h_prev.astype(jnp.bfloat16), whh_ref[...],
                             preferred_element_type=jnp.float32) + bhh
                r = jax.nn.sigmoid(gi[:, :hp] + gh[:, :hp])
                z = jax.nn.sigmoid(gi[:, hp:2 * hp] + gh[:, hp:2 * hp])
                n = jnp.tanh(gi[:, 2 * hp:] + r * gh[:, 2 * hp:])
                h_new = n + z * (h_prev - n)
                if write_seq:
                    # Keep the inter-layer sequence VMEM-resident, bf16.
                    seq_scr[t] = h_new.astype(jnp.bfloat16)
                return h_new

            h = jnp.zeros((b_tile, hp), jnp.float32)
            if use_fori:
                h = jax.lax.fori_loop(0, seq_len, step, h, unroll=4)
            else:
                for t in range(seq_len):
                    h = step(t, h)

        # ---- Fused final Linear on the last timestep's hidden state ----
        out_ref[...] = (
            jnp.dot(h, wfc_ref[...], preferred_element_type=jnp.float32)
            + bfc_ref[...]
        ).astype(out_ref.dtype)

    return kernel


# ----------------------------------------------------------------------------
# Wrapper
# ----------------------------------------------------------------------------
@functools.partial(jax.jit, static_argnames=("num_layers",))
def gru_model_forward(x, params, num_layers):
    """x: (B, T, input_dim) float32 (batch_first) -> (B, output_dim) float32."""
    B, T, D = x.shape
    H = params["layer0"][1].shape[0]      # w_hh_t: (H, 3H)
    O = params["fc"][0].shape[1]          # w_fc_t: (H, O)

    # Batch tile: fill MXU rows (up to 128) but keep >= 2 grid tiles for the
    # second TensorCore on v7x when the batch allows it.
    if B <= 8:
        B_TILE = 8
    else:
        B_TILE = min(128, _round_up((B + 1) // 2, 8))
    Bp = _round_up(B, B_TILE)
    Dp = _round_up(D, 128)
    Hp = _round_up(H, 128)
    Op = _round_up(O, 128)

    # Input: (B, T, D) -> time-major padded bf16 (T, Bp, Dp).
    xt = jnp.transpose(x, (1, 0, 2)).astype(jnp.bfloat16)
    xp = _pad_axis(_pad_axis(xt, 1, Bp), 2, Dp)

    weights = []
    w_specs = []
    for layer in range(num_layers):
        w_ih_t, w_hh_t, b_ih, b_hh = params[f"layer{layer}"]
        in_p = Dp if layer == 0 else Hp
        wih = _pad_axis(_pad_gates(w_ih_t, H, Hp), 0, in_p).astype(jnp.bfloat16)
        whh = _pad_axis(_pad_gates(w_hh_t, H, Hp), 0, Hp).astype(jnp.bfloat16)
        bih = _pad_gates(b_ih, H, Hp).reshape(1, 3 * Hp)    # fp32 (added post-acc)
        bhh = _pad_gates(b_hh, H, Hp).reshape(1, 3 * Hp)    # fp32
        weights += [wih, whh, bih, bhh]
        w_specs += [
            pl.BlockSpec((in_p, 3 * Hp), lambda b: (0, 0)),
            pl.BlockSpec((Hp, 3 * Hp), lambda b: (0, 0)),
            pl.BlockSpec((1, 3 * Hp), lambda b: (0, 0)),
            pl.BlockSpec((1, 3 * Hp), lambda b: (0, 0)),
        ]
    w_fc_t, b_fc = params["fc"]
    wfc = _pad_axis(_pad_axis(w_fc_t, 0, Hp), -1, Op)       # (Hp, Op) fp32
    bfc = _pad_axis(b_fc, -1, Op).reshape(1, Op)
    weights += [wfc, bfc]
    w_specs += [
        pl.BlockSpec((Hp, Op), lambda b: (0, 0)),
        pl.BlockSpec((1, Op), lambda b: (0, 0)),
    ]

    # Scratches: time-major; gi in f32 (accuracy), inter-layer seq in bf16.
    scratch_shapes = [pltpu.VMEM((T, B_TILE, 3 * Hp), jnp.float32)]
    if num_layers > 1:
        scratch_shapes.append(pltpu.VMEM((T, B_TILE, Hp), jnp.bfloat16))

    # Static VMEM footprint estimate -> explicit limit with headroom.
    vmem_bytes = 2 * T * B_TILE * Dp * 2                    # x block (bf16, dbl-buf)
    for w in weights:
        vmem_bytes += 2 * int(w.size) * w.dtype.itemsize    # weights (dbl-buf)
    vmem_bytes += 2 * B_TILE * Op * 4                       # out (dbl-buf)
    vmem_bytes += T * B_TILE * 3 * Hp * 4                   # gi scratch
    if num_layers > 1:
        vmem_bytes += T * B_TILE * Hp * 2                   # seq scratch
    vmem_limit = int(min(120 * 1024 * 1024,
                         max(32 * 1024 * 1024, int(vmem_bytes * 1.5))))

    kernel = _make_gru_kernel(num_layers, T, B_TILE, Hp)

    out_p = pl.pallas_call(
        kernel,
        out_shape=jax.ShapeDtypeStruct((Bp, Op), jnp.float32),
        grid_spec=pltpu.PrefetchScalarGridSpec(
            num_scalar_prefetch=0,
            grid=(Bp // B_TILE,),                     # independent batch tiles
            in_specs=[pl.BlockSpec((T, B_TILE, Dp), lambda b: (0, b, 0))] + w_specs,
            out_specs=pl.BlockSpec((B_TILE, Op), lambda b: (b, 0)),
            scratch_shapes=scratch_shapes,
        ),
        compiler_params=pltpu.CompilerParams(
            dimension_semantics=("parallel",),        # megacore-shardable on v7x
            vmem_limit_bytes=vmem_limit,
        ),
    )(xp, *weights)

    return out_p[:B, :O]


# ----------------------------------------------------------------------------
# Deterministic parameter init (PyTorch-style U(-1/sqrt(H), 1/sqrt(H)))
# ----------------------------------------------------------------------------
def init_params(key, input_dim, hidden_dim, num_layers, output_dim):
    params = {}
    bound = 1.0 / jnp.sqrt(hidden_dim)
    for layer in range(num_layers):
        in_dim = input_dim if layer == 0 else hidden_dim
        key, k1, k2, k3, k4 = jax.random.split(key, 5)
        # PyTorch stores (3H, in) / (3H, H); we keep them transposed for x @ W.
        w_ih_t = jax.random.uniform(k1, (in_dim, 3 * hidden_dim), jnp.float32,
                                    -bound, bound)
        w_hh_t = jax.random.uniform(k2, (hidden_dim, 3 * hidden_dim), jnp.float32,
                                    -bound, bound)
        b_ih = jax.random.uniform(k3, (3 * hidden_dim,), jnp.float32, -bound, bound)
        b_hh = jax.random.uniform(k4, (3 * hidden_dim,), jnp.float32, -bound, bound)
        params[f"layer{layer}"] = (w_ih_t, w_hh_t, b_ih, b_hh)
    key, k1, k2 = jax.random.split(key, 3)
    fc_bound = 1.0 / jnp.sqrt(hidden_dim)
    w_fc_t = jax.random.uniform(k1, (hidden_dim, output_dim), jnp.float32,
                                -fc_bound, fc_bound)
    b_fc = jax.random.uniform(k2, (output_dim,), jnp.float32, -fc_bound, fc_bound)
    params["fc"] = (w_fc_t, b_fc)
    return params


# ----------------------------------------------------------------------------
# Pure-JAX fp32 reference (same math, lax.scan) for a correctness check
# ----------------------------------------------------------------------------
def reference_forward(x, params, num_layers, hidden_dim):
    B = x.shape[0]
    h_seq = jnp.transpose(x, (1, 0, 2))  # (T, B, D)
    for layer in range(num_layers):
        w_ih_t, w_hh_t, b_ih, b_hh = params[f"layer{layer}"]

        def step(h_prev, x_t):
            gi = x_t @ w_ih_t + b_ih
            gh = h_prev @ w_hh_t + b_hh
            H = hidden_dim
            r = jax.nn.sigmoid(gi[:, :H] + gh[:, :H])
            z = jax.nn.sigmoid(gi[:, H:2 * H] + gh[:, H:2 * H])
            n = jnp.tanh(gi[:, 2 * H:] + r * gh[:, 2 * H:])
            h_new = (1.0 - z) * n + z * h_prev
            return h_new, h_new

        h0 = jnp.zeros((B, hidden_dim), jnp.float32)
        _, h_seq = jax.lax.scan(step, h0, h_seq)
    last = h_seq[-1]
    w_fc_t, b_fc = params["fc"]
    return last @ w_fc_t + b_fc


# ----------------------------------------------------------------------------
if __name__ == "__main__":
    input_dim, hidden_dim, num_layers, output_dim = 8, 32, 2, 1
    batch, seq = 2, 8

    key = jax.random.PRNGKey(0)
    key, xkey, pkey = jax.random.split(key, 3)
    x = jax.random.normal(xkey, (batch, seq, input_dim), jnp.float32)
    params = init_params(pkey, input_dim, hidden_dim, num_layers, output_dim)

    out = gru_model_forward(x, params, num_layers)
    out = jax.block_until_ready(out)
    assert out.shape == (batch, output_dim)

    # bf16 matmul operands (fp32 accumulate) -> compare against fp32 reference
    # with a correspondingly relaxed tolerance.
    ref = reference_forward(x, params, num_layers, hidden_dim)
    assert jnp.allclose(out, ref, atol=3e-2, rtol=3e-2), (out, ref)

    print("KERNEL_OK")
</pallas_src>

<mosaic_0001>
module attributes {stable_mosaic.version = 11 : i64} {
  func.func @kernel(%arg0: i32, %arg1: memref<8x8x128xbf16, #tpu.memory_space<vmem>>, %arg2: memref<128x384xbf16, #tpu.memory_space<vmem>>, %arg3: memref<128x384xbf16, #tpu.memory_space<vmem>>, %arg4: memref<1x384xf32, #tpu.memory_space<vmem>>, %arg5: memref<1x384xf32, #tpu.memory_space<vmem>>, %arg6: memref<128x384xbf16, #tpu.memory_space<vmem>>, %arg7: memref<128x384xbf16, #tpu.memory_space<vmem>>, %arg8: memref<1x384xf32, #tpu.memory_space<vmem>>, %arg9: memref<1x384xf32, #tpu.memory_space<vmem>>, %arg10: memref<128x128xf32, #tpu.memory_space<vmem>>, %arg11: memref<1x128xf32, #tpu.memory_space<vmem>>, %arg12: memref<8x128xf32, #tpu.memory_space<vmem>>, %arg13: memref<8x8x384xf32, #tpu.memory_space<vmem>>, %arg14: memref<8x8x128xbf16, #tpu.memory_space<vmem>>) attributes {dimension_semantics = [#tpu.dimension_semantics<parallel>], iteration_bounds = array<i64: 1>, scalar_prefetch = 0 : i64, scratch_operands = 2 : i64, tpu.core_type = #tpu.core_type<tc>, window_params = [{transform_indices = @transform_0, window_bounds = array<i64: 8, 8, 128>}, {pipeline_mode = #tpu.pipeline_mode<synchronous>, transform_indices = @transform_1, window_bounds = array<i64: 128, 384>}, {pipeline_mode = #tpu.pipeline_mode<synchronous>, transform_indices = @transform_2, window_bounds = array<i64: 128, 384>}, {pipeline_mode = #tpu.pipeline_mode<synchronous>, transform_indices = @transform_3, window_bounds = array<i64: 1, 384>}, {pipeline_mode = #tpu.pipeline_mode<synchronous>, transform_indices = @transform_4, window_bounds = array<i64: 1, 384>}, {pipeline_mode = #tpu.pipeline_mode<synchronous>, transform_indices = @transform_5, window_bounds = array<i64: 128, 384>}, {pipeline_mode = #tpu.pipeline_mode<synchronous>, transform_indices = @transform_6, window_bounds = array<i64: 128, 384>}, {pipeline_mode = #tpu.pipeline_mode<synchronous>, transform_indices = @transform_7, window_bounds = array<i64: 1, 384>}, {pipeline_mode = #tpu.pipeline_mode<synchronous>, transform_indices = @transform_8, window_bounds = array<i64: 1, 384>}, {pipeline_mode = #tpu.pipeline_mode<synchronous>, transform_indices = @transform_9, window_bounds = array<i64: 128, 128>}, {pipeline_mode = #tpu.pipeline_mode<synchronous>, transform_indices = @transform_10, window_bounds = array<i64: 1, 128>}, {transform_indices = @transform_11, window_bounds = array<i64: 8, 128>}]} {
    %c0 = arith.constant 0 : index
    %c0_0 = arith.constant 0 : index
    %c0_1 = arith.constant 0 : index
    %0 = vector.load %arg1[%c0, %c0_0, %c0_1] : memref<8x8x128xbf16, #tpu.memory_space<vmem>>, vector<8x8x128xbf16>
    %1 = vector.shape_cast %0 : vector<8x8x128xbf16> to vector<64x128xbf16>
    %c0_2 = arith.constant 0 : index
    %c0_3 = arith.constant 0 : index
    %2 = vector.load %arg2[%c0_2, %c0_3] : memref<128x384xbf16, #tpu.memory_space<vmem>>, vector<128x384xbf16>
    %cst = arith.constant dense<0.000000e+00> : vector<64x384xf32>
    %3 = tpu.matmul %1, %2, %cst {dimension_numbers = #tpu.dot_dimension_numbers<[1], [0], [0], [1], [0, 0, 1, 1], [], []>} : vector<64x128xbf16>, vector<128x384xbf16>, vector<64x384xf32> -> vector<64x384xf32>
    %c0_4 = arith.constant 0 : index
    %c0_5 = arith.constant 0 : index
    %4 = vector.load %arg4[%c0_4, %c0_5] : memref<1x384xf32, #tpu.memory_space<vmem>>, vector<1x384xf32>
    %5 = vector.broadcast %4 : vector<1x384xf32> to vector<64x384xf32>
    %6 = arith.addf %3, %5 : vector<64x384xf32>
    %7 = vector.shape_cast %6 : vector<64x384xf32> to vector<8x8x384xf32>
    %c0_6 = arith.constant 0 : index
    %c0_7 = arith.constant 0 : index
    %c0_8 = arith.constant 0 : index
    %8 = vector.load %arg13[%c0_6, %c0_7, %c0_8] : memref<8x8x384xf32, #tpu.memory_space<vmem>>, vector<8x8x384xf32>
    tpu.vector_store %arg13[%c0_6, %c0_7, %c0_8], %7 {strides = array<i32>} : memref<8x8x384xf32, #tpu.memory_space<vmem>>, vector<8x8x384xf32>,
    %c0_9 = arith.constant 0 : index
    %c0_10 = arith.constant 0 : index
    %9 = vector.load %arg5[%c0_9, %c0_10] : memref<1x384xf32, #tpu.memory_space<vmem>>, vector<1x384xf32>
    %10 = vector.shape_cast %9 : vector<1x384xf32> to vector<1x384xf32>
    %11 = vector.broadcast %10 : vector<1x384xf32> to vector<8x384xf32>
    %cst_11 = arith.constant 0.000000e+00 : f32
    %12 = vector.broadcast %cst_11 : f32 to vector<8x128xf32>
    %c0_12 = arith.constant 0 : index
    %c0_13 = arith.constant 0 : index
    %c0_14 = arith.constant 0 : index
    %13 = vector.load %arg13[%c0_12, %c0_13, %c0_14] : memref<8x8x384xf32, #tpu.memory_space<vmem>>, vector<1x8x384xf32>
    %14 = vector.shape_cast %13 : vector<1x8x384xf32> to vector<8x384xf32>
    %15 = arith.truncf %12 : vector<8x128xf32> to vector<8x128xbf16>
    %c0_15 = arith.constant 0 : index
    %c0_16 = arith.constant 0 : index
    %16 = vector.load %arg3[%c0_15, %c0_16] : memref<128x384xbf16, #tpu.memory_space<vmem>>, vector<128x384xbf16>
    %cst_17 = arith.constant dense<0.000000e+00> : vector<8x384xf32>
    %17 = tpu.matmul %15, %16, %cst_17 {dimension_numbers = #tpu.dot_dimension_numbers<[1], [0], [0], [1], [0, 0, 1, 1], [], []>} : vector<8x128xbf16>, vector<128x384xbf16>, vector<8x384xf32> -> vector<8x384xf32>
    %18 = arith.addf %17, %11 : vector<8x384xf32>
    %19 = vector.extract_strided_slice %14 {offsets = [0, 0], sizes = [8, 128], strides = [1, 1]} : vector<8x384xf32> to vector<8x128xf32>
    %20 = vector.extract_strided_slice %18 {offsets = [0, 0], sizes = [8, 128], strides = [1, 1]} : vector<8x384xf32> to vector<8x128xf32>
    %21 = arith.addf %19, %20 : vector<8x128xf32>
    %22 = arith.negf %21 : vector<8x128xf32>
    %23 = math.exp %22 : vector<8x128xf32>
    %cst_18 = arith.constant 1.000000e+00 : f32
    %24 = vector.broadcast %cst_18 : f32 to vector<8x128xf32>
    %25 = arith.addf %24, %23 : vector<8x128xf32>
    %26 = arith.divf %24, %25 : vector<8x128xf32>
    %27 = vector.extract_strided_slice %14 {offsets = [0, 128], sizes = [8, 128], strides = [1, 1]} : vector<8x384xf32> to vector<8x128xf32>
    %28 = vector.extract_strided_slice %18 {offsets = [0, 128], sizes = [8, 128], strides = [1, 1]} : vector<8x384xf32> to vector<8x128xf32>
    %29 = arith.addf %27, %28 : vector<8x128xf32>
    %30 = arith.negf %29 : vector<8x128xf32>
    %31 = math.exp %30 : vector<8x128xf32>
    %cst_19 = arith.constant 1.000000e+00 : f32
    %32 = vector.broadcast %cst_19 : f32 to vector<8x128xf32>
    %33 = arith.addf %32, %31 : vector<8x128xf32>
    %34 = arith.divf %32, %33 : vector<8x128xf32>
    %35 = vector.extract_strided_slice %14 {offsets = [0, 256], sizes = [8, 128], strides = [1, 1]} : vector<8x384xf32> to vector<8x128xf32>
    %36 = vector.extract_strided_slice %18 {offsets = [0, 256], sizes = [8, 128], strides = [1, 1]} : vector<8x384xf32> to vector<8x128xf32>
    %37 = arith.mulf %26, %36 : vector<8x128xf32>
    %38 = arith.addf %35, %37 : vector<8x128xf32>
    %39 = math.tanh %38 : vector<8x128xf32>
    %40 = arith.subf %12, %39 : vector<8x128xf32>
    %41 = arith.mulf %34, %40 : vector<8x128xf32>
    %42 = arith.addf %39, %41 : vector<8x128xf32>
    %43 = arith.truncf %42 : vector<8x128xf32> to vector<8x128xbf16>
    %c0_20 = arith.constant 0 : index
    %c0_21 = arith.constant 0 : index
    %c0_22 = arith.constant 0 : index
    %44 = vector.load %arg14[%c0_20, %c0_21, %c0_22] : memref<8x8x128xbf16, #tpu.memory_space<vmem>>, vector<1x8x128xbf16>
    %45 = vector.shape_cast %44 : vector<1x8x128xbf16> to vector<8x128xbf16>
    %46 = vector.shape_cast %43 : vector<8x128xbf16> to vector<1x8x128xbf16>
    tpu.vector_store %arg14[%c0_20, %c0_21, %c0_22], %46 {strides = array<i32>} : memref<8x8x128xbf16, #tpu.memory_space<vmem>>, vector<1x8x128xbf16>,
    %c1 = arith.constant 1 : index
    %c0_23 = arith.constant 0 : index
    %c0_24 = arith.constant 0 : index
    %47 = vector.load %arg13[%c1, %c0_23, %c0_24] : memref<8x8x384xf32, #tpu.memory_space<vmem>>, vector<1x8x384xf32>
    %48 = vector.shape_cast %47 : vector<1x8x384xf32> to vector<8x384xf32>
    %49 = arith.truncf %42 : vector<8x128xf32> to vector<8x128xbf16>
    %c0_25 = arith.constant 0 : index
    %c0_26 = arith.constant 0 : index
    %50 = vector.load %arg3[%c0_25, %c0_26] : memref<128x384xbf16, #tpu.memory_space<vmem>>, vector<128x384xbf16>
    %cst_27 = arith.constant dense<0.000000e+00> : vector<8x384xf32>
    %51 = tpu.matmul %49, %50, %cst_27 {dimension_numbers = #tpu.dot_dimension_numbers<[1], [0], [0], [1], [0, 0, 1, 1], [], []>} : vector<8x128xbf16>, vector<128x384xbf16>, vector<8x384xf32> -> vector<8x384xf32>
    %52 = arith.addf %51, %11 : vector<8x384xf32>
    %53 = vector.extract_strided_slice %48 {offsets = [0, 0], sizes = [8, 128], strides = [1, 1]} : vector<8x384xf32> to vector<8x128xf32>
    %54 = vector.extract_strided_slice %52 {offsets = [0, 0], sizes = [8, 128], strides = [1, 1]} : vector<8x384xf32> to vector<8x128xf32>
    %55 = arith.addf %53, %54 : vector<8x128xf32>
    %56 = arith.negf %55 : vector<8x128xf32>
    %57 = math.exp %56 : vector<8x128xf32>
    %cst_28 = arith.constant 1.000000e+00 : f32
    %58 = vector.broadcast %cst_28 : f32 to vector<8x128xf32>
    %59 = arith.addf %58, %57 : vector<8x128xf32>
    %60 = arith.divf %58, %59 : vector<8x128xf32>
    %61 = vector.extract_strided_slice %48 {offsets = [0, 128], sizes = [8, 128], strides = [1, 1]} : vector<8x384xf32> to vector<8x128xf32>
    %62 = vector.extract_strided_slice %52 {offsets = [0, 128], sizes = [8, 128], strides = [1, 1]} : vector<8x384xf32> to vector<8x128xf32>
    %63 = arith.addf %61, %62 : vector<8x128xf32>
    %64 = arith.negf %63 : vector<8x128xf32>
    %65 = math.exp %64 : vector<8x128xf32>
    %cst_29 = arith.constant 1.000000e+00 : f32
    %66 = vector.broadcast %cst_29 : f32 to vector<8x128xf32>
    %67 = arith.addf %66, %65 : vector<8x128xf32>
    %68 = arith.divf %66, %67 : vector<8x128xf32>
    %69 = vector.extract_strided_slice %48 {offsets = [0, 256], sizes = [8, 128], strides = [1, 1]} : vector<8x384xf32> to vector<8x128xf32>
    %70 = vector.extract_strided_slice %52 {offsets = [0, 256], sizes = [8, 128], strides = [1, 1]} : vector<8x384xf32> to vector<8x128xf32>
    %71 = arith.mulf %60, %70 : vector<8x128xf32>
    %72 = arith.addf %69, %71 : vector<8x128xf32>
    %73 = math.tanh %72 : vector<8x128xf32>
    %74 = arith.subf %42, %73 : vector<8x128xf32>
    %75 = arith.mulf %68, %74 : vector<8x128xf32>
    %76 = arith.addf %73, %75 : vector<8x128xf32>
    %77 = arith.truncf %76 : vector<8x128xf32> to vector<8x128xbf16>
    %c1_30 = arith.constant 1 : index
    %c0_31 = arith.constant 0 : index
    %c0_32 = arith.constant 0 : index
    %78 = vector.load %arg14[%c1_30, %c0_31, %c0_32] : memref<8x8x128xbf16, #tpu.memory_space<vmem>>, vector<1x8x128xbf16>
    %79 = vector.shape_cast %78 : vector<1x8x128xbf16> to vector<8x128xbf16>
    %80 = vector.shape_cast %77 : vector<8x128xbf16> to vector<1x8x128xbf16>
    tpu.vector_store %arg14[%c1_30, %c0_31, %c0_32], %80 {strides = array<i32>} : memref<8x8x128xbf16, #tpu.memory_space<vmem>>, vector<1x8x128xbf16>,
    %c2 = arith.constant 2 : index
    %c0_33 = arith.constant 0 : index
    %c0_34 = arith.constant 0 : index
    %81 = vector.load %arg13[%c2, %c0_33, %c0_34] : memref<8x8x384xf32, #tpu.memory_space<vmem>>, vector<1x8x384xf32>
    %82 = vector.shape_cast %81 : vector<1x8x384xf32> to vector<8x384xf32>
    %83 = arith.truncf %76 : vector<8x128xf32> to vector<8x128xbf16>
    %c0_35 = arith.constant 0 : index
    %c0_36 = arith.constant 0 : index
    %84 = vector.load %arg3[%c0_35, %c0_36] : memref<128x384xbf16, #tpu.memory_space<vmem>>, vector<128x384xbf16>
    %cst_37 = arith.constant dense<0.000000e+00> : vector<8x384xf32>
    %85 = tpu.matmul %83, %84, %cst_37 {dimension_numbers = #tpu.dot_dimension_numbers<[1], [0], [0], [1], [0, 0, 1, 1], [], []>} : vector<8x128xbf16>, vector<128x384xbf16>, vector<8x384xf32> -> vector<8x384xf32>
    %86 = arith.addf %85, %11 : vector<8x384xf32>
    %87 = vector.extract_strided_slice %82 {offsets = [0, 0], sizes = [8, 128], strides = [1, 1]} : vector<8x384xf32> to vector<8x128xf32>
    %88 = vector.extract_strided_slice %86 {offsets = [0, 0], sizes = [8, 128], strides = [1, 1]} : vector<8x384xf32> to vector<8x128xf32>
    %89 = arith.addf %87, %88 : vector<8x128xf32>
    %90 = arith.negf %89 : vector<8x128xf32>
    %91 = math.exp %90 : vector<8x128xf32>
    %cst_38 = arith.constant 1.000000e+00 : f32
    %92 = vector.broadcast %cst_38 : f32 to vector<8x128xf32>
    %93 = arith.addf %92, %91 : vector<8x128xf32>
    %94 = arith.divf %92, %93 : vector<8x128xf32>
    %95 = vector.extract_strided_slice %82 {offsets = [0, 128], sizes = [8, 128], strides = [1, 1]} : vector<8x384xf32> to vector<8x128xf32>
    %96 = vector.extract_strided_slice %86 {offsets = [0, 128], sizes = [8, 128], strides = [1, 1]} : vector<8x384xf32> to vector<8x128xf32>
    %97 = arith.addf %95, %96 : vector<8x128xf32>
    %98 = arith.negf %97 : vector<8x128xf32>
    %99 = math.exp %98 : vector<8x128xf32>
    %cst_39 = arith.constant 1.000000e+00 : f32
    %100 = vector.broadcast %cst_39 : f32 to vector<8x128xf32>
    %101 = arith.addf %100, %99 : vector<8x128xf32>
    %102 = arith.divf %100, %101 : vector<8x128xf32>
    %103 = vector.extract_strided_slice %82 {offsets = [0, 256], sizes = [8, 128], strides = [1, 1]} : vector<8x384xf32> to vector<8x128xf32>
    %104 = vector.extract_strided_slice %86 {offsets = [0, 256], sizes = [8, 128], strides = [1, 1]} : vector<8x384xf32> to vector<8x128xf32>
    %105 = arith.mulf %94, %104 : vector<8x128xf32>
    %106 = arith.addf %103, %105 : vector<8x128xf32>
    %107 = math.tanh %106 : vector<8x128xf32>
    %108 = arith.subf %76, %107 : vector<8x128xf32>
    %109 = arith.mulf %102, %108 : vector<8x128xf32>
    %110 = arith.addf %107, %109 : vector<8x128xf32>
    %111 = arith.truncf %110 : vector<8x128xf32> to vector<8x128xbf16>
    %c2_40 = arith.constant 2 : index
    %c0_41 = arith.constant 0 : index
    %c0_42 = arith.constant 0 : index
    %112 = vector.load %arg14[%c2_40, %c0_41, %c0_42] : memref<8x8x128xbf16, #tpu.memory_space<vmem>>, vector<1x8x128xbf16>
    %113 = vector.shape_cast %112 : vector<1x8x128xbf16> to vector<8x128xbf16>
    %114 = vector.shape_cast %111 : vector<8x128xbf16> to vector<1x8x128xbf16>
    tpu.vector_store %arg14[%c2_40, %c0_41, %c0_42], %114 {strides = array<i32>} : memref<8x8x128xbf16, #tpu.memory_space<vmem>>, vector<1x8x128xbf16>,
    %c3 = arith.constant 3 : index
    %c0_43 = arith.constant 0 : index
    %c0_44 = arith.constant 0 : index
    %115 = vector.load %arg13[%c3, %c0_43, %c0_44] : memref<8x8x384xf32, #tpu.memory_space<vmem>>, vector<1x8x384xf32>
    %116 = vector.shape_cast %115 : vector<1x8x384xf32> to vector<8x384xf32>
    %117 = arith.truncf %110 : vector<8x128xf32> to vector<8x128xbf16>
    %c0_45 = arith.constant 0 : index
    %c0_46 = arith.constant 0 : index
    %118 = vector.load %arg3[%c0_45, %c0_46] : memref<128x384xbf16, #tpu.memory_space<vmem>>, vector<128x384xbf16>
    %cst_47 = arith.constant dense<0.000000e+00> : vector<8x384xf32>
    %119 = tpu.matmul %117, %118, %cst_47 {dimension_numbers = #tpu.dot_dimension_numbers<[1], [0], [0], [1], [0, 0, 1, 1], [], []>} : vector<8x128xbf16>, vector<128x384xbf16>, vector<8x384xf32> -> vector<8x384xf32>
    %120 = arith.addf %119, %11 : vector<8x384xf32>
    %121 = vector.extract_strided_slice %116 {offsets = [0, 0], sizes = [8, 128], strides = [1, 1]} : vector<8x384xf32> to vector<8x128xf32>
    %122 = vector.extract_strided_slice %120 {offsets = [0, 0], sizes = [8, 128], strides = [1, 1]} : vector<8x384xf32> to vector<8x128xf32>
    %123 = arith.addf %121, %122 : vector<8x128xf32>
    %124 = arith.negf %123 : vector<8x128xf32>
    %125 = math.exp %124 : vector<8x128xf32>
    %cst_48 = arith.constant 1.000000e+00 : f32
    %126 = vector.broadcast %cst_48 : f32 to vector<8x128xf32>
    %127 = arith.addf %126, %125 : vector<8x128xf32>
    %128 = arith.divf %126, %127 : vector<8x128xf32>
    %129 = vector.extract_strided_slice %116 {offsets = [0, 128], sizes = [8, 128], strides = [1, 1]} : vector<8x384xf32> to vector<8x128xf32>
    %130 = vector.extract_strided_slice %120 {offsets = [0, 128], sizes = [8, 128], strides = [1, 1]} : vector<8x384xf32> to vector<8x128xf32>
    %131 = arith.addf %129, %130 : vector<8x128xf32>
    %132 = arith.negf %131 : vector<8x128xf32>
    %133 = math.exp %132 : vector<8x128xf32>
    %cst_49 = arith.constant 1.000000e+00 : f32
    %134 = vector.broadcast %cst_49 : f32 to vector<8x128xf32>
    %135 = arith.addf %134, %133 : vector<8x128xf32>
    %136 = arith.divf %134, %135 : vector<8x128xf32>
    %137 = vector.extract_strided_slice %116 {offsets = [0, 256], sizes = [8, 128], strides = [1, 1]} : vector<8x384xf32> to vector<8x128xf32>
    %138 = vector.extract_strided_slice %120 {offsets = [0, 256], sizes = [8, 128], strides = [1, 1]} : vector<8x384xf32> to vector<8x128xf32>
    %139 = arith.mulf %128, %138 : vector<8x128xf32>
    %140 = arith.addf %137, %139 : vector<8x128xf32>
    %141 = math.tanh %140 : vector<8x128xf32>
    %142 = arith.subf %110, %141 : vector<8x128xf32>
    %143 = arith.mulf %136, %142 : vector<8x128xf32>
    %144 = arith.addf %141, %143 : vector<8x128xf32>
    %145 = arith.truncf %144 : vector<8x128xf32> to vector<8x128xbf16>
    %c3_50 = arith.constant 3 : index
    %c0_51 = arith.constant 0 : index
    %c0_52 = arith.constant 0 : index
    %146 = vector.load %arg14[%c3_50, %c0_51, %c0_52] : memref<8x8x128xbf16, #tpu.memory_space<vmem>>, vector<1x8x128xbf16>
    %147 = vector.shape_cast %146 : vector<1x8x128xbf16> to vector<8x128xbf16>
    %148 = vector.shape_cast %145 : vector<8x128xbf16> to vector<1x8x128xbf16>
    tpu.vector_store %arg14[%c3_50, %c0_51, %c0_52], %148 {strides = array<i32>} : memref<8x8x128xbf16, #tpu.memory_space<vmem>>, vector<1x8x128xbf16>,
    %c4 = arith.constant 4 : index
    %c0_53 = arith.constant 0 : index
    %c0_54 = arith.constant 0 : index
    %149 = vector.load %arg13[%c4, %c0_53, %c0_54] : memref<8x8x384xf32, #tpu.memory_space<vmem>>, vector<1x8x384xf32>
    %150 = vector.shape_cast %149 : vector<1x8x384xf32> to vector<8x384xf32>
    %151 = arith.truncf %144 : vector<8x128xf32> to vector<8x128xbf16>
    %c0_55 = arith.constant 0 : index
    %c0_56 = arith.constant 0 : index
    %152 = vector.load %arg3[%c0_55, %c0_56] : memref<128x384xbf16, #tpu.memory_space<vmem>>, vector<128x384xbf16>
    %cst_57 = arith.constant dense<0.000000e+00> : vector<8x384xf32>
    %153 = tpu.matmul %151, %152, %cst_57 {dimension_numbers = #tpu.dot_dimension_numbers<[1], [0], [0], [1], [0, 0, 1, 1], [], []>} : vector<8x128xbf16>, vector<128x384xbf16>, vector<8x384xf32> -> vector<8x384xf32>
    %154 = arith.addf %153, %11 : vector<8x384xf32>
    %155 = vector.extract_strided_slice %150 {offsets = [0, 0], sizes = [8, 128], strides = [1, 1]} : vector<8x384xf32> to vector<8x128xf32>
    %156 = vector.extract_strided_slice %154 {offsets = [0, 0], sizes = [8, 128], strides = [1, 1]} : vector<8x384xf32> to vector<8x128xf32>
    %157 = arith.addf %155, %156 : vector<8x128xf32>
    %158 = arith.negf %157 : vector<8x128xf32>
    %159 = math.exp %158 : vector<8x128xf32>
    %cst_58 = arith.constant 1.000000e+00 : f32
    %160 = vector.broadcast %cst_58 : f32 to vector<8x128xf32>
    %161 = arith.addf %160, %159 : vector<8x128xf32>
    %162 = arith.divf %160, %161 : vector<8x128xf32>
    %163 = vector.extract_strided_slice %150 {offsets = [0, 128], sizes = [8, 128], strides = [1, 1]} : vector<8x384xf32> to vector<8x128xf32>
    %164 = vector.extract_strided_slice %154 {offsets = [0, 128], sizes = [8, 128], strides = [1, 1]} : vector<8x384xf32> to vector<8x128xf32>
    %165 = arith.addf %163, %164 : vector<8x128xf32>
    %166 = arith.negf %165 : vector<8x128xf32>
    %167 = math.exp %166 : vector<8x128xf32>
    %cst_59 = arith.constant 1.000000e+00 : f32
    %168 = vector.broadcast %cst_59 : f32 to vector<8x128xf32>
    %169 = arith.addf %168, %167 : vector<8x128xf32>
    %170 = arith.divf %168, %169 : vector<8x128xf32>
    %171 = vector.extract_strided_slice %150 {offsets = [0, 256], sizes = [8, 128], strides = [1, 1]} : vector<8x384xf32> to vector<8x128xf32>
    %172 = vector.extract_strided_slice %154 {offsets = [0, 256], sizes = [8, 128], strides = [1, 1]} : vector<8x384xf32> to vector<8x128xf32>
    %173 = arith.mulf %162, %172 : vector<8x128xf32>
    %174 = arith.addf %171, %173 : vector<8x128xf32>
    %175 = math.tanh %174 : vector<8x128xf32>
    %176 = arith.subf %144, %175 : vector<8x128xf32>
    %177 = arith.mulf %170, %176 : vector<8x128xf32>
    %178 = arith.addf %175, %177 : vector<8x128xf32>
    %179 = arith.truncf %178 : vector<8x128xf32> to vector<8x128xbf16>
    %c4_60 = arith.constant 4 : index
    %c0_61 = arith.constant 0 : index
    %c0_62 = arith.constant 0 : index
    %180 = vector.load %arg14[%c4_60, %c0_61, %c0_62] : memref<8x8x128xbf16, #tpu.memory_space<vmem>>, vector<1x8x128xbf16>
    %181 = vector.shape_cast %180 : vector<1x8x128xbf16> to vector<8x128xbf16>
    %182 = vector.shape_cast %179 : vector<8x128xbf16> to vector<1x8x128xbf16>
    tpu.vector_store %arg14[%c4_60, %c0_61, %c0_62], %182 {strides = array<i32>} : memref<8x8x128xbf16, #tpu.memory_space<vmem>>, vector<1x8x128xbf16>,
    %c5 = arith.constant 5 : index
    %c0_63 = arith.constant 0 : index
    %c0_64 = arith.constant 0 : index
    %183 = vector.load %arg13[%c5, %c0_63, %c0_64] : memref<8x8x384xf32, #tpu.memory_space<vmem>>, vector<1x8x384xf32>
    %184 = vector.shape_cast %183 : vector<1x8x384xf32> to vector<8x384xf32>
    %185 = arith.truncf %178 : vector<8x128xf32> to vector<8x128xbf16>
    %c0_65 = arith.constant 0 : index
    %c0_66 = arith.constant 0 : index
    %186 = vector.load %arg3[%c0_65, %c0_66] : memref<128x384xbf16, #tpu.memory_space<vmem>>, vector<128x384xbf16>
    %cst_67 = arith.constant dense<0.000000e+00> : vector<8x384xf32>
    %187 = tpu.matmul %185, %186, %cst_67 {dimension_numbers = #tpu.dot_dimension_numbers<[1], [0], [0], [1], [0, 0, 1, 1], [], []>} : vector<8x128xbf16>, vector<128x384xbf16>, vector<8x384xf32> -> vector<8x384xf32>
    %188 = arith.addf %187, %11 : vector<8x384xf32>
    %189 = vector.extract_strided_slice %184 {offsets = [0, 0], sizes = [8, 128], strides = [1, 1]} : vector<8x384xf32> to vector<8x128xf32>
    %190 = vector.extract_strided_slice %188 {offsets = [0, 0], sizes = [8, 128], strides = [1, 1]} : vector<8x384xf32> to vector<8x128xf32>
    %191 = arith.addf %189, %190 : vector<8x128xf32>
    %192 = arith.negf %191 : vector<8x128xf32>
    %193 = math.exp %192 : vector<8x128xf32>
    %cst_68 = arith.constant 1.000000e+00 : f32
    %194 = vector.broadcast %cst_68 : f32 to vector<8x128xf32>
    %195 = arith.addf %194, %193 : vector<8x128xf32>
    %196 = arith.divf %194, %195 : vector<8x128xf32>
    %197 = vector.extract_strided_slice %184 {offsets = [0, 128], sizes = [8, 128], strides = [1, 1]} : vector<8x384xf32> to vector<8x128xf32>
    %198 = vector.extract_strided_slice %188 {offsets = [0, 128], sizes = [8, 128], strides = [1, 1]} : vector<8x384xf32> to vector<8x128xf32>
    %199 = arith.addf %197, %198 : vector<8x128xf32>
    %200 = arith.negf %199 : vector<8x128xf32>
    %201 = math.exp %200 : vector<8x128xf32>
    %cst_69 = arith.constant 1.000000e+00 : f32
    %202 = vector.broadcast %cst_69 : f32 to vector<8x128xf32>
    %203 = arith.addf %202, %201 : vector<8x128xf32>
    %204 = arith.divf %202, %203 : vector<8x128xf32>
    %205 = vector.extract_strided_slice %184 {offsets = [0, 256], sizes = [8, 128], strides = [1, 1]} : vector<8x384xf32> to vector<8x128xf32>
    %206 = vector.extract_strided_slice %188 {offsets = [0, 256], sizes = [8, 128], strides = [1, 1]} : vector<8x384xf32> to vector<8x128xf32>
    %207 = arith.mulf %196, %206 : vector<8x128xf32>
    %208 = arith.addf %205, %207 : vector<8x128xf32>
    %209 = math.tanh %208 : vector<8x128xf32>
    %210 = arith.subf %178, %209 : vector<8x128xf32>
    %211 = arith.mulf %204, %210 : vector<8x128xf32>
    %212 = arith.addf %209, %211 : vector<8x128xf32>
    %213 = arith.truncf %212 : vector<8x128xf32> to vector<8x128xbf16>
    %c5_70 = arith.constant 5 : index
    %c0_71 = arith.constant 0 : index
    %c0_72 = arith.constant 0 : index
    %214 = vector.load %arg14[%c5_70, %c0_71, %c0_72] : memref<8x8x128xbf16, #tpu.memory_space<vmem>>, vector<1x8x128xbf16>
    %215 = vector.shape_cast %214 : vector<1x8x128xbf16> to vector<8x128xbf16>
    %216 = vector.shape_cast %213 : vector<8x128xbf16> to vector<1x8x128xbf16>
    tpu.vector_store %arg14[%c5_70, %c0_71, %c0_72], %216 {strides = array<i32>} : memref<8x8x128xbf16, #tpu.memory_space<vmem>>, vector<1x8x128xbf16>,
    %c6 = arith.constant 6 : index
    %c0_73 = arith.constant 0 : index
    %c0_74 = arith.constant 0 : index
    %217 = vector.load %arg13[%c6, %c0_73, %c0_74] : memref<8x8x384xf32, #tpu.memory_space<vmem>>, vector<1x8x384xf32>
    %218 = vector.shape_cast %217 : vector<1x8x384xf32> to vector<8x384xf32>
    %219 = arith.truncf %212 : vector<8x128xf32> to vector<8x128xbf16>
    %c0_75 = arith.constant 0 : index
    %c0_76 = arith.constant 0 : index
    %220 = vector.load %arg3[%c0_75, %c0_76] : memref<128x384xbf16, #tpu.memory_space<vmem>>, vector<128x384xbf16>
    %cst_77 = arith.constant dense<0.000000e+00> : vector<8x384xf32>
    %221 = tpu.matmul %219, %220, %cst_77 {dimension_numbers = #tpu.dot_dimension_numbers<[1], [0], [0], [1], [0, 0, 1, 1], [], []>} : vector<8x128xbf16>, vector<128x384xbf16>, vector<8x384xf32> -> vector<8x384xf32>
    %222 = arith.addf %221, %11 : vector<8x384xf32>
    %223 = vector.extract_strided_slice %218 {offsets = [0, 0], sizes = [8, 128], strides = [1, 1]} : vector<8x384xf32> to vector<8x128xf32>
    %224 = vector.extract_strided_slice %222 {offsets = [0, 0], sizes = [8, 128], strides = [1, 1]} : vector<8x384xf32> to vector<8x128xf32>
    %225 = arith.addf %223, %224 : vector<8x128xf32>
    %226 = arith.negf %225 : vector<8x128xf32>
    %227 = math.exp %226 : vector<8x128xf32>
    %cst_78 = arith.constant 1.000000e+00 : f32
    %228 = vector.broadcast %cst_78 : f32 to vector<8x128xf32>
    %229 = arith.addf %228, %227 : vector<8x128xf32>
    %230 = arith.divf %228, %229 : vector<8x128xf32>
    %231 = vector.extract_strided_slice %218 {offsets = [0, 128], sizes = [8, 128], strides = [1, 1]} : vector<8x384xf32> to vector<8x128xf32>
    %232 = vector.extract_strided_slice %222 {offsets = [0, 128], sizes = [8, 128], strides = [1, 1]} : vector<8x384xf32> to vector<8x128xf32>
    %233 = arith.addf %231, %232 : vector<8x128xf32>
    %234 = arith.negf %233 : vector<8x128xf32>
    %235 = math.exp %234 : vector<8x128xf32>
    %cst_79 = arith.constant 1.000000e+00 : f32
    %236 = vector.broadcast %cst_79 : f32 to vector<8x128xf32>
    %237 = arith.addf %236, %235 : vector<8x128xf32>
    %238 = arith.divf %236, %237 : vector<8x128xf32>
    %239 = vector.extract_strided_slice %218 {offsets = [0, 256], sizes = [8, 128], strides = [1, 1]} : vector<8x384xf32> to vector<8x128xf32>
    %240 = vector.extract_strided_slice %222 {offsets = [0, 256], sizes = [8, 128], strides = [1, 1]} : vector<8x384xf32> to vector<8x128xf32>
    %241 = arith.mulf %230, %240 : vector<8x128xf32>
    %242 = arith.addf %239, %241 : vector<8x128xf32>
    %243 = math.tanh %242 : vector<8x128xf32>
    %244 = arith.subf %212, %243 : vector<8x128xf32>
    %245 = arith.mulf %238, %244 : vector<8x128xf32>
    %246 = arith.addf %243, %245 : vector<8x128xf32>
    %247 = arith.truncf %246 : vector<8x128xf32> to vector<8x128xbf16>
    %c6_80 = arith.constant 6 : index
    %c0_81 = arith.constant 0 : index
    %c0_82 = arith.constant 0 : index
    %248 = vector.load %arg14[%c6_80, %c0_81, %c0_82] : memref<8x8x128xbf16, #tpu.memory_space<vmem>>, vector<1x8x128xbf16>
    %249 = vector.shape_cast %248 : vector<1x8x128xbf16> to vector<8x128xbf16>
    %250 = vector.shape_cast %247 : vector<8x128xbf16> to vector<1x8x128xbf16>
    tpu.vector_store %arg14[%c6_80, %c0_81, %c0_82], %250 {strides = array<i32>} : memref<8x8x128xbf16, #tpu.memory_space<vmem>>, vector<1x8x128xbf16>,
    %c7 = arith.constant 7 : index
    %c0_83 = arith.constant 0 : index
    %c0_84 = arith.constant 0 : index
    %251 = vector.load %arg13[%c7, %c0_83, %c0_84] : memref<8x8x384xf32, #tpu.memory_space<vmem>>, vector<1x8x384xf32>
    %252 = vector.shape_cast %251 : vector<1x8x384xf32> to vector<8x384xf32>
    %253 = arith.truncf %246 : vector<8x128xf32> to vector<8x128xbf16>
    %c0_85 = arith.constant 0 : index
    %c0_86 = arith.constant 0 : index
    %254 = vector.load %arg3[%c0_85, %c0_86] : memref<128x384xbf16, #tpu.memory_space<vmem>>, vector<128x384xbf16>
    %cst_87 = arith.constant dense<0.000000e+00> : vector<8x384xf32>
    %255 = tpu.matmul %253, %254, %cst_87 {dimension_numbers = #tpu.dot_dimension_numbers<[1], [0], [0], [1], [0, 0, 1, 1], [], []>} : vector<8x128xbf16>, vector<128x384xbf16>, vector<8x384xf32> -> vector<8x384xf32>
    %256 = arith.addf %255, %11 : vector<8x384xf32>
    %257 = vector.extract_strided_slice %252 {offsets = [0, 0], sizes = [8, 128], strides = [1, 1]} : vector<8x384xf32> to vector<8x128xf32>
    %258 = vector.extract_strided_slice %256 {offsets = [0, 0], sizes = [8, 128], strides = [1, 1]} : vector<8x384xf32> to vector<8x128xf32>
    %259 = arith.addf %257, %258 : vector<8x128xf32>
    %260 = arith.negf %259 : vector<8x128xf32>
    %261 = math.exp %260 : vector<8x128xf32>
    %cst_88 = arith.constant 1.000000e+00 : f32
    %262 = vector.broadcast %cst_88 : f32 to vector<8x128xf32>
    %263 = arith.addf %262, %261 : vector<8x128xf32>
    %264 = arith.divf %262, %263 : vector<8x128xf32>
    %265 = vector.extract_strided_slice %252 {offsets = [0, 128], sizes = [8, 128], strides = [1, 1]} : vector<8x384xf32> to vector<8x128xf32>
    %266 = vector.extract_strided_slice %256 {offsets = [0, 128], sizes = [8, 128], strides = [1, 1]} : vector<8x384xf32> to vector<8x128xf32>
    %267 = arith.addf %265, %266 : vector<8x128xf32>
    %268 = arith.negf %267 : vector<8x128xf32>
    %269 = math.exp %268 : vector<8x128xf32>
    %cst_89 = arith.constant 1.000000e+00 : f32
    %270 = vector.broadcast %cst_89 : f32 to vector<8x128xf32>
    %271 = arith.addf %270, %269 : vector<8x128xf32>
    %272 = arith.divf %270, %271 : vector<8x128xf32>
    %273 = vector.extract_strided_slice %252 {offsets = [0, 256], sizes = [8, 128], strides = [1, 1]} : vector<8x384xf32> to vector<8x128xf32>
    %274 = vector.extract_strided_slice %256 {offsets = [0, 256], sizes = [8, 128], strides = [1, 1]} : vector<8x384xf32> to vector<8x128xf32>
    %275 = arith.mulf %264, %274 : vector<8x128xf32>
    %276 = arith.addf %273, %275 : vector<8x128xf32>
    %277 = math.tanh %276 : vector<8x128xf32>
    %278 = arith.subf %246, %277 : vector<8x128xf32>
    %279 = arith.mulf %272, %278 : vector<8x128xf32>
    %280 = arith.addf %277, %279 : vector<8x128xf32>
    %281 = arith.truncf %280 : vector<8x128xf32> to vector<8x128xbf16>
    %c7_90 = arith.constant 7 : index
    %c0_91 = arith.constant 0 : index
    %c0_92 = arith.constant 0 : index
    %282 = vector.load %arg14[%c7_90, %c0_91, %c0_92] : memref<8x8x128xbf16, #tpu.memory_space<vmem>>, vector<1x8x128xbf16>
    %283 = vector.shape_cast %282 : vector<1x8x128xbf16> to vector<8x128xbf16>
    %284 = vector.shape_cast %281 : vector<8x128xbf16> to vector<1x8x128xbf16>
    tpu.vector_store %arg14[%c7_90, %c0_91, %c0_92], %284 {strides = array<i32>} : memref<8x8x128xbf16, #tpu.memory_space<vmem>>, vector<1x8x128xbf16>,
    %c0_93 = arith.constant 0 : index
    %c0_94 = arith.constant 0 : index
    %c0_95 = arith.constant 0 : index
    %285 = vector.load %arg14[%c0_93, %c0_94, %c0_95] : memref<8x8x128xbf16, #tpu.memory_space<vmem>>, vector<8x8x128xbf16>
    %286 = vector.shape_cast %285 : vector<8x8x128xbf16> to vector<64x128xbf16>
    %c0_96 = arith.constant 0 : index
    %c0_97 = arith.constant 0 : index
    %287 = vector.load %arg6[%c0_96, %c0_97] : memref<128x384xbf16, #tpu.memory_space<vmem>>, vector<128x384xbf16>
    %cst_98 = arith.constant dense<0.000000e+00> : vector<64x384xf32>
    %288 = tpu.matmul %286, %287, %cst_98 {dimension_numbers = #tpu.dot_dimension_numbers<[1], [0], [0], [1], [0, 0, 1, 1], [], []>} : vector<64x128xbf16>, vector<128x384xbf16>, vector<64x384xf32> -> vector<64x384xf32>
    %c0_99 = arith.constant 0 : index
    %c0_100 = arith.constant 0 : index
    %289 = vector.load %arg8[%c0_99, %c0_100] : memref<1x384xf32, #tpu.memory_space<vmem>>, vector<1x384xf32>
    %290 = vector.broadcast %289 : vector<1x384xf32> to vector<64x384xf32>
    %291 = arith.addf %288, %290 : vector<64x384xf32>
    %292 = vector.shape_cast %291 : vector<64x384xf32> to vector<8x8x384xf32>
    %c0_101 = arith.constant 0 : index
    %c0_102 = arith.constant 0 : index
    %c0_103 = arith.constant 0 : index
    %293 = vector.load %arg13[%c0_101, %c0_102, %c0_103] : memref<8x8x384xf32, #tpu.memory_space<vmem>>, vector<8x8x384xf32>
    tpu.vector_store %arg13[%c0_101, %c0_102, %c0_103], %292 {strides = array<i32>} : memref<8x8x384xf32, #tpu.memory_space<vmem>>, vector<8x8x384xf32>,
    %c0_104 = arith.constant 0 : index
    %c0_105 = arith.constant 0 : index
    %294 = vector.load %arg9[%c0_104, %c0_105] : memref<1x384xf32, #tpu.memory_space<vmem>>, vector<1x384xf32>
    %295 = vector.shape_cast %294 : vector<1x384xf32> to vector<1x384xf32>
    %296 = vector.broadcast %295 : vector<1x384xf32> to vector<8x384xf32>
    %cst_106 = arith.constant 0.000000e+00 : f32
    %297 = vector.broadcast %cst_106 : f32 to vector<8x128xf32>
    %c0_107 = arith.constant 0 : index
    %c0_108 = arith.constant 0 : index
    %c0_109 = arith.constant 0 : index
    %298 = vector.load %arg13[%c0_107, %c0_108, %c0_109] : memref<8x8x384xf32, #tpu.memory_space<vmem>>, vector<1x8x384xf32>
    %299 = vector.shape_cast %298 : vector<1x8x384xf32> to vector<8x384xf32>
    %300 = arith.truncf %297 : vector<8x128xf32> to vector<8x128xbf16>
    %c0_110 = arith.constant 0 : index
    %c0_111 = arith.constant 0 : index
    %301 = vector.load %arg7[%c0_110, %c0_111] : memref<128x384xbf16, #tpu.memory_space<vmem>>, vector<128x384xbf16>
    %cst_112 = arith.constant dense<0.000000e+00> : vector<8x384xf32>
    %302 = tpu.matmul %300, %301, %cst_112 {dimension_numbers = #tpu.dot_dimension_numbers<[1], [0], [0], [1], [0, 0, 1, 1], [], []>} : vector<8x128xbf16>, vector<128x384xbf16>, vector<8x384xf32> -> vector<8x384xf32>
    %303 = arith.addf %302, %296 : vector<8x384xf32>
    %304 = vector.extract_strided_slice %299 {offsets = [0, 0], sizes = [8, 128], strides = [1, 1]} : vector<8x384xf32> to vector<8x128xf32>
    %305 = vector.extract_strided_slice %303 {offsets = [0, 0], sizes = [8, 128], strides = [1, 1]} : vector<8x384xf32> to vector<8x128xf32>
    %306 = arith.addf %304, %305 : vector<8x128xf32>
    %307 = arith.negf %306 : vector<8x128xf32>
    %308 = math.exp %307 : vector<8x128xf32>
    %cst_113 = arith.constant 1.000000e+00 : f32
    %309 = vector.broadcast %cst_113 : f32 to vector<8x128xf32>
    %310 = arith.addf %309, %308 : vector<8x128xf32>
    %311 = arith.divf %309, %310 : vector<8x128xf32>
    %312 = vector.extract_strided_slice %299 {offsets = [0, 128], sizes = [8, 128], strides = [1, 1]} : vector<8x384xf32> to vector<8x128xf32>
    %313 = vector.extract_strided_slice %303 {offsets = [0, 128], sizes = [8, 128], strides = [1, 1]} : vector<8x384xf32> to vector<8x128xf32>
    %314 = arith.addf %312, %313 : vector<8x128xf32>
    %315 = arith.negf %314 : vector<8x128xf32>
    %316 = math.exp %315 : vector<8x128xf32>
    %cst_114 = arith.constant 1.000000e+00 : f32
    %317 = vector.broadcast %cst_114 : f32 to vector<8x128xf32>
    %318 = arith.addf %317, %316 : vector<8x128xf32>
    %319 = arith.divf %317, %318 : vector<8x128xf32>
    %320 = vector.extract_strided_slice %299 {offsets = [0, 256], sizes = [8, 128], strides = [1, 1]} : vector<8x384xf32> to vector<8x128xf32>
    %321 = vector.extract_strided_slice %303 {offsets = [0, 256], sizes = [8, 128], strides = [1, 1]} : vector<8x384xf32> to vector<8x128xf32>
    %322 = arith.mulf %311, %321 : vector<8x128xf32>
    %323 = arith.addf %320, %322 : vector<8x128xf32>
    %324 = math.tanh %323 : vector<8x128xf32>
    %325 = arith.subf %297, %324 : vector<8x128xf32>
    %326 = arith.mulf %319, %325 : vector<8x128xf32>
    %327 = arith.addf %324, %326 : vector<8x128xf32>
    %c1_115 = arith.constant 1 : index
    %c0_116 = arith.constant 0 : index
    %c0_117 = arith.constant 0 : index
    %328 = vector.load %arg13[%c1_115, %c0_116, %c0_117] : memref<8x8x384xf32, #tpu.memory_space<vmem>>, vector<1x8x384xf32>
    %329 = vector.shape_cast %328 : vector<1x8x384xf32> to vector<8x384xf32>
    %330 = arith.truncf %327 : vector<8x128xf32> to vector<8x128xbf16>
    %c0_118 = arith.constant 0 : index
    %c0_119 = arith.constant 0 : index
    %331 = vector.load %arg7[%c0_118, %c0_119] : memref<128x384xbf16, #tpu.memory_space<vmem>>, vector<128x384xbf16>
    %cst_120 = arith.constant dense<0.000000e+00> : vector<8x384xf32>
    %332 = tpu.matmul %330, %331, %cst_120 {dimension_numbers = #tpu.dot_dimension_numbers<[1], [0], [0], [1], [0, 0, 1, 1], [], []>} : vector<8x128xbf16>, vector<128x384xbf16>, vector<8x384xf32> -> vector<8x384xf32>
    %333 = arith.addf %332, %296 : vector<8x384xf32>
    %334 = vector.extract_strided_slice %329 {offsets = [0, 0], sizes = [8, 128], strides = [1, 1]} : vector<8x384xf32> to vector<8x128xf32>
    %335 = vector.extract_strided_slice %333 {offsets = [0, 0], sizes = [8, 128], strides = [1, 1]} : vector<8x384xf32> to vector<8x128xf32>
    %336 = arith.addf %334, %335 : vector<8x128xf32>
    %337 = arith.negf %336 : vector<8x128xf32>
    %338 = math.exp %337 : vector<8x128xf32>
    %cst_121 = arith.constant 1.000000e+00 : f32
    %339 = vector.broadcast %cst_121 : f32 to vector<8x128xf32>
    %340 = arith.addf %339, %338 : vector<8x128xf32>
    %341 = arith.divf %339, %340 : vector<8x128xf32>
    %342 = vector.extract_strided_slice %329 {offsets = [0, 128], sizes = [8, 128], strides = [1, 1]} : vector<8x384xf32> to vector<8x128xf32>
    %343 = vector.extract_strided_slice %333 {offsets = [0, 128], sizes = [8, 128], strides = [1, 1]} : vector<8x384xf32> to vector<8x128xf32>
    %344 = arith.addf %342, %343 : vector<8x128xf32>
    %345 = arith.negf %344 : vector<8x128xf32>
    %346 = math.exp %345 : vector<8x128xf32>
    %cst_122 = arith.constant 1.000000e+00 : f32
    %347 = vector.broadcast %cst_122 : f32 to vector<8x128xf32>
    %348 = arith.addf %347, %346 : vector<8x128xf32>
    %349 = arith.divf %347, %348 : vector<8x128xf32>
    %350 = vector.extract_strided_slice %329 {offsets = [0, 256], sizes = [8, 128], strides = [1, 1]} : vector<8x384xf32> to vector<8x128xf32>
    %351 = vector.extract_strided_slice %333 {offsets = [0, 256], sizes = [8, 128], strides = [1, 1]} : vector<8x384xf32> to vector<8x128xf32>
    %352 = arith.mulf %341, %351 : vector<8x128xf32>
    %353 = arith.addf %350, %352 : vector<8x128xf32>
    %354 = math.tanh %353 : vector<8x128xf32>
    %355 = arith.subf %327, %354 : vector<8x128xf32>
    %356 = arith.mulf %349, %355 : vector<8x128xf32>
    %357 = arith.addf %354, %356 : vector<8x128xf32>
    %c2_123 = arith.constant 2 : index
    %c0_124 = arith.constant 0 : index
    %c0_125 = arith.constant 0 : index
    %358 = vector.load %arg13[%c2_123, %c0_124, %c0_125] : memref<8x8x384xf32, #tpu.memory_space<vmem>>, vector<1x8x384xf32>
    %359 = vector.shape_cast %358 : vector<1x8x384xf32> to vector<8x384xf32>
    %360 = arith.truncf %357 : vector<8x128xf32> to vector<8x128xbf16>
    %c0_126 = arith.constant 0 : index
    %c0_127 = arith.constant 0 : index
    %361 = vector.load %arg7[%c0_126, %c0_127] : memref<128x384xbf16, #tpu.memory_space<vmem>>, vector<128x384xbf16>
    %cst_128 = arith.constant dense<0.000000e+00> : vector<8x384xf32>
    %362 = tpu.matmul %360, %361, %cst_128 {dimension_numbers = #tpu.dot_dimension_numbers<[1], [0], [0], [1], [0, 0, 1, 1], [], []>} : vector<8x128xbf16>, vector<128x384xbf16>, vector<8x384xf32> -> vector<8x384xf32>
    %363 = arith.addf %362, %296 : vector<8x384xf32>
    %364 = vector.extract_strided_slice %359 {offsets = [0, 0], sizes = [8, 128], strides = [1, 1]} : vector<8x384xf32> to vector<8x128xf32>
    %365 = vector.extract_strided_slice %363 {offsets = [0, 0], sizes = [8, 128], strides = [1, 1]} : vector<8x384xf32> to vector<8x128xf32>
    %366 = arith.addf %364, %365 : vector<8x128xf32>
    %367 = arith.negf %366 : vector<8x128xf32>
    %368 = math.exp %367 : vector<8x128xf32>
    %cst_129 = arith.constant 1.000000e+00 : f32
    %369 = vector.broadcast %cst_129 : f32 to vector<8x128xf32>
    %370 = arith.addf %369, %368 : vector<8x128xf32>
    %371 = arith.divf %369, %370 : vector<8x128xf32>
    %372 = vector.extract_strided_slice %359 {offsets = [0, 128], sizes = [8, 128], strides = [1, 1]} : vector<8x384xf32> to vector<8x128xf32>
    %373 = vector.extract_strided_slice %363 {offsets = [0, 128], sizes = [8, 128], strides = [1, 1]} : vector<8x384xf32> to vector<8x128xf32>
    %374 = arith.addf %372, %373 : vector<8x128xf32>
    %375 = arith.negf %374 : vector<8x128xf32>
    %376 = math.exp %375 : vector<8x128xf32>
    %cst_130 = arith.constant 1.000000e+00 : f32
    %377 = vector.broadcast %cst_130 : f32 to vector<8x128xf32>
    %378 = arith.addf %377, %376 : vector<8x128xf32>
    %379 = arith.divf %377, %378 : vector<8x128xf32>
    %380 = vector.extract_strided_slice %359 {offsets = [0, 256], sizes = [8, 128], strides = [1, 1]} : vector<8x384xf32> to vector<8x128xf32>
    %381 = vector.extract_strided_slice %363 {offsets = [0, 256], sizes = [8, 128], strides = [1, 1]} : vector<8x384xf32> to vector<8x128xf32>
    %382 = arith.mulf %371, %381 : vector<8x128xf32>
    %383 = arith.addf %380, %382 : vector<8x128xf32>
    %384 = math.tanh %383 : vector<8x128xf32>
    %385 = arith.subf %357, %384 : vector<8x128xf32>
    %386 = arith.mulf %379, %385 : vector<8x128xf32>
    %387 = arith.addf %384, %386 : vector<8x128xf32>
    %c3_131 = arith.constant 3 : index
    %c0_132 = arith.constant 0 : index
    %c0_133 = arith.constant 0 : index
    %388 = vector.load %arg13[%c3_131, %c0_132, %c0_133] : memref<8x8x384xf32, #tpu.memory_space<vmem>>, vector<1x8x384xf32>
    %389 = vector.shape_cast %388 : vector<1x8x384xf32> to vector<8x384xf32>
    %390 = arith.truncf %387 : vector<8x128xf32> to vector<8x128xbf16>
    %c0_134 = arith.constant 0 : index
    %c0_135 = arith.constant 0 : index
    %391 = vector.load %arg7[%c0_134, %c0_135] : memref<128x384xbf16, #tpu.memory_space<vmem>>, vector<128x384xbf16>
    %cst_136 = arith.constant dense<0.000000e+00> : vector<8x384xf32>
    %392 = tpu.matmul %390, %391, %cst_136 {dimension_numbers = #tpu.dot_dimension_numbers<[1], [0], [0], [1], [0, 0, 1, 1], [], []>} : vector<8x128xbf16>, vector<128x384xbf16>, vector<8x384xf32> -> vector<8x384xf32>
    %393 = arith.addf %392, %296 : vector<8x384xf32>
    %394 = vector.extract_strided_slice %389 {offsets = [0, 0], sizes = [8, 128], strides = [1, 1]} : vector<8x384xf32> to vector<8x128xf32>
    %395 = vector.extract_strided_slice %393 {offsets = [0, 0], sizes = [8, 128], strides = [1, 1]} : vector<8x384xf32> to vector<8x128xf32>
    %396 = arith.addf %394, %395 : vector<8x128xf32>
    %397 = arith.negf %396 : vector<8x128xf32>
    %398 = math.exp %397 : vector<8x128xf32>
    %cst_137 = arith.constant 1.000000e+00 : f32
    %399 = vector.broadcast %cst_137 : f32 to vector<8x128xf32>
    %400 = arith.addf %399, %398 : vector<8x128xf32>
    %401 = arith.divf %399, %400 : vector<8x128xf32>
    %402 = vector.extract_strided_slice %389 {offsets = [0, 128], sizes = [8, 128], strides = [1, 1]} : vector<8x384xf32> to vector<8x128xf32>
    %403 = vector.extract_strided_slice %393 {offsets = [0, 128], sizes = [8, 128], strides = [1, 1]} : vector<8x384xf32> to vector<8x128xf32>
    %404 = arith.addf %402, %403 : vector<8x128xf32>
    %405 = arith.negf %404 : vector<8x128xf32>
    %406 = math.exp %405 : vector<8x128xf32>
    %cst_138 = arith.constant 1.000000e+00 : f32
    %407 = vector.broadcast %cst_138 : f32 to vector<8x128xf32>
    %408 = arith.addf %407, %406 : vector<8x128xf32>
    %409 = arith.divf %407, %408 : vector<8x128xf32>
    %410 = vector.extract_strided_slice %389 {offsets = [0, 256], sizes = [8, 128], strides = [1, 1]} : vector<8x384xf32> to vector<8x128xf32>
    %411 = vector.extract_strided_slice %393 {offsets = [0, 256], sizes = [8, 128], strides = [1, 1]} : vector<8x384xf32> to vector<8x128xf32>
    %412 = arith.mulf %401, %411 : vector<8x128xf32>
    %413 = arith.addf %410, %412 : vector<8x128xf32>
    %414 = math.tanh %413 : vector<8x128xf32>
    %415 = arith.subf %387, %414 : vector<8x128xf32>
    %416 = arith.mulf %409, %415 : vector<8x128xf32>
    %417 = arith.addf %414, %416 : vector<8x128xf32>
    %c4_139 = arith.constant 4 : index
    %c0_140 = arith.constant 0 : index
    %c0_141 = arith.constant 0 : index
    %418 = vector.load %arg13[%c4_139, %c0_140, %c0_141] : memref<8x8x384xf32, #tpu.memory_space<vmem>>, vector<1x8x384xf32>
    %419 = vector.shape_cast %418 : vector<1x8x384xf32> to vector<8x384xf32>
    %420 = arith.truncf %417 : vector<8x128xf32> to vector<8x128xbf16>
    %c0_142 = arith.constant 0 : index
    %c0_143 = arith.constant 0 : index
    %421 = vector.load %arg7[%c0_142, %c0_143] : memref<128x384xbf16, #tpu.memory_space<vmem>>, vector<128x384xbf16>
    %cst_144 = arith.constant dense<0.000000e+00> : vector<8x384xf32>
    %422 = tpu.matmul %420, %421, %cst_144 {dimension_numbers = #tpu.dot_dimension_numbers<[1], [0], [0], [1], [0, 0, 1, 1], [], []>} : vector<8x128xbf16>, vector<128x384xbf16>, vector<8x384xf32> -> vector<8x384xf32>
    %423 = arith.addf %422, %296 : vector<8x384xf32>
    %424 = vector.extract_strided_slice %419 {offsets = [0, 0], sizes = [8, 128], strides = [1, 1]} : vector<8x384xf32> to vector<8x128xf32>
    %425 = vector.extract_strided_slice %423 {offsets = [0, 0], sizes = [8, 128], strides = [1, 1]} : vector<8x384xf32> to vector<8x128xf32>
    %426 = arith.addf %424, %425 : vector<8x128xf32>
    %427 = arith.negf %426 : vector<8x128xf32>
    %428 = math.exp %427 : vector<8x128xf32>
    %cst_145 = arith.constant 1.000000e+00 : f32
    %429 = vector.broadcast %cst_145 : f32 to vector<8x128xf32>
    %430 = arith.addf %429, %428 : vector<8x128xf32>
    %431 = arith.divf %429, %430 : vector<8x128xf32>
    %432 = vector.extract_strided_slice %419 {offsets = [0, 128], sizes = [8, 128], strides = [1, 1]} : vector<8x384xf32> to vector<8x128xf32>
    %433 = vector.extract_strided_slice %423 {offsets = [0, 128], sizes = [8, 128], strides = [1, 1]} : vector<8x384xf32> to vector<8x128xf32>
    %434 = arith.addf %432, %433 : vector<8x128xf32>
    %435 = arith.negf %434 : vector<8x128xf32>
    %436 = math.exp %435 : vector<8x128xf32>
    %cst_146 = arith.constant 1.000000e+00 : f32
    %437 = vector.broadcast %cst_146 : f32 to vector<8x128xf32>
    %438 = arith.addf %437, %436 : vector<8x128xf32>
    %439 = arith.divf %437, %438 : vector<8x128xf32>
    %440 = vector.extract_strided_slice %419 {offsets = [0, 256], sizes = [8, 128], strides = [1, 1]} : vector<8x384xf32> to vector<8x128xf32>
    %441 = vector.extract_strided_slice %423 {offsets = [0, 256], sizes = [8, 128], strides = [1, 1]} : vector<8x384xf32> to vector<8x128xf32>
    %442 = arith.mulf %431, %441 : vector<8x128xf32>
    %443 = arith.addf %440, %442 : vector<8x128xf32>
    %444 = math.tanh %443 : vector<8x128xf32>
    %445 = arith.subf %417, %444 : vector<8x128xf32>
    %446 = arith.mulf %439, %445 : vector<8x128xf32>
    %447 = arith.addf %444, %446 : vector<8x128xf32>
    %c5_147 = arith.constant 5 : index
    %c0_148 = arith.constant 0 : index
    %c0_149 = arith.constant 0 : index
    %448 = vector.load %arg13[%c5_147, %c0_148, %c0_149] : memref<8x8x384xf32, #tpu.memory_space<vmem>>, vector<1x8x384xf32>
    %449 = vector.shape_cast %448 : vector<1x8x384xf32> to vector<8x384xf32>
    %450 = arith.truncf %447 : vector<8x128xf32> to vector<8x128xbf16>
    %c0_150 = arith.constant 0 : index
    %c0_151 = arith.constant 0 : index
    %451 = vector.load %arg7[%c0_150, %c0_151] : memref<128x384xbf16, #tpu.memory_space<vmem>>, vector<128x384xbf16>
    %cst_152 = arith.constant dense<0.000000e+00> : vector<8x384xf32>
    %452 = tpu.matmul %450, %451, %cst_152 {dimension_numbers = #tpu.dot_dimension_numbers<[1], [0], [0], [1], [0, 0, 1, 1], [], []>} : vector<8x128xbf16>, vector<128x384xbf16>, vector<8x384xf32> -> vector<8x384xf32>
    %453 = arith.addf %452, %296 : vector<8x384xf32>
    %454 = vector.extract_strided_slice %449 {offsets = [0, 0], sizes = [8, 128], strides = [1, 1]} : vector<8x384xf32> to vector<8x128xf32>
    %455 = vector.extract_strided_slice %453 {offsets = [0, 0], sizes = [8, 128], strides = [1, 1]} : vector<8x384xf32> to vector<8x128xf32>
    %456 = arith.addf %454, %455 : vector<8x128xf32>
    %457 = arith.negf %456 : vector<8x128xf32>
    %458 = math.exp %457 : vector<8x128xf32>
    %cst_153 = arith.constant 1.000000e+00 : f32
    %459 = vector.broadcast %cst_153 : f32 to vector<8x128xf32>
    %460 = arith.addf %459, %458 : vector<8x128xf32>
    %461 = arith.divf %459, %460 : vector<8x128xf32>
    %462 = vector.extract_strided_slice %449 {offsets = [0, 128], sizes = [8, 128], strides = [1, 1]} : vector<8x384xf32> to vector<8x128xf32>
    %463 = vector.extract_strided_slice %453 {offsets = [0, 128], sizes = [8, 128], strides = [1, 1]} : vector<8x384xf32> to vector<8x128xf32>
    %464 = arith.addf %462, %463 : vector<8x128xf32>
    %465 = arith.negf %464 : vector<8x128xf32>
    %466 = math.exp %465 : vector<8x128xf32>
    %cst_154 = arith.constant 1.000000e+00 : f32
    %467 = vector.broadcast %cst_154 : f32 to vector<8x128xf32>
    %468 = arith.addf %467, %466 : vector<8x128xf32>
    %469 = arith.divf %467, %468 : vector<8x128xf32>
    %470 = vector.extract_strided_slice %449 {offsets = [0, 256], sizes = [8, 128], strides = [1, 1]} : vector<8x384xf32> to vector<8x128xf32>
    %471 = vector.extract_strided_slice %453 {offsets = [0, 256], sizes = [8, 128], strides = [1, 1]} : vector<8x384xf32> to vector<8x128xf32>
    %472 = arith.mulf %461, %471 : vector<8x128xf32>
    %473 = arith.addf %470, %472 : vector<8x128xf32>
    %474 = math.tanh %473 : vector<8x128xf32>
    %475 = arith.subf %447, %474 : vector<8x128xf32>
    %476 = arith.mulf %469, %475 : vector<8x128xf32>
    %477 = arith.addf %474, %476 : vector<8x128xf32>
    %c6_155 = arith.constant 6 : index
    %c0_156 = arith.constant 0 : index
    %c0_157 = arith.constant 0 : index
    %478 = vector.load %arg13[%c6_155, %c0_156, %c0_157] : memref<8x8x384xf32, #tpu.memory_space<vmem>>, vector<1x8x384xf32>
    %479 = vector.shape_cast %478 : vector<1x8x384xf32> to vector<8x384xf32>
    %480 = arith.truncf %477 : vector<8x128xf32> to vector<8x128xbf16>
    %c0_158 = arith.constant 0 : index
    %c0_159 = arith.constant 0 : index
    %481 = vector.load %arg7[%c0_158, %c0_159] : memref<128x384xbf16, #tpu.memory_space<vmem>>, vector<128x384xbf16>
    %cst_160 = arith.constant dense<0.000000e+00> : vector<8x384xf32>
    %482 = tpu.matmul %480, %481, %cst_160 {dimension_numbers = #tpu.dot_dimension_numbers<[1], [0], [0], [1], [0, 0, 1, 1], [], []>} : vector<8x128xbf16>, vector<128x384xbf16>, vector<8x384xf32> -> vector<8x384xf32>
    %483 = arith.addf %482, %296 : vector<8x384xf32>
    %484 = vector.extract_strided_slice %479 {offsets = [0, 0], sizes = [8, 128], strides = [1, 1]} : vector<8x384xf32> to vector<8x128xf32>
    %485 = vector.extract_strided_slice %483 {offsets = [0, 0], sizes = [8, 128], strides = [1, 1]} : vector<8x384xf32> to vector<8x128xf32>
    %486 = arith.addf %484, %485 : vector<8x128xf32>
    %487 = arith.negf %486 : vector<8x128xf32>
    %488 = math.exp %487 : vector<8x128xf32>
    %cst_161 = arith.constant 1.000000e+00 : f32
    %489 = vector.broadcast %cst_161 : f32 to vector<8x128xf32>
    %490 = arith.addf %489, %488 : vector<8x128xf32>
    %491 = arith.divf %489, %490 : vector<8x128xf32>
    %492 = vector.extract_strided_slice %479 {offsets = [0, 128], sizes = [8, 128], strides = [1, 1]} : vector<8x384xf32> to vector<8x128xf32>
    %493 = vector.extract_strided_slice %483 {offsets = [0, 128], sizes = [8, 128], strides = [1, 1]} : vector<8x384xf32> to vector<8x128xf32>
    %494 = arith.addf %492, %493 : vector<8x128xf32>
    %495 = arith.negf %494 : vector<8x128xf32>
    %496 = math.exp %495 : vector<8x128xf32>
    %cst_162 = arith.constant 1.000000e+00 : f32
    %497 = vector.broadcast %cst_162 : f32 to vector<8x128xf32>
    %498 = arith.addf %497, %496 : vector<8x128xf32>
    %499 = arith.divf %497, %498 : vector<8x128xf32>
    %500 = vector.extract_strided_slice %479 {offsets = [0, 256], sizes = [8, 128], strides = [1, 1]} : vector<8x384xf32> to vector<8x128xf32>
    %501 = vector.extract_strided_slice %483 {offsets = [0, 256], sizes = [8, 128], strides = [1, 1]} : vector<8x384xf32> to vector<8x128xf32>
    %502 = arith.mulf %491, %501 : vector<8x128xf32>
    %503 = arith.addf %500, %502 : vector<8x128xf32>
    %504 = math.tanh %503 : vector<8x128xf32>
    %505 = arith.subf %477, %504 : vector<8x128xf32>
    %506 = arith.mulf %499, %505 : vector<8x128xf32>
    %507 = arith.addf %504, %506 : vector<8x128xf32>
    %c7_163 = arith.constant 7 : index
    %c0_164 = arith.constant 0 : index
    %c0_165 = arith.constant 0 : index
    %508 = vector.load %arg13[%c7_163, %c0_164, %c0_165] : memref<8x8x384xf32, #tpu.memory_space<vmem>>, vector<1x8x384xf32>
    %509 = vector.shape_cast %508 : vector<1x8x384xf32> to vector<8x384xf32>
    %510 = arith.truncf %507 : vector<8x128xf32> to vector<8x128xbf16>
    %c0_166 = arith.constant 0 : index
    %c0_167 = arith.constant 0 : index
    %511 = vector.load %arg7[%c0_166, %c0_167] : memref<128x384xbf16, #tpu.memory_space<vmem>>, vector<128x384xbf16>
    %cst_168 = arith.constant dense<0.000000e+00> : vector<8x384xf32>
    %512 = tpu.matmul %510, %511, %cst_168 {dimension_numbers = #tpu.dot_dimension_numbers<[1], [0], [0], [1], [0, 0, 1, 1], [], []>} : vector<8x128xbf16>, vector<128x384xbf16>, vector<8x384xf32> -> vector<8x384xf32>
    %513 = arith.addf %512, %296 : vector<8x384xf32>
    %514 = vector.extract_strided_slice %509 {offsets = [0, 0], sizes = [8, 128], strides = [1, 1]} : vector<8x384xf32> to vector<8x128xf32>
    %515 = vector.extract_strided_slice %513 {offsets = [0, 0], sizes = [8, 128], strides = [1, 1]} : vector<8x384xf32> to vector<8x128xf32>
    %516 = arith.addf %514, %515 : vector<8x128xf32>
    %517 = arith.negf %516 : vector<8x128xf32>
    %518 = math.exp %517 : vector<8x128xf32>
    %cst_169 = arith.constant 1.000000e+00 : f32
    %519 = vector.broadcast %cst_169 : f32 to vector<8x128xf32>
    %520 = arith.addf %519, %518 : vector<8x128xf32>
    %521 = arith.divf %519, %520 : vector<8x128xf32>
    %522 = vector.extract_strided_slice %509 {offsets = [0, 128], sizes = [8, 128], strides = [1, 1]} : vector<8x384xf32> to vector<8x128xf32>
    %523 = vector.extract_strided_slice %513 {offsets = [0, 128], sizes = [8, 128], strides = [1, 1]} : vector<8x384xf32> to vector<8x128xf32>
    %524 = arith.addf %522, %523 : vector<8x128xf32>
    %525 = arith.negf %524 : vector<8x128xf32>
    %526 = math.exp %525 : vector<8x128xf32>
    %cst_170 = arith.constant 1.000000e+00 : f32
    %527 = vector.broadcast %cst_170 : f32 to vector<8x128xf32>
    %528 = arith.addf %527, %526 : vector<8x128xf32>
    %529 = arith.divf %527, %528 : vector<8x128xf32>
    %530 = vector.extract_strided_slice %509 {offsets = [0, 256], sizes = [8, 128], strides = [1, 1]} : vector<8x384xf32> to vector<8x128xf32>
    %531 = vector.extract_strided_slice %513 {offsets = [0, 256], sizes = [8, 128], strides = [1, 1]} : vector<8x384xf32> to vector<8x128xf32>
    %532 = arith.mulf %521, %531 : vector<8x128xf32>
    %533 = arith.addf %530, %532 : vector<8x128xf32>
    %534 = math.tanh %533 : vector<8x128xf32>
    %535 = arith.subf %507, %534 : vector<8x128xf32>
    %536 = arith.mulf %529, %535 : vector<8x128xf32>
    %537 = arith.addf %534, %536 : vector<8x128xf32>
    %c0_171 = arith.constant 0 : index
    %c0_172 = arith.constant 0 : index
    %538 = vector.load %arg10[%c0_171, %c0_172] : memref<128x128xf32, #tpu.memory_space<vmem>>, vector<128x128xf32>
    %cst_173 = arith.constant dense<0.000000e+00> : vector<8x128xf32>
    %539 = tpu.matmul %537, %538, %cst_173 {dimension_numbers = #tpu.dot_dimension_numbers<[1], [0], [0], [1], [0, 0, 1, 1], [], []>} : vector<8x128xf32>, vector<128x128xf32>, vector<8x128xf32> -> vector<8x128xf32>
    %c0_174 = arith.constant 0 : index
    %c0_175 = arith.constant 0 : index
    %540 = vector.load %arg11[%c0_174, %c0_175] : memref<1x128xf32, #tpu.memory_space<vmem>>, vector<1x128xf32>
    %541 = vector.broadcast %540 : vector<1x128xf32> to vector<8x128xf32>
    %542 = arith.addf %539, %541 : vector<8x128xf32>
    %c0_176 = arith.constant 0 : index
    %c0_177 = arith.constant 0 : index
    %543 = vector.load %arg12[%c0_176, %c0_177] : memref<8x128xf32, #tpu.memory_space<vmem>>, vector<8x128xf32>
    tpu.vector_store %arg12[%c0_176, %c0_177], %542 {strides = array<i32>} : memref<8x128xf32, #tpu.memory_space<vmem>>, vector<8x128xf32>,
    return
  }
  func.func @transform_0(%arg0: i32) -> (i32, i32, i32) {
    %c0_i32 = arith.constant 0 : i32
    %c0_i32_0 = arith.constant 0 : i32
    %c0_i32_1 = arith.constant 0 : i32
    return %c0_i32, %arg0, %c0_i32_0 : i32, i32, i32
  }
  func.func @transform_1(%arg0: i32) -> (i32, i32) {
    %c0_i32 = arith.constant 0 : i32
    %c0_i32_0 = arith.constant 0 : i32
    %c0_i32_1 = arith.constant 0 : i32
    return %c0_i32, %c0_i32_0 : i32, i32
  }
  func.func @transform_2(%arg0: i32) -> (i32, i32) {
    %c0_i32 = arith.constant 0 : i32
    %c0_i32_0 = arith.constant 0 : i32
    %c0_i32_1 = arith.constant 0 : i32
    return %c0_i32, %c0_i32_0 : i32, i32
  }
  func.func @transform_3(%arg0: i32) -> (i32, i32) {
    %c0_i32 = arith.constant 0 : i32
    %c0_i32_0 = arith.constant 0 : i32
    %c0_i32_1 = arith.constant 0 : i32
    return %c0_i32, %c0_i32_0 : i32, i32
  }
  func.func @transform_4(%arg0: i32) -> (i32, i32) {
    %c0_i32 = arith.constant 0 : i32
    %c0_i32_0 = arith.constant 0 : i32
    %c0_i32_1 = arith.constant 0 : i32
    return %c0_i32, %c0_i32_0 : i32, i32
  }
  func.func @transform_5(%arg0: i32) -> (i32, i32) {
    %c0_i32 = arith.constant 0 : i32
    %c0_i32_0 = arith.constant 0 : i32
    %c0_i32_1 = arith.constant 0 : i32
    return %c0_i32, %c0_i32_0 : i32, i32
  }
  func.func @transform_6(%arg0: i32) -> (i32, i32) {
    %c0_i32 = arith.constant 0 : i32
    %c0_i32_0 = arith.constant 0 : i32
    %c0_i32_1 = arith.constant 0 : i32
    return %c0_i32, %c0_i32_0 : i32, i32
  }
  func.func @transform_7(%arg0: i32) -> (i32, i32) {
    %c0_i32 = arith.constant 0 : i32
    %c0_i32_0 = arith.constant 0 : i32
    %c0_i32_1 = arith.constant 0 : i32
    return %c0_i32, %c0_i32_0 : i32, i32
  }
  func.func @transform_8(%arg0: i32) -> (i32, i32) {
    %c0_i32 = arith.constant 0 : i32
    %c0_i32_0 = arith.constant 0 : i32
    %c0_i32_1 = arith.constant 0 : i32
    return %c0_i32, %c0_i32_0 : i32, i32
  }
  func.func @transform_9(%arg0: i32) -> (i32, i32) {
    %c0_i32 = arith.constant 0 : i32
    %c0_i32_0 = arith.constant 0 : i32
    %c0_i32_1 = arith.constant 0 : i32
    return %c0_i32, %c0_i32_0 : i32, i32
  }
  func.func @transform_10(%arg0: i32) -> (i32, i32) {
    %c0_i32 = arith.constant 0 : i32
    %c0_i32_0 = arith.constant 0 : i32
    %c0_i32_1 = arith.constant 0 : i32
    return %c0_i32, %c0_i32_0 : i32, i32
  }
  func.func @transform_11(%arg0: i32) -> (i32, i32) {
    %c0_i32 = arith.constant 0 : i32
    %c0_i32_0 = arith.constant 0 : i32
    return %arg0, %c0_i32 : i32, i32
  }
}

</mosaic_0001>

<llo_original>
// kernel: gru_model_forward.1
$region0: #{gru_model_forward.1}
  #allocation0 [shape = 'u32[]', space=smem, size = 0x4, offset = 0x4, fixed_abs, tag = 'smem constant byte address 0x4 - core index']
  #allocation1 [shape = 'u32[72,128]{1,0:T(1,128)}', space=vmem, size = 0x9000, scoped, tag = 'internal scratch']
  #allocation2 [shape = 'f32[8,8,384]{2,1,0:T(8,128)}', space=vmem, size = 0x18000, scoped, tag = 'scratch operand']
  #allocation3 [shape = 'bf16[8,8,128]{2,1,0:T(8,128)(2,1)}', space=vmem, size = 0x4000, scoped, tag = 'scratch operand']
  %s0 = inlined_call_operand.vmem [shape: bf16[8,8,128], index: 0, kind: input, shape index: {}]
  %s1 = inlined_call_operand.vmem [shape: bf16[128,384], index: 1, kind: input, shape index: {}]
  %s2 = inlined_call_operand.vmem [shape: bf16[128,384], index: 2, kind: input, shape index: {}]
  %s3 = inlined_call_operand.vmem [shape: f32[1,384], index: 3, kind: input, shape index: {}]
  %s4 = inlined_call_operand.vmem [shape: f32[1,384], index: 4, kind: input, shape index: {}]
  %s5 = inlined_call_operand.vmem [shape: bf16[128,384], index: 5, kind: input, shape index: {}]
  %s6 = inlined_call_operand.vmem [shape: bf16[128,384], index: 6, kind: input, shape index: {}]
  %s7 = inlined_call_operand.vmem [shape: f32[1,384], index: 7, kind: input, shape index: {}]
  %s8 = inlined_call_operand.vmem [shape: f32[1,384], index: 8, kind: input, shape index: {}]
  %s9 = inlined_call_operand.vmem [shape: f32[128,128], index: 9, kind: input, shape index: {}]
  %s10 = inlined_call_operand.vmem [shape: f32[1,128], index: 10, kind: input, shape index: {}]
  %s11 = inlined_call_operand.vmem [shape: f32[8,128], index: 11, kind: output, shape index: {}]
  %s12 = sld [smem:[#allocation0]]
  $region54: #{gru_model_forward.1} parent=0
    _
  %s14 = ssub.s32 1, %s12
  %s15 = scalar_select 0, %s14, %s12
  // Predicated region
  $region2: #{gru_model_forward.1} parent=0 // pred_check
    _
  $region3: #{gru_model_forward.1} parent=0 // pred_check_branch
    %17 = sbr.rel (0) target = $region5
  $region4: #{gru_model_forward.1} parent=0 // pred_region
    _
  $region5: #{gru_model_forward.1} parent=0 // pred_fallthru
    _
  // Predicated region
  $region6: #{gru_model_forward.1} parent=0 // pred_check
    _
  $region7: #{gru_model_forward.1} parent=0 // pred_check_branch
    %19 = sbr.rel (0) target = $region9
  $region8: #{gru_model_forward.1} parent=0 // pred_region
    _
  $region9: #{gru_model_forward.1} parent=0 // pred_fallthru
    _
  // Predicated region
  $region10: #{gru_model_forward.1} parent=0 // pred_check
    _
  $region11: #{gru_model_forward.1} parent=0 // pred_check_branch
    %21 = sbr.rel (0) target = $region13
  $region12: #{gru_model_forward.1} parent=0 // pred_region
    _
  $region13: #{gru_model_forward.1} parent=0 // pred_fallthru
    _
  // Predicated region
  $region14: #{gru_model_forward.1} parent=0 // pred_check
    _
  $region15: #{gru_model_forward.1} parent=0 // pred_check_branch
    %23 = sbr.rel (0) target = $region17
  $region16: #{gru_model_forward.1} parent=0 // pred_region
    _
  $region17: #{gru_model_forward.1} parent=0 // pred_fallthru
    _
  // Predicated region
  $region18: #{gru_model_forward.1} parent=0 // pred_check
    _
  $region19: #{gru_model_forward.1} parent=0 // pred_check_branch
    %25 = sbr.rel (0) target = $region21
  $region20: #{gru_model_forward.1} parent=0 // pred_region
    _
  $region21: #{gru_model_forward.1} parent=0 // pred_fallthru
    _
  // Predicated region
  $region22: #{gru_model_forward.1} parent=0 // pred_check
    _
  $region23: #{gru_model_forward.1} parent=0 // pred_check_branch
    %27 = sbr.rel (0) target = $region25
  $region24: #{gru_model_forward.1} parent=0 // pred_region
    _
  $region25: #{gru_model_forward.1} parent=0 // pred_fallthru
    _
  // Predicated region
  $region26: #{gru_model_forward.1} parent=0 // pred_check
    _
  $region27: #{gru_model_forward.1} parent=0 // pred_check_branch
    %29 = sbr.rel (0) target = $region29
  $region28: #{gru_model_forward.1} parent=0 // pred_region
    _
  $region29: #{gru_model_forward.1} parent=0 // pred_fallthru
    _
  // Predicated region
  $region30: #{gru_model_forward.1} parent=0 // pred_check
    _
  $region31: #{gru_model_forward.1} parent=0 // pred_check_branch
    %31 = sbr.rel (0) target = $region33
  $region32: #{gru_model_forward.1} parent=0 // pred_region
    _
  $region33: #{gru_model_forward.1} parent=0 // pred_fallthru
    _
  // Predicated region
  $region34: #{gru_model_forward.1} parent=0 // pred_check
    _
  $region35: #{gru_model_forward.1} parent=0 // pred_check_branch
    %33 = sbr.rel (0) target = $region37
  $region36: #{gru_model_forward.1} parent=0 // pred_region
    _
  $region37: #{gru_model_forward.1} parent=0 // pred_fallthru
    _
  // Predicated region
  $region38: #{gru_model_forward.1} parent=0 // pred_check
    _
  $region39: #{gru_model_forward.1} parent=0 // pred_check_branch
    %35 = sbr.rel (0) target = $region41
  $region40: #{gru_model_forward.1} parent=0 // pred_region
    _
  $region41: #{gru_model_forward.1} parent=0 // pred_fallthru
    _
  // Predicated region
  $region42: #{gru_model_forward.1} parent=0 // pred_check
    _
  $region43: #{gru_model_forward.1} parent=0 // pred_check_branch
    %37 = sbr.rel (0) target = $region45
  $region44: #{gru_model_forward.1} parent=0 // pred_region
    _
  $region45: #{gru_model_forward.1} parent=0 // pred_fallthru
    _
  %v39 = vld [vmem:[%s0] sm:$0xf]
  %v40 = vld [vmem:[%s0 + $0x4] sm:$0xf]
  %v41 = vld [vmem:[%s0 + $0x8] sm:$0xf]
  %v42 = vld [vmem:[%s0 + $0xc] sm:$0xf]
  %v43 = vld [vmem:[%s0 + $0x10] sm:$0xf]
  %v44 = vld [vmem:[%s0 + $0x14] sm:$0xf]
  %v45 = vld [vmem:[%s0 + $0x18] sm:$0xf]
  %v46 = vld [vmem:[%s0 + $0x1c] sm:$0xf]
  %v47 = vld [vmem:[%s1] sm:$0xff]
  %v48 = vld [vmem:[%s1 + $0x8] sm:$0xf]
  %v49 = vld [vmem:[%s1 + $0xc] sm:$0xff]
  %v50 = vld [vmem:[%s1 + $0x14] sm:$0xf]
  %v51 = vld [vmem:[%s1 + $0x18] sm:$0xff]
  %v52 = vld [vmem:[%s1 + $0x20] sm:$0xf]
  %v53 = vld [vmem:[%s1 + $0x24] sm:$0xff]
  %v54 = vld [vmem:[%s1 + $0x2c] sm:$0xf]
  %v55 = vld [vmem:[%s1 + $0x30] sm:$0xff]
  %v56 = vld [vmem:[%s1 + $0x38] sm:$0xf]
  %v57 = vld [vmem:[%s1 + $0x3c] sm:$0xff]
  %v58 = vld [vmem:[%s1 + $0x44] sm:$0xf]
  %v59 = vld [vmem:[%s1 + $0x48] sm:$0xff]
  %v60 = vld [vmem:[%s1 + $0x50] sm:$0xf]
  %v61 = vld [vmem:[%s1 + $0x54] sm:$0xff]
  %v62 = vld [vmem:[%s1 + $0x5c] sm:$0xf]
  %v63 = vld [vmem:[%s1 + $0x60] sm:$0xff]
  %v64 = vld [vmem:[%s1 + $0x68] sm:$0xf]
  %v65 = vld [vmem:[%s1 + $0x6c] sm:$0xff]
  %v66 = vld [vmem:[%s1 + $0x74] sm:$0xf]
  %v67 = vld [vmem:[%s1 + $0x78] sm:$0xff]
  %v68 = vld [vmem:[%s1 + $0x80] sm:$0xf]
  %v69 = vld [vmem:[%s1 + $0x84] sm:$0xff]
  %v70 = vld [vmem:[%s1 + $0x8c] sm:$0xf]
  %v71 = vld [vmem:[%s1 + $0x90] sm:$0xff]
  %v72 = vld [vmem:[%s1 + $0x98] sm:$0xf]
  %v73 = vld [vmem:[%s1 + $0x9c] sm:$0xff]
  %v74 = vld [vmem:[%s1 + $0xa4] sm:$0xf]
  %v75 = vld [vmem:[%s1 + $0xa8] sm:$0xff]
  %v76 = vld [vmem:[%s1 + $0xb0] sm:$0xf]
  %v77 = vld [vmem:[%s1 + $0xb4] sm:$0xff]
  %v78 = vld [vmem:[%s1 + $0xbc] sm:$0xf]
  %v79 = vld [vmem:[%s3] sm:$0x7]
  %v81 = vperm.slane %v79, 0
  %v82 = vperm.slane %v79, 1
  %v83 = vperm.slane %v79, 2
  %v95 = vunpack.c.l.b16 %v39
  %v96 = vunpack.c.l.b16 %v40
  %v97 = vunpack.c.l.b16 %v41
  %v98 = vunpack.c.l.b16 %v42
  %v99 = vunpack.c.l.b16 %v43
  %v100 = vunpack.c.l.b16 %v44
  %v101 = vunpack.c.l.b16 %v45
  %v102 = vunpack.c.l.b16 %v46
  %v103 = vpack.c.b16 %v96, %v95
  %v104 = vpack.c.b16 %v98, %v97
  %v105 = vpack.c.b16 %v100, %v99
  %v106 = vpack.c.b16 %v102, %v101
  %v143 = vunpack.c.l.b16 %v47
  %v144 = vunpack.c.h.b16 %v47
  %v145 = vunpack.c.l.b16 %v48
  %v146 = vunpack.c.l.b16 %v49
  %v147 = vunpack.c.h.b16 %v49
  %v148 = vunpack.c.l.b16 %v50
  %v149 = vunpack.c.l.b16 %v51
  %v150 = vunpack.c.h.b16 %v51
  %v151 = vunpack.c.l.b16 %v52
  %v152 = vunpack.c.l.b16 %v53
  %v153 = vunpack.c.h.b16 %v53
  %v154 = vunpack.c.l.b16 %v54
  %v155 = vunpack.c.l.b16 %v55
  %v156 = vunpack.c.h.b16 %v55
  %v157 = vunpack.c.l.b16 %v56
  %v158 = vunpack.c.l.b16 %v57
  %v159 = vunpack.c.h.b16 %v57
  %v160 = vunpack.c.l.b16 %v58
  %v161 = vunpack.c.l.b16 %v59
  %v162 = vunpack.c.h.b16 %v59
  %v163 = vunpack.c.l.b16 %v60
  %v164 = vunpack.c.l.b16 %v61
  %v165 = vunpack.c.h.b16 %v61
  %v166 = vunpack.c.l.b16 %v62
  %v167 = vunpack.c.l.b16 %v63
  %v168 = vunpack.c.h.b16 %v63
  %v169 = vunpack.c.l.b16 %v64
  %v170 = vunpack.c.l.b16 %v65
  %v171 = vunpack.c.h.b16 %v65
  %v172 = vunpack.c.l.b16 %v66
  %v173 = vunpack.c.l.b16 %v67
  %v174 = vunpack.c.h.b16 %v67
  %v175 = vunpack.c.l.b16 %v68
  %v176 = vunpack.c.l.b16 %v69
  %v177 = vunpack.c.h.b16 %v69
  %v178 = vunpack.c.l.b16 %v70
  %v179 = vunpack.c.l.b16 %v71
  %v180 = vunpack.c.h.b16 %v71
  %v181 = vunpack.c.l.b16 %v72
  %v182 = vunpack.c.l.b16 %v73
  %v183 = vunpack.c.h.b16 %v73
  %v184 = vunpack.c.l.b16 %v74
  %v185 = vunpack.c.l.b16 %v75
  %v186 = vunpack.c.h.b16 %v75
  %v187 = vunpack.c.l.b16 %v76
  %v188 = vunpack.c.l.b16 %v77
  %v189 = vunpack.c.h.b16 %v77
  %v190 = vunpack.c.l.b16 %v78
  %v191 = vpack.c.b16 %v146, %v143
  %v192 = vpack.c.b16 %v147, %v144
  %v193 = vpack.c.b16 %v148, %v145
  %v194 = vpack.c.b16 %v152, %v149
  %v195 = vpack.c.b16 %v153, %v150
  %v196 = vpack.c.b16 %v154, %v151
  %v197 = vpack.c.b16 %v158, %v155
  %v198 = vpack.c.b16 %v159, %v156
  %v199 = vpack.c.b16 %v160, %v157
  %v200 = vpack.c.b16 %v164, %v161
  %v201 = vpack.c.b16 %v165, %v162
  %v202 = vpack.c.b16 %v166, %v163
  %v203 = vpack.c.b16 %v170, %v167
  %v204 = vpack.c.b16 %v171, %v168
  %v205 = vpack.c.b16 %v172, %v169
  %v206 = vpack.c.b16 %v176, %v173
  %v207 = vpack.c.b16 %v177, %v174
  %v208 = vpack.c.b16 %v178, %v175
  %v209 = vpack.c.b16 %v182, %v179
  %v210 = vpack.c.b16 %v183, %v180
  %v211 = vpack.c.b16 %v184, %v181
  %v212 = vpack.c.b16 %v188, %v185
  %v213 = vpack.c.b16 %v189, %v186
  %v214 = vpack.c.b16 %v190, %v187
  %239 = vmatpush.bf16.msra.mxu0 %v212
  %240 = vmatpush.bf16.msra.mxu0 %v209
  %241 = vmatpush.bf16.msra.mxu0 %v206
  %242 = vmatpush.bf16.msra.mxu0 %v203
  %243 = vmatpush.bf16.msra.mxu0 %v200
  %244 = vmatpush.bf16.msra.mxu0 %v197
  %245 = vmatpush.bf16.msra.mxu0 %v194
  %246 = vmatpush.bf16.msra.mxu0 %v191
  %247 = vmatmul.bf16.gmra.mxu0 %v103
  %v248 = vpop.f32.mrf.mxu0
  %v249 = vadd.f32 %v81, %v248
  %v250 = vpop.f32.mrf.mxu0
  %v251 = vadd.f32 %v81, %v250
  %252 = vmatmul.bf16.gmra.mxu0 %v104
  %v253 = vpop.f32.mrf.mxu0
  %v254 = vadd.f32 %v81, %v253
  %v255 = vpop.f32.mrf.mxu0
  %v256 = vadd.f32 %v81, %v255
  %257 = vmatmul.bf16.gmra.mxu0 %v105
  %v258 = vpop.f32.mrf.mxu0
  %v259 = vadd.f32 %v81, %v258
  %v260 = vpop.f32.mrf.mxu0
  %v261 = vadd.f32 %v81, %v260
  %262 = vmatmul.bf16.gmra.mxu0 %v106
  %v263 = vpop.f32.mrf.mxu0
  %v264 = vadd.f32 %v81, %v263
  %v265 = vpop.f32.mrf.mxu0
  %v266 = vadd.f32 %v81, %v265
  %267 = vdwg.mxu0
  %268 = vmatpush.bf16.msra.mxu0 %v213
  %269 = vmatpush.bf16.msra.mxu0 %v210
  %270 = vmatpush.bf16.msra.mxu0 %v207
  %271 = vmatpush.bf16.msra.mxu0 %v204
  %272 = vmatpush.bf16.msra.mxu0 %v201
  %273 = vmatpush.bf16.msra.mxu0 %v198
  %274 = vmatpush.bf16.msra.mxu0 %v195
  %275 = vmatpush.bf16.msra.mxu0 %v192
  %276 = vmatmul.bf16.gmra.mxu0 %v103
  %v277 = vpop.f32.mrf.mxu0
  %v278 = vadd.f32 %v82, %v277
  %v279 = vpop.f32.mrf.mxu0
  %v280 = vadd.f32 %v82, %v279
  %281 = vmatmul.bf16.gmra.mxu0 %v104
  %v282 = vpop.f32.mrf.mxu0
  %v283 = vadd.f32 %v82, %v282
  %v284 = vpop.f32.mrf.mxu0
  %v285 = vadd.f32 %v82, %v284
  %286 = vmatmul.bf16.gmra.mxu0 %v105
  %v287 = vpop.f32.mrf.mxu0
  %v288 = vadd.f32 %v82, %v287
  %v289 = vpop.f32.mrf.mxu0
  %v290 = vadd.f32 %v82, %v289
  %291 = vmatmul.bf16.gmra.mxu0 %v106
  %v292 = vpop.f32.mrf.mxu0
  %v293 = vadd.f32 %v82, %v292
  %v294 = vpop.f32.mrf.mxu0
  %v295 = vadd.f32 %v82, %v294
  %296 = vdwg.mxu0
  %297 = vmatpush.bf16.msra.mxu0 %v214
  %298 = vmatpush.bf16.msra.mxu0 %v211
  %299 = vmatpush.bf16.msra.mxu0 %v208
  %300 = vmatpush.bf16.msra.mxu0 %v205
  %301 = vmatpush.bf16.msra.mxu0 %v202
  %302 = vmatpush.bf16.msra.mxu0 %v199
  %303 = vmatpush.bf16.msra.mxu0 %v196
  %304 = vmatpush.bf16.msra.mxu0 %v193
  %305 = vmatmul.bf16.gmra.mxu0 %v103
  %v306 = vpop.f32.mrf.mxu0
  %v307 = vadd.f32 %v83, %v306
  %v308 = vpop.f32.mrf.mxu0
  %v309 = vadd.f32 %v83, %v308
  %310 = vmatmul.bf16.gmra.mxu0 %v104
  %v311 = vpop.f32.mrf.mxu0
  %v312 = vadd.f32 %v83, %v311
  %v313 = vpop.f32.mrf.mxu0
  %v314 = vadd.f32 %v83, %v313
  %315 = vmatmul.bf16.gmra.mxu0 %v105
  %v316 = vpop.f32.mrf.mxu0
  %v317 = vadd.f32 %v83, %v316
  %v318 = vpop.f32.mrf.mxu0
  %v319 = vadd.f32 %v83, %v318
  %320 = vmatmul.bf16.gmra.mxu0 %v106
  %v321 = vpop.f32.mrf.mxu0
  %v322 = vadd.f32 %v83, %v321
  %v323 = vpop.f32.mrf.mxu0
  %v324 = vadd.f32 %v83, %v323
  %325 = vdwg.mxu0
  %326 = vst [vmem:[#allocation2] sm:$0xff] %v249
  %327 = vst [vmem:[#allocation2 + $0x8] sm:$0xff] %v278
  %328 = vst [vmem:[#allocation2 + $0x10] sm:$0xff] %v307
  %329 = vst [vmem:[#allocation2 + $0x18] sm:$0xff] %v251
  %330 = vst [vmem:[#allocation2 + $0x20] sm:$0xff] %v280
  %331 = vst [vmem:[#allocation2 + $0x28] sm:$0xff] %v309
  %332 = vst [vmem:[#allocation2 + $0x30] sm:$0xff] %v254
  %333 = vst [vmem:[#allocation2 + $0x38] sm:$0xff] %v283
  %334 = vst [vmem:[#allocation2 + $0x40] sm:$0xff] %v312
  %335 = vst [vmem:[#allocation2 + $0x48] sm:$0xff] %v256
  %336 = vst [vmem:[#allocation2 + $0x50] sm:$0xff] %v285
  %337 = vst [vmem:[#allocation2 + $0x58] sm:$0xff] %v314
  %338 = vst [vmem:[#allocation2 + $0x60] sm:$0xff] %v259
  %339 = vst [vmem:[#allocation2 + $0x68] sm:$0xff] %v288
  %340 = vst [vmem:[#allocation2 + $0x70] sm:$0xff] %v317
  %341 = vst [vmem:[#allocation2 + $0x78] sm:$0xff] %v261
  %342 = vst [vmem:[#allocation2 + $0x80] sm:$0xff] %v290
  %343 = vst [vmem:[#allocation2 + $0x88] sm:$0xff] %v319
  %344 = vst [vmem:[#allocation2 + $0x90] sm:$0xff] %v264
  %345 = vst [vmem:[#allocation2 + $0x98] sm:$0xff] %v293
  %346 = vst [vmem:[#allocation2 + $0xa0] sm:$0xff] %v322
  %347 = vst [vmem:[#allocation2 + $0xa8] sm:$0xff] %v266
  %348 = vst [vmem:[#allocation2 + $0xb0] sm:$0xff] %v295
  %349 = vst [vmem:[#allocation2 + $0xb8] sm:$0xff] %v324
  %v350 = vld [vmem:[%s4] sm:$0x7]
  %v352 = vperm.slane %v350, 0
  %v353 = vperm.slane %v350, 1
  %v354 = vperm.slane %v350, 2
  %v358 = vld [vmem:[#allocation2] sm:$0xff]
  %v359 = vld [vmem:[#allocation2 + $0x8] sm:$0xff]
  %v360 = vld [vmem:[#allocation2 + $0x10] sm:$0xff]
  %v361 = vld [vmem:[%s2] sm:$0xff]
  %v362 = vld [vmem:[%s2 + $0x8] sm:$0xf]
  %v363 = vld [vmem:[%s2 + $0xc] sm:$0xff]
  %v364 = vld [vmem:[%s2 + $0x14] sm:$0xf]
  %v365 = vld [vmem:[%s2 + $0x18] sm:$0xff]
  %v366 = vld [vmem:[%s2 + $0x20] sm:$0xf]
  %v367 = vld [vmem:[%s2 + $0x24] sm:$0xff]
  %v368 = vld [vmem:[%s2 + $0x2c] sm:$0xf]
  %v369 = vld [vmem:[%s2 + $0x30] sm:$0xff]
  %v370 = vld [vmem:[%s2 + $0x38] sm:$0xf]
  %v371 = vld [vmem:[%s2 + $0x3c] sm:$0xff]
  %v372 = vld [vmem:[%s2 + $0x44] sm:$0xf]
  %v373 = vld [vmem:[%s2 + $0x48] sm:$0xff]
  %v374 = vld [vmem:[%s2 + $0x50] sm:$0xf]
  %v375 = vld [vmem:[%s2 + $0x54] sm:$0xff]
  %v376 = vld [vmem:[%s2 + $0x5c] sm:$0xf]
  %v377 = vld [vmem:[%s2 + $0x60] sm:$0xff]
  %v378 = vld [vmem:[%s2 + $0x68] sm:$0xf]
  %v379 = vld [vmem:[%s2 + $0x6c] sm:$0xff]
  %v380 = vld [vmem:[%s2 + $0x74] sm:$0xf]
  %v381 = vld [vmem:[%s2 + $0x78] sm:$0xff]
  %v382 = vld [vmem:[%s2 + $0x80] sm:$0xf]
  %v383 = vld [vmem:[%s2 + $0x84] sm:$0xff]
  %v384 = vld [vmem:[%s2 + $0x8c] sm:$0xf]
  %v385 = vld [vmem:[%s2 + $0x90] sm:$0xff]
  %v386 = vld [vmem:[%s2 + $0x98] sm:$0xf]
  %v387 = vld [vmem:[%s2 + $0x9c] sm:$0xff]
  %v388 = vld [vmem:[%s2 + $0xa4] sm:$0xf]
  %v389 = vld [vmem:[%s2 + $0xa8] sm:$0xff]
  %v390 = vld [vmem:[%s2 + $0xb0] sm:$0xf]
  %v391 = vld [vmem:[%s2 + $0xb4] sm:$0xff]
  %v392 = vld [vmem:[%s2 + $0xbc] sm:$0xf]
  %v425 = vunpack.c.l.b16 %v361
  %v426 = vunpack.c.h.b16 %v361
  %v427 = vunpack.c.l.b16 %v362
  %v428 = vunpack.c.l.b16 %v363
  %v429 = vunpack.c.h.b16 %v363
  %v430 = vunpack.c.l.b16 %v364
  %v431 = vunpack.c.l.b16 %v365
  %v432 = vunpack.c.h.b16 %v365
  %v433 = vunpack.c.l.b16 %v366
  %v434 = vunpack.c.l.b16 %v367
  %v435 = vunpack.c.h.b16 %v367
  %v436 = vunpack.c.l.b16 %v368
  %v437 = vunpack.c.l.b16 %v369
  %v438 = vunpack.c.h.b16 %v369
  %v439 = vunpack.c.l.b16 %v370
  %v440 = vunpack.c.l.b16 %v371
  %v441 = vunpack.c.h.b16 %v371
  %v442 = vunpack.c.l.b16 %v372
  %v443 = vunpack.c.l.b16 %v373
  %v444 = vunpack.c.h.b16 %v373
  %v445 = vunpack.c.l.b16 %v374
  %v446 = vunpack.c.l.b16 %v375
  %v447 = vunpack.c.h.b16 %v375
  %v448 = vunpack.c.l.b16 %v376
  %v449 = vunpack.c.l.b16 %v377
  %v450 = vunpack.c.h.b16 %v377
  %v451 = vunpack.c.l.b16 %v378
  %v452 = vunpack.c.l.b16 %v379
  %v453 = vunpack.c.h.b16 %v379
  %v454 = vunpack.c.l.b16 %v380
  %v455 = vunpack.c.l.b16 %v381
  %v456 = vunpack.c.h.b16 %v381
  %v457 = vunpack.c.l.b16 %v382
  %v458 = vunpack.c.l.b16 %v383
  %v459 = vunpack.c.h.b16 %v383
  %v460 = vunpack.c.l.b16 %v384
  %v461 = vunpack.c.l.b16 %v385
  %v462 = vunpack.c.h.b16 %v385
  %v463 = vunpack.c.l.b16 %v386
  %v464 = vunpack.c.l.b16 %v387
  %v465 = vunpack.c.h.b16 %v387
  %v466 = vunpack.c.l.b16 %v388
  %v467 = vunpack.c.l.b16 %v389
  %v468 = vunpack.c.h.b16 %v389
  %v469 = vunpack.c.l.b16 %v390
  %v470 = vunpack.c.l.b16 %v391
  %v471 = vunpack.c.h.b16 %v391
  %v472 = vunpack.c.l.b16 %v392
  %v473 = vpack.c.b16 %v428, %v425
  %v474 = vpack.c.b16 %v429, %v426
  %v475 = vpack.c.b16 %v430, %v427
  %v476 = vpack.c.b16 %v434, %v431
  %v477 = vpack.c.b16 %v435, %v432
  %v478 = vpack.c.b16 %v436, %v433
  %v479 = vpack.c.b16 %v440, %v437
  %v480 = vpack.c.b16 %v441, %v438
  %v481 = vpack.c.b16 %v442, %v439
  %v482 = vpack.c.b16 %v446, %v443
  %v483 = vpack.c.b16 %v447, %v444
  %v484 = vpack.c.b16 %v448, %v445
  %v485 = vpack.c.b16 %v452, %v449
  %v486 = vpack.c.b16 %v453, %v450
  %v487 = vpack.c.b16 %v454, %v451
  %v488 = vpack.c.b16 %v458, %v455
  %v489 = vpack.c.b16 %v459, %v456
  %v490 = vpack.c.b16 %v460, %v457
  %v491 = vpack.c.b16 %v464, %v461
  %v492 = vpack.c.b16 %v465, %v462
  %v493 = vpack.c.b16 %v466, %v463
  %v494 = vpack.c.b16 %v470, %v467
  %v495 = vpack.c.b16 %v471, %v468
  %v496 = vpack.c.b16 %v472, %v469
  %521 = vmatpush.bf16.msra.mxu0 %v494
  %522 = vmatpush.bf16.msra.mxu0 %v491
  %523 = vmatpush.bf16.msra.mxu0 %v488
  %524 = vmatpush.bf16.msra.mxu0 %v485
  %525 = vmatpush.bf16.msra.mxu0 %v482
  %526 = vmatpush.bf16.msra.mxu0 %v479
  %527 = vmatpush.bf16.msra.mxu0 %v476
  %528 = vmatpush.bf16.msra.mxu0 %v473
  %529 = vmatmul.bf16.gmra.mxu0 0
  %v530 = vpop.f32.mrf.mxu0
  %v531 = vadd.f32 %v352, %v530
  %v532 = vpop.f32.mrf.mxu0
  %533 = vdwg.mxu0
  %534 = vmatpush.bf16.msra.mxu0 %v495
  %535 = vmatpush.bf16.msra.mxu0 %v492
  %536 = vmatpush.bf16.msra.mxu0 %v489
  %537 = vmatpush.bf16.msra.mxu0 %v486
  %538 = vmatpush.bf16.msra.mxu0 %v483
  %539 = vmatpush.bf16.msra.mxu0 %v480
  %540 = vmatpush.bf16.msra.mxu0 %v477
  %541 = vmatpush.bf16.msra.mxu0 %v474
  %542 = vmatmul.bf16.gmra.mxu0 0
  %v543 = vpop.f32.mrf.mxu0
  %v544 = vadd.f32 %v353, %v543
  %v545 = vpop.f32.mrf.mxu0
  %546 = vdwg.mxu0
  %547 = vmatpush.bf16.msra.mxu0 %v496
  %548 = vmatpush.bf16.msra.mxu0 %v493
  %549 = vmatpush.bf16.msra.mxu0 %v490
  %550 = vmatpush.bf16.msra.mxu0 %v487
  %551 = vmatpush.bf16.msra.mxu0 %v484
  %552 = vmatpush.bf16.msra.mxu0 %v481
  %553 = vmatpush.bf16.msra.mxu0 %v478
  %554 = vmatpush.bf16.msra.mxu0 %v475
  %555 = vmatmul.bf16.gmra.mxu0 0
  %v556 = vpop.f32.mrf.mxu0
  %v557 = vadd.f32 %v354, %v556
  %v558 = vpop.f32.mrf.mxu0
  %559 = vdwg.mxu0
  %v560 = vadd.f32 %v358, %v531
  %v561 = vxor.u32 %v560, 2147483648
  %v562 = vmul.f32 %v561, 1.442695
  %v563 = vpow.pop %v562
  %v564 = vadd.f32 %v563, 1.0
  %v565 = vrcp.pop %v564
  %v566 = vmul.f32 %v564, %v565
  %v567 = vsub.f32 1.0, %v566
  %v568 = vmul.f32 %v565, %v567
  %v569 = vadd.f32 %v565, %v568
  %vm570 = vweird.f32 %v564
  %vm571 = vweird.f32 %v565
  %vm572 = vmor %vm570, %vm571
  %v573 = vsel %vm572, %v565, %v569
  %v574 = vand.u32 2147483647, %v564
  %vm575 = vcmp.eq.f32.partialorder %v574, 8.507059e+37
  %v576 = vand.u32 %v564, 2147483648
  %v577 = vor.u32 1.1754944e-38, %v576
  %v578 = vsel %vm575, %v577, %v573
  %v579 = vmul.f32 1.0, %v578
  %v580 = vadd.f32 %v359, %v544
  %v581 = vxor.u32 %v580, 2147483648
  %v582 = vmul.f32 %v581, 1.442695
  %v583 = vpow.pop %v582
  %v584 = vadd.f32 %v583, 1.0
  %v585 = vrcp.pop %v584
  %v586 = vmul.f32 %v584, %v585
  %v587 = vsub.f32 1.0, %v586
  %v588 = vmul.f32 %v585, %v587
  %v589 = vadd.f32 %v585, %v588
  %vm590 = vweird.f32 %v584
  %vm591 = vweird.f32 %v585
  %vm592 = vmor %vm590, %vm591
  %v593 = vsel %vm592, %v585, %v589
  %v594 = vand.u32 2147483647, %v584
  %vm595 = vcmp.eq.f32.partialorder %v594, 8.507059e+37
  %v596 = vand.u32 %v584, 2147483648
  %v597 = vor.u32 1.1754944e-38, %v596
  %v598 = vsel %vm595, %v597, %v593
  %v599 = vmul.f32 1.0, %v598
  %v600 = vmul.f32 %v579, %v557
  %v601 = vadd.f32 %v360, %v600
  %v602 = vtanh.pop %v601
  %v603 = vsub.f32 0.0, %v602
  %v604 = vmul.f32 %v599, %v603
  %v605 = vadd.f32 %v602, %v604
  %v606 = vpack.c.bf16 %v605, %v605
  %607 = vst [vmem:[#allocation3] sm:$0xf] %v606
  %s608 = scalar_lea.vmem [#allocation2], 24
  %v609 = vld [vmem:[%s608] sm:$0xff]
  %v610 = vld [vmem:[%s608 + $0x8] sm:$0xff]
  %v611 = vld [vmem:[%s608 + $0x10] sm:$0xff]
  %v612 = vld [vmem:[%s2] sm:$0xff]
  %v613 = vld [vmem:[%s2 + $0x8] sm:$0xf]
  %v614 = vld [vmem:[%s2 + $0xc] sm:$0xff]
  %v615 = vld [vmem:[%s2 + $0x14] sm:$0xf]
  %v616 = vld [vmem:[%s2 + $0x18] sm:$0xff]
  %v617 = vld [vmem:[%s2 + $0x20] sm:$0xf]
  %v618 = vld [vmem:[%s2 + $0x24] sm:$0xff]
  %v619 = vld [vmem:[%s2 + $0x2c] sm:$0xf]
  %v620 = vld [vmem:[%s2 + $0x30] sm:$0xff]
  %v621 = vld [vmem:[%s2 + $0x38] sm:$0xf]
  %v622 = vld [vmem:[%s2 + $0x3c] sm:$0xff]
  %v623 = vld [vmem:[%s2 + $0x44] sm:$0xf]
  %v624 = vld [vmem:[%s2 + $0x48] sm:$0xff]
  %v625 = vld [vmem:[%s2 + $0x50] sm:$0xf]
  %v626 = vld [vmem:[%s2 + $0x54] sm:$0xff]
  %v627 = vld [vmem:[%s2 + $0x5c] sm:$0xf]
  %v628 = vld [vmem:[%s2 + $0x60] sm:$0xff]
  %v629 = vld [vmem:[%s2 + $0x68] sm:$0xf]
  %v630 = vld [vmem:[%s2 + $0x6c] sm:$0xff]
  %v631 = vld [vmem:[%s2 + $0x74] sm:$0xf]
  %v632 = vld [vmem:[%s2 + $0x78] sm:$0xff]
  %v633 = vld [vmem:[%s2 + $0x80] sm:$0xf]
  %v634 = vld [vmem:[%s2 + $0x84] sm:$0xff]
  %v635 = vld [vmem:[%s2 + $0x8c] sm:$0xf]
  %v636 = vld [vmem:[%s2 + $0x90] sm:$0xff]
  %v637 = vld [vmem:[%s2 + $0x98] sm:$0xf]
  %v638 = vld [vmem:[%s2 + $0x9c] sm:$0xff]
  %v639 = vld [vmem:[%s2 + $0xa4] sm:$0xf]
  %v640 = vld [vmem:[%s2 + $0xa8] sm:$0xff]
  %v641 = vld [vmem:[%s2 + $0xb0] sm:$0xf]
  %v642 = vld [vmem:[%s2 + $0xb4] sm:$0xff]
  %v643 = vld [vmem:[%s2 + $0xbc] sm:$0xf]
  %v676 = vunpack.c.l.b16 %v612
  %v677 = vunpack.c.h.b16 %v612
  %v678 = vunpack.c.l.b16 %v613
  %v679 = vunpack.c.l.b16 %v614
  %v680 = vunpack.c.h.b16 %v614
  %v681 = vunpack.c.l.b16 %v615
  %v682 = vunpack.c.l.b16 %v616
  %v683 = vunpack.c.h.b16 %v616
  %v684 = vunpack.c.l.b16 %v617
  %v685 = vunpack.c.l.b16 %v618
  %v686 = vunpack.c.h.b16 %v618
  %v687 = vunpack.c.l.b16 %v619
  %v688 = vunpack.c.l.b16 %v620
  %v689 = vunpack.c.h.b16 %v620
  %v690 = vunpack.c.l.b16 %v621
  %v691 = vunpack.c.l.b16 %v622
  %v692 = vunpack.c.h.b16 %v622
  %v693 = vunpack.c.l.b16 %v623
  %v694 = vunpack.c.l.b16 %v624
  %v695 = vunpack.c.h.b16 %v624
  %v696 = vunpack.c.l.b16 %v625
  %v697 = vunpack.c.l.b16 %v626
  %v698 = vunpack.c.h.b16 %v626
  %v699 = vunpack.c.l.b16 %v627
  %v700 = vunpack.c.l.b16 %v628
  %v701 = vunpack.c.h.b16 %v628
  %v702 = vunpack.c.l.b16 %v629
  %v703 = vunpack.c.l.b16 %v630
  %v704 = vunpack.c.h.b16 %v630
  %v705 = vunpack.c.l.b16 %v631
  %v706 = vunpack.c.l.b16 %v632
  %v707 = vunpack.c.h.b16 %v632
  %v708 = vunpack.c.l.b16 %v633
  %v709 = vunpack.c.l.b16 %v634
  %v710 = vunpack.c.h.b16 %v634
  %v711 = vunpack.c.l.b16 %v635
  %v712 = vunpack.c.l.b16 %v636
  %v713 = vunpack.c.h.b16 %v636
  %v714 = vunpack.c.l.b16 %v637
  %v715 = vunpack.c.l.b16 %v638
  %v716 = vunpack.c.h.b16 %v638
  %v717 = vunpack.c.l.b16 %v639
  %v718 = vunpack.c.l.b16 %v640
  %v719 = vunpack.c.h.b16 %v640
  %v720 = vunpack.c.l.b16 %v641
  %v721 = vunpack.c.l.b16 %v642
  %v722 = vunpack.c.h.b16 %v642
  %v723 = vunpack.c.l.b16 %v643
  %v724 = vpack.c.b16 %v679, %v676
  %v725 = vpack.c.b16 %v680, %v677
  %v726 = vpack.c.b16 %v681, %v678
  %v727 = vpack.c.b16 %v685, %v682
  %v728 = vpack.c.b16 %v686, %v683
  %v729 = vpack.c.b16 %v687, %v684
  %v730 = vpack.c.b16 %v691, %v688
  %v731 = vpack.c.b16 %v692, %v689
  %v732 = vpack.c.b16 %v693, %v690
  %v733 = vpack.c.b16 %v697, %v694
  %v734 = vpack.c.b16 %v698, %v695
  %v735 = vpack.c.b16 %v699, %v696
  %v736 = vpack.c.b16 %v703, %v700
  %v737 = vpack.c.b16 %v704, %v701
  %v738 = vpack.c.b16 %v705, %v702
  %v739 = vpack.c.b16 %v709, %v706
  %v740 = vpack.c.b16 %v710, %v707
  %v741 = vpack.c.b16 %v711, %v708
  %v742 = vpack.c.b16 %v715, %v712
  %v743 = vpack.c.b16 %v716, %v713
  %v744 = vpack.c.b16 %v717, %v714
  %v745 = vpack.c.b16 %v721, %v718
  %v746 = vpack.c.b16 %v722, %v719
  %v747 = vpack.c.b16 %v723, %v720
  %772 = vmatpush.bf16.msra.mxu0 %v745
  %773 = vmatpush.bf16.msra.mxu0 %v742
  %774 = vmatpush.bf16.msra.mxu0 %v739
  %775 = vmatpush.bf16.msra.mxu0 %v736
  %776 = vmatpush.bf16.msra.mxu0 %v733
  %777 = vmatpush.bf16.msra.mxu0 %v730
  %778 = vmatpush.bf16.msra.mxu0 %v727
  %779 = vmatpush.bf16.msra.mxu0 %v724
  %780 = vmatmul.bf16.gmra.mxu0 %v606
  %v781 = vpop.f32.mrf.mxu0
  %v782 = vadd.f32 %v352, %v781
  %v783 = vpop.f32.mrf.mxu0
  %784 = vdwg.mxu0
  %785 = vmatpush.bf16.msra.mxu0 %v746
  %786 = vmatpush.bf16.msra.mxu0 %v743
  %787 = vmatpush.bf16.msra.mxu0 %v740
  %788 = vmatpush.bf16.msra.mxu0 %v737
  %789 = vmatpush.bf16.msra.mxu0 %v734
  %790 = vmatpush.bf16.msra.mxu0 %v731
  %791 = vmatpush.bf16.msra.mxu0 %v728
  %792 = vmatpush.bf16.msra.mxu0 %v725
  %793 = vmatmul.bf16.gmra.mxu0 %v606
  %v794 = vpop.f32.mrf.mxu0
  %v795 = vadd.f32 %v353, %v794
  %v796 = vpop.f32.mrf.mxu0
  %797 = vdwg.mxu0
  %798 = vmatpush.bf16.msra.mxu0 %v747
  %799 = vmatpush.bf16.msra.mxu0 %v744
  %800 = vmatpush.bf16.msra.mxu0 %v741
  %801 = vmatpush.bf16.msra.mxu0 %v738
  %802 = vmatpush.bf16.msra.mxu0 %v735
  %803 = vmatpush.bf16.msra.mxu0 %v732
  %804 = vmatpush.bf16.msra.mxu0 %v729
  %805 = vmatpush.bf16.msra.mxu0 %v726
  %806 = vmatmul.bf16.gmra.mxu0 %v606
  %v807 = vpop.f32.mrf.mxu0
  %v808 = vadd.f32 %v354, %v807
  %v809 = vpop.f32.mrf.mxu0
  %810 = vdwg.mxu0
  %v811 = vadd.f32 %v609, %v782
  %v812 = vxor.u32 %v811, 2147483648
  %v813 = vmul.f32 %v812, 1.442695
  %v814 = vpow.pop %v813
  %v815 = vadd.f32 %v814, 1.0
  %v816 = vrcp.pop %v815
  %v817 = vmul.f32 %v815, %v816
  %v818 = vsub.f32 1.0, %v817
  %v819 = vmul.f32 %v816, %v818
  %v820 = vadd.f32 %v816, %v819
  %vm821 = vweird.f32 %v815
  %vm822 = vweird.f32 %v816
  %vm823 = vmor %vm821, %vm822
  %v824 = vsel %vm823, %v816, %v820
  %v825 = vand.u32 2147483647, %v815
  %vm826 = vcmp.eq.f32.partialorder %v825, 8.507059e+37
  %v827 = vand.u32 %v815, 2147483648
  %v828 = vor.u32 1.1754944e-38, %v827
  %v829 = vsel %vm826, %v828, %v824
  %v830 = vmul.f32 1.0, %v829
  %v831 = vadd.f32 %v610, %v795
  %v832 = vxor.u32 %v831, 2147483648
  %v833 = vmul.f32 %v832, 1.442695
  %v834 = vpow.pop %v833
  %v835 = vadd.f32 %v834, 1.0
  %v836 = vrcp.pop %v835
  %v837 = vmul.f32 %v835, %v836
  %v838 = vsub.f32 1.0, %v837
  %v839 = vmul.f32 %v836, %v838
  %v840 = vadd.f32 %v836, %v839
  %vm841 = vweird.f32 %v835
  %vm842 = vweird.f32 %v836
  %vm843 = vmor %vm841, %vm842
  %v844 = vsel %vm843, %v836, %v840
  %v845 = vand.u32 2147483647, %v835
  %vm846 = vcmp.eq.f32.partialorder %v845, 8.507059e+37
  %v847 = vand.u32 %v835, 2147483648
  %v848 = vor.u32 1.1754944e-38, %v847
  %v849 = vsel %vm846, %v848, %v844
  %v850 = vmul.f32 1.0, %v849
  %v851 = vmul.f32 %v830, %v808
  %v852 = vadd.f32 %v611, %v851
  %v853 = vtanh.pop %v852
  %v854 = vsub.f32 %v605, %v853
  %v855 = vmul.f32 %v850, %v854
  %v856 = vadd.f32 %v853, %v855
  %v857 = vpack.c.bf16 %v856, %v856
  %s858 = scalar_lea.vmem [#allocation3], 4
  %859 = vst [vmem:[%s858] sm:$0xf] %v857
  %s860 = scalar_lea.vmem [#allocation2], 48
  %v861 = vld [vmem:[%s860] sm:$0xff]
  %v862 = vld [vmem:[%s860 + $0x8] sm:$0xff]
  %v863 = vld [vmem:[%s860 + $0x10] sm:$0xff]
  %v864 = vld [vmem:[%s2] sm:$0xff]
  %v865 = vld [vmem:[%s2 + $0x8] sm:$0xf]
  %v866 = vld [vmem:[%s2 + $0xc] sm:$0xff]
  %v867 = vld [vmem:[%s2 + $0x14] sm:$0xf]
  %v868 = vld [vmem:[%s2 + $0x18] sm:$0xff]
  %v869 = vld [vmem:[%s2 + $0x20] sm:$0xf]
  %v870 = vld [vmem:[%s2 + $0x24] sm:$0xff]
  %v871 = vld [vmem:[%s2 + $0x2c] sm:$0xf]
  %v872 = vld [vmem:[%s2 + $0x30] sm:$0xff]
  %v873 = vld [vmem:[%s2 + $0x38] sm:$0xf]
  %v874 = vld [vmem:[%s2 + $0x3c] sm:$0xff]
  %v875 = vld [vmem:[%s2 + $0x44] sm:$0xf]
  %v876 = vld [vmem:[%s2 + $0x48] sm:$0xff]
  %v877 = vld [vmem:[%s2 + $0x50] sm:$0xf]
  %v878 = vld [vmem:[%s2 + $0x54] sm:$0xff]
  %v879 = vld [vmem:[%s2 + $0x5c] sm:$0xf]
  %v880 = vld [vmem:[%s2 + $0x60] sm:$0xff]
  %v881 = vld [vmem:[%s2 + $0x68] sm:$0xf]
  %v882 = vld [vmem:[%s2 + $0x6c] sm:$0xff]
  %v883 = vld [vmem:[%s2 + $0x74] sm:$0xf]
  %v884 = vld [vmem:[%s2 + $0x78] sm:$0xff]
  %v885 = vld [vmem:[%s2 + $0x80] sm:$0xf]
  %v886 = vld [vmem:[%s2 + $0x84] sm:$0xff]
  %v887 = vld [vmem:[%s2 + $0x8c] sm:$0xf]
  %v888 = vld [vmem:[%s2 + $0x90] sm:$0xff]
  %v889 = vld [vmem:[%s2 + $0x98] sm:$0xf]
  %v890 = vld [vmem:[%s2 + $0x9c] sm:$0xff]
  %v891 = vld [vmem:[%s2 + $0xa4] sm:$0xf]
  %v892 = vld [vmem:[%s2 + $0xa8] sm:$0xff]
  %v893 = vld [vmem:[%s2 + $0xb0] sm:$0xf]
  %v894 = vld [vmem:[%s2 + $0xb4] sm:$0xff]
  %v895 = vld [vmem:[%s2 + $0xbc] sm:$0xf]
  %v928 = vunpack.c.l.b16 %v864
  %v929 = vunpack.c.h.b16 %v864
  %v930 = vunpack.c.l.b16 %v865
  %v931 = vunpack.c.l.b16 %v866
  %v932 = vunpack.c.h.b16 %v866
  %v933 = vunpack.c.l.b16 %v867
  %v934 = vunpack.c.l.b16 %v868
  %v935 = vunpack.c.h.b16 %v868
  %v936 = vunpack.c.l.b16 %v869
  %v937 = vunpack.c.l.b16 %v870
  %v938 = vunpack.c.h.b16 %v870
  %v939 = vunpack.c.l.b16 %v871
  %v940 = vunpack.c.l.b16 %v872
  %v941 = vunpack.c.h.b16 %v872
  %v942 = vunpack.c.l.b16 %v873
  %v943 = vunpack.c.l.b16 %v874
  %v944 = vunpack.c.h.b16 %v874
  %v945 = vunpack.c.l.b16 %v875
  %v946 = vunpack.c.l.b16 %v876
  %v947 = vunpack.c.h.b16 %v876
  %v948 = vunpack.c.l.b16 %v877
  %v949 = vunpack.c.l.b16 %v878
  %v950 = vunpack.c.h.b16 %v878
  %v951 = vunpack.c.l.b16 %v879
  %v952 = vunpack.c.l.b16 %v880
  %v953 = vunpack.c.h.b16 %v880
  %v954 = vunpack.c.l.b16 %v881
  %v955 = vunpack.c.l.b16 %v882
  %v956 = vunpack.c.h.b16 %v882
  %v957 = vunpack.c.l.b16 %v883
  %v958 = vunpack.c.l.b16 %v884
  %v959 = vunpack.c.h.b16 %v884
  %v960 = vunpack.c.l.b16 %v885
  %v961 = vunpack.c.l.b16 %v886
  %v962 = vunpack.c.h.b16 %v886
  %v963 = vunpack.c.l.b16 %v887
  %v964 = vunpack.c.l.b16 %v888
  %v965 = vunpack.c.h.b16 %v888
  %v966 = vunpack.c.l.b16 %v889
  %v967 = vunpack.c.l.b16 %v890
  %v968 = vunpack.c.h.b16 %v890
  %v969 = vunpack.c.l.b16 %v891
  %v970 = vunpack.c.l.b16 %v892
  %v971 = vunpack.c.h.b16 %v892
  %v972 = vunpack.c.l.b16 %v893
  %v973 = vunpack.c.l.b16 %v894
  %v974 = vunpack.c.h.b16 %v894
  %v975 = vunpack.c.l.b16 %v895
  %v976 = vpack.c.b16 %v931, %v928
  %v977 = vpack.c.b16 %v932, %v929
  %v978 = vpack.c.b16 %v933, %v930
  %v979 = vpack.c.b16 %v937, %v934
  %v980 = vpack.c.b16 %v938, %v935
  %v981 = vpack.c.b16 %v939, %v936
  %v982 = vpack.c.b16 %v943, %v940
  %v983 = vpack.c.b16 %v944, %v941
  %v984 = vpack.c.b16 %v945, %v942
  %v985 = vpack.c.b16 %v949, %v946
  %v986 = vpack.c.b16 %v950, %v947
  %v987 = vpack.c.b16 %v951, %v948
  %v988 = vpack.c.b16 %v955, %v952
  %v989 = vpack.c.b16 %v956, %v953
  %v990 = vpack.c.b16 %v957, %v954
  %v991 = vpack.c.b16 %v961, %v958
  %v992 = vpack.c.b16 %v962, %v959
  %v993 = vpack.c.b16 %v963, %v960
  %v994 = vpack.c.b16 %v967, %v964
  %v995 = vpack.c.b16 %v968, %v965
  %v996 = vpack.c.b16 %v969, %v966
  %v997 = vpack.c.b16 %v973, %v970
  %v998 = vpack.c.b16 %v974, %v971
  %v999 = vpack.c.b16 %v975, %v972
  %1024 = vmatpush.bf16.msra.mxu0 %v997
  %1025 = vmatpush.bf16.msra.mxu0 %v994
  %1026 = vmatpush.bf16.msra.mxu0 %v991
  %1027 = vmatpush.bf16.msra.mxu0 %v988
  %1028 = vmatpush.bf16.msra.mxu0 %v985
  %1029 = vmatpush.bf16.msra.mxu0 %v982
  %1030 = vmatpush.bf16.msra.mxu0 %v979
  %1031 = vmatpush.bf16.msra.mxu0 %v976
  %1032 = vmatmul.bf16.gmra.mxu0 %v857
  %v1033 = vpop.f32.mrf.mxu0
  %v1034 = vadd.f32 %v352, %v1033
  %v1035 = vpop.f32.mrf.mxu0
  %1036 = vdwg.mxu0
  %1037 = vmatpush.bf16.msra.mxu0 %v998
  %1038 = vmatpush.bf16.msra.mxu0 %v995
  %1039 = vmatpush.bf16.msra.mxu0 %v992
  %1040 = vmatpush.bf16.msra.mxu0 %v989
  %1041 = vmatpush.bf16.msra.mxu0 %v986
  %1042 = vmatpush.bf16.msra.mxu0 %v983
  %1043 = vmatpush.bf16.msra.mxu0 %v980
  %1044 = vmatpush.bf16.msra.mxu0 %v977
  %1045 = vmatmul.bf16.gmra.mxu0 %v857
  %v1046 = vpop.f32.mrf.mxu0
  %v1047 = vadd.f32 %v353, %v1046
  %v1048 = vpop.f32.mrf.mxu0
  %1049 = vdwg.mxu0
  %1050 = vmatpush.bf16.msra.mxu0 %v999
  %1051 = vmatpush.bf16.msra.mxu0 %v996
  %1052 = vmatpush.bf16.msra.mxu0 %v993
  %1053 = vmatpush.bf16.msra.mxu0 %v990
  %1054 = vmatpush.bf16.msra.mxu0 %v987
  %1055 = vmatpush.bf16.msra.mxu0 %v984
  %1056 = vmatpush.bf16.msra.mxu0 %v981
  %1057 = vmatpush.bf16.msra.mxu0 %v978
  %1058 = vmatmul.bf16.gmra.mxu0 %v857
  %v1059 = vpop.f32.mrf.mxu0
  %v1060 = vadd.f32 %v354, %v1059
  %v1061 = vpop.f32.mrf.mxu0
  %1062 = vdwg.mxu0
  %v1063 = vadd.f32 %v861, %v1034
  %v1064 = vxor.u32 %v1063, 2147483648
  %v1065 = vmul.f32 %v1064, 1.442695
  %v1066 = vpow.pop %v1065
  %v1067 = vadd.f32 %v1066, 1.0
  %v1068 = vrcp.pop %v1067
  %v1069 = vmul.f32 %v1067, %v1068
  %v1070 = vsub.f32 1.0, %v1069
  %v1071 = vmul.f32 %v1068, %v1070
  %v1072 = vadd.f32 %v1068, %v1071
  %vm1073 = vweird.f32 %v1067
  %vm1074 = vweird.f32 %v1068
  %vm1075 = vmor %vm1073, %vm1074
  %v1076 = vsel %vm1075, %v1068, %v1072
  %v1077 = vand.u32 2147483647, %v1067
  %vm1078 = vcmp.eq.f32.partialorder %v1077, 8.507059e+37
  %v1079 = vand.u32 %v1067, 2147483648
  %v1080 = vor.u32 1.1754944e-38, %v1079
  %v1081 = vsel %vm1078, %v1080, %v1076
  %v1082 = vmul.f32 1.0, %v1081
  %v1083 = vadd.f32 %v862, %v1047
  %v1084 = vxor.u32 %v1083, 2147483648
  %v1085 = vmul.f32 %v1084, 1.442695
  %v1086 = vpow.pop %v1085
  %v1087 = vadd.f32 %v1086, 1.0
  %v1088 = vrcp.pop %v1087
  %v1089 = vmul.f32 %v1087, %v1088
  %v1090 = vsub.f32 1.0, %v1089
  %v1091 = vmul.f32 %v1088, %v1090
  %v1092 = vadd.f32 %v1088, %v1091
  %vm1093 = vweird.f32 %v1087
  %vm1094 = vweird.f32 %v1088
  %vm1095 = vmor %vm1093, %vm1094
  %v1096 = vsel %vm1095, %v1088, %v1092
  %v1097 = vand.u32 2147483647, %v1087
  %vm1098 = vcmp.eq.f32.partialorder %v1097, 8.507059e+37
  %v1099 = vand.u32 %v1087, 2147483648
  %v1100 = vor.u32 1.1754944e-38, %v1099
  %v1101 = vsel %vm1098, %v1100, %v1096
  %v1102 = vmul.f32 1.0, %v1101
  %v1103 = vmul.f32 %v1082, %v1060
  %v1104 = vadd.f32 %v863, %v1103
  %v1105 = vtanh.pop %v1104
  %v1106 = vsub.f32 %v856, %v1105
  %v1107 = vmul.f32 %v1102, %v1106
  %v1108 = vadd.f32 %v1105, %v1107
  %v1109 = vpack.c.bf16 %v1108, %v1108
  %s1110 = scalar_lea.vmem [#allocation3], 8
  %1111 = vst [vmem:[%s1110] sm:$0xf] %v1109
  %s1112 = scalar_lea.vmem [#allocation2], 72
  %v1113 = vld [vmem:[%s1112] sm:$0xff]
  %v1114 = vld [vmem:[%s1112 + $0x8] sm:$0xff]
  %v1115 = vld [vmem:[%s1112 + $0x10] sm:$0xff]
  %v1116 = vld [vmem:[%s2] sm:$0xff]
  %v1117 = vld [vmem:[%s2 + $0x8] sm:$0xf]
  %v1118 = vld [vmem:[%s2 + $0xc] sm:$0xff]
  %v1119 = vld [vmem:[%s2 + $0x14] sm:$0xf]
  %v1120 = vld [vmem:[%s2 + $0x18] sm:$0xff]
  %v1121 = vld [vmem:[%s2 + $0x20] sm:$0xf]
  %v1122 = vld [vmem:[%s2 + $0x24] sm:$0xff]
  %v1123 = vld [vmem:[%s2 + $0x2c] sm:$0xf]
  %v1124 = vld [vmem:[%s2 + $0x30] sm:$0xff]
  %v1125 = vld [vmem:[%s2 + $0x38] sm:$0xf]
  %v1126 = vld [vmem:[%s2 + $0x3c] sm:$0xff]
  %v1127 = vld [vmem:[%s2 + $0x44] sm:$0xf]
  %v1128 = vld [vmem:[%s2 + $0x48] sm:$0xff]
  %v1129 = vld [vmem:[%s2 + $0x50] sm:$0xf]
  %v1130 = vld [vmem:[%s2 + $0x54] sm:$0xff]
  %v1131 = vld [vmem:[%s2 + $0x5c] sm:$0xf]
  %v1132 = vld [vmem:[%s2 + $0x60] sm:$0xff]
  %v1133 = vld [vmem:[%s2 + $0x68] sm:$0xf]
  %v1134 = vld [vmem:[%s2 + $0x6c] sm:$0xff]
  %v1135 = vld [vmem:[%s2 + $0x74] sm:$0xf]
  %v1136 = vld [vmem:[%s2 + $0x78] sm:$0xff]
  %v1137 = vld [vmem:[%s2 + $0x80] sm:$0xf]
  %v1138 = vld [vmem:[%s2 + $0x84] sm:$0xff]
  %v1139 = vld [vmem:[%s2 + $0x8c] sm:$0xf]
  %v1140 = vld [vmem:[%s2 + $0x90] sm:$0xff]
  %v1141 = vld [vmem:[%s2 + $0x98] sm:$0xf]
  %v1142 = vld [vmem:[%s2 + $0x9c] sm:$0xff]
  %v1143 = vld [vmem:[%s2 + $0xa4] sm:$0xf]
  %v1144 = vld [vmem:[%s2 + $0xa8] sm:$0xff]
  %v1145 = vld [vmem:[%s2 + $0xb0] sm:$0xf]
  %v1146 = vld [vmem:[%s2 + $0xb4] sm:$0xff]
  %v1147 = vld [vmem:[%s2 + $0xbc] sm:$0xf]
  %v1180 = vunpack.c.l.b16 %v1116
  %v1181 = vunpack.c.h.b16 %v1116
  %v1182 = vunpack.c.l.b16 %v1117
  %v1183 = vunpack.c.l.b16 %v1118
  %v1184 = vunpack.c.h.b16 %v1118
  %v1185 = vunpack.c.l.b16 %v1119
  %v1186 = vunpack.c.l.b16 %v1120
  %v1187 = vunpack.c.h.b16 %v1120
  %v1188 = vunpack.c.l.b16 %v1121
  %v1189 = vunpack.c.l.b16 %v1122
  %v1190 = vunpack.c.h.b16 %v1122
  %v1191 = vunpack.c.l.b16 %v1123
  %v1192 = vunpack.c.l.b16 %v1124
  %v1193 = vunpack.c.h.b16 %v1124
  %v1194 = vunpack.c.l.b16 %v1125
  %v1195 = vunpack.c.l.b16 %v1126
  %v1196 = vunpack.c.h.b16 %v1126
  %v1197 = vunpack.c.l.b16 %v1127
  %v1198 = vunpack.c.l.b16 %v1128
  %v1199 = vunpack.c.h.b16 %v1128
  %v1200 = vunpack.c.l.b16 %v1129
  %v1201 = vunpack.c.l.b16 %v1130
  %v1202 = vunpack.c.h.b16 %v1130
  %v1203 = vunpack.c.l.b16 %v1131
  %v1204 = vunpack.c.l.b16 %v1132
  %v1205 = vunpack.c.h.b16 %v1132
  %v1206 = vunpack.c.l.b16 %v1133
  %v1207 = vunpack.c.l.b16 %v1134
  %v1208 = vunpack.c.h.b16 %v1134
  %v1209 = vunpack.c.l.b16 %v1135
  %v1210 = vunpack.c.l.b16 %v1136
  %v1211 = vunpack.c.h.b16 %v1136
  %v1212 = vunpack.c.l.b16 %v1137
  %v1213 = vunpack.c.l.b16 %v1138
  %v1214 = vunpack.c.h.b16 %v1138
  %v1215 = vunpack.c.l.b16 %v1139
  %v1216 = vunpack.c.l.b16 %v1140
  %v1217 = vunpack.c.h.b16 %v1140
  %v1218 = vunpack.c.l.b16 %v1141
  %v1219 = vunpack.c.l.b16 %v1142
  %v1220 = vunpack.c.h.b16 %v1142
  %v1221 = vunpack.c.l.b16 %v1143
  %v1222 = vunpack.c.l.b16 %v1144
  %v1223 = vunpack.c.h.b16 %v1144
  %v1224 = vunpack.c.l.b16 %v1145
  %v1225 = vunpack.c.l.b16 %v1146
  %v1226 = vunpack.c.h.b16 %v1146
  %v1227 = vunpack.c.l.b16 %v1147
  %v1228 = vpack.c.b16 %v1183, %v1180
  %v1229 = vpack.c.b16 %v1184, %v1181
  %v1230 = vpack.c.b16 %v1185, %v1182
  %v1231 = vpack.c.b16 %v1189, %v1186
  %v1232 = vpack.c.b16 %v1190, %v1187
  %v1233 = vpack.c.b16 %v1191, %v1188
  %v1234 = vpack.c.b16 %v1195, %v1192
  %v1235 = vpack.c.b16 %v1196, %v1193
  %v1236 = vpack.c.b16 %v1197, %v1194
  %v1237 = vpack.c.b16 %v1201, %v1198
  %v1238 = vpack.c.b16 %v1202, %v1199
  %v1239 = vpack.c.b16 %v1203, %v1200
  %v1240 = vpack.c.b16 %v1207, %v1204
  %v1241 = vpack.c.b16 %v1208, %v1205
  %v1242 = vpack.c.b16 %v1209, %v1206
  %v1243 = vpack.c.b16 %v1213, %v1210
  %v1244 = vpack.c.b16 %v1214, %v1211
  %v1245 = vpack.c.b16 %v1215, %v1212
  %v1246 = vpack.c.b16 %v1219, %v1216
  %v1247 = vpack.c.b16 %v1220, %v1217
  %v1248 = vpack.c.b16 %v1221, %v1218
  %v1249 = vpack.c.b16 %v1225, %v1222
  %v1250 = vpack.c.b16 %v1226, %v1223
  %v1251 = vpack.c.b16 %v1227, %v1224
  %1276 = vmatpush.bf16.msra.mxu0 %v1249
  %1277 = vmatpush.bf16.msra.mxu0 %v1246
  %1278 = vmatpush.bf16.msra.mxu0 %v1243
  %1279 = vmatpush.bf16.msra.mxu0 %v1240
  %1280 = vmatpush.bf16.msra.mxu0 %v1237
  %1281 = vmatpush.bf16.msra.mxu0 %v1234
  %1282 = vmatpush.bf16.msra.mxu0 %v1231
  %1283 = vmatpush.bf16.msra.mxu0 %v1228
  %1284 = vmatmul.bf16.gmra.mxu0 %v1109
  %v1285 = vpop.f32.mrf.mxu0
  %v1286 = vadd.f32 %v352, %v1285
  %v1287 = vpop.f32.mrf.mxu0
  %1288 = vdwg.mxu0
  %1289 = vmatpush.bf16.msra.mxu0 %v1250
  %1290 = vmatpush.bf16.msra.mxu0 %v1247
  %1291 = vmatpush.bf16.msra.mxu0 %v1244
  %1292 = vmatpush.bf16.msra.mxu0 %v1241
  %1293 = vmatpush.bf16.msra.mxu0 %v1238
  %1294 = vmatpush.bf16.msra.mxu0 %v1235
  %1295 = vmatpush.bf16.msra.mxu0 %v1232
  %1296 = vmatpush.bf16.msra.mxu0 %v1229
  %1297 = vmatmul.bf16.gmra.mxu0 %v1109
  %v1298 = vpop.f32.mrf.mxu0
  %v1299 = vadd.f32 %v353, %v1298
  %v1300 = vpop.f32.mrf.mxu0
  %1301 = vdwg.mxu0
  %1302 = vmatpush.bf16.msra.mxu0 %v1251
  %1303 = vmatpush.bf16.msra.mxu0 %v1248
  %1304 = vmatpush.bf16.msra.mxu0 %v1245
  %1305 = vmatpush.bf16.msra.mxu0 %v1242
  %1306 = vmatpush.bf16.msra.mxu0 %v1239
  %1307 = vmatpush.bf16.msra.mxu0 %v1236
  %1308 = vmatpush.bf16.msra.mxu0 %v1233
  %1309 = vmatpush.bf16.msra.mxu0 %v1230
  %1310 = vmatmul.bf16.gmra.mxu0 %v1109
  %v1311 = vpop.f32.mrf.mxu0
  %v1312 = vadd.f32 %v354, %v1311
  %v1313 = vpop.f32.mrf.mxu0
  %1314 = vdwg.mxu0
  %v1315 = vadd.f32 %v1113, %v1286
  %v1316 = vxor.u32 %v1315, 2147483648
  %v1317 = vmul.f32 %v1316, 1.442695
  %v1318 = vpow.pop %v1317
  %v1319 = vadd.f32 %v1318, 1.0
  %v1320 = vrcp.pop %v1319
  %v1321 = vmul.f32 %v1319, %v1320
  %v1322 = vsub.f32 1.0, %v1321
  %v1323 = vmul.f32 %v1320, %v1322
  %v1324 = vadd.f32 %v1320, %v1323
  %vm1325 = vweird.f32 %v1319
  %vm1326 = vweird.f32 %v1320
  %vm1327 = vmor %vm1325, %vm1326
  %v1328 = vsel %vm1327, %v1320, %v1324
  %v1329 = vand.u32 2147483647, %v1319
  %vm1330 = vcmp.eq.f32.partialorder %v1329, 8.507059e+37
  %v1331 = vand.u32 %v1319, 2147483648
  %v1332 = vor.u32 1.1754944e-38, %v1331
  %v1333 = vsel %vm1330, %v1332, %v1328
  %v1334 = vmul.f32 1.0, %v1333
  %v1335 = vadd.f32 %v1114, %v1299
  %v1336 = vxor.u32 %v1335, 2147483648
  %v1337 = vmul.f32 %v1336, 1.442695
  %v1338 = vpow.pop %v1337
  %v1339 = vadd.f32 %v1338, 1.0
  %v1340 = vrcp.pop %v1339
  %v1341 = vmul.f32 %v1339, %v1340
  %v1342 = vsub.f32 1.0, %v1341
  %v1343 = vmul.f32 %v1340, %v1342
  %v1344 = vadd.f32 %v1340, %v1343
  %vm1345 = vweird.f32 %v1339
  %vm1346 = vweird.f32 %v1340
  %vm1347 = vmor %vm1345, %vm1346
  %v1348 = vsel %vm1347, %v1340, %v1344
  %v1349 = vand.u32 2147483647, %v1339
  %vm1350 = vcmp.eq.f32.partialorder %v1349, 8.507059e+37
  %v1351 = vand.u32 %v1339, 2147483648
  %v1352 = vor.u32 1.1754944e-38, %v1351
  %v1353 = vsel %vm1350, %v1352, %v1348
  %v1354 = vmul.f32 1.0, %v1353
  %v1355 = vmul.f32 %v1334, %v1312
  %v1356 = vadd.f32 %v1115, %v1355
  %v1357 = vtanh.pop %v1356
  %v1358 = vsub.f32 %v1108, %v1357
  %v1359 = vmul.f32 %v1354, %v1358
  %v1360 = vadd.f32 %v1357, %v1359
  %v1361 = vpack.c.bf16 %v1360, %v1360
  %s1362 = scalar_lea.vmem [#allocation3], 12
  %1363 = vst [vmem:[%s1362] sm:$0xf] %v1361
  %s1364 = scalar_lea.vmem [#allocation2], 96
  %v1365 = vld [vmem:[%s1364] sm:$0xff]
  %v1366 = vld [vmem:[%s1364 + $0x8] sm:$0xff]
  %v1367 = vld [vmem:[%s1364 + $0x10] sm:$0xff]
  %v1368 = vld [vmem:[%s2] sm:$0xff]
  %v1369 = vld [vmem:[%s2 + $0x8] sm:$0xf]
  %v1370 = vld [vmem:[%s2 + $0xc] sm:$0xff]
  %v1371 = vld [vmem:[%s2 + $0x14] sm:$0xf]
  %v1372 = vld [vmem:[%s2 + $0x18] sm:$0xff]
  %v1373 = vld [vmem:[%s2 + $0x20] sm:$0xf]
  %v1374 = vld [vmem:[%s2 + $0x24] sm:$0xff]
  %v1375 = vld [vmem:[%s2 + $0x2c] sm:$0xf]
  %v1376 = vld [vmem:[%s2 + $0x30] sm:$0xff]
  %v1377 = vld [vmem:[%s2 + $0x38] sm:$0xf]
  %v1378 = vld [vmem:[%s2 + $0x3c] sm:$0xff]
  %v1379 = vld [vmem:[%s2 + $0x44] sm:$0xf]
  %v1380 = vld [vmem:[%s2 + $0x48] sm:$0xff]
  %v1381 = vld [vmem:[%s2 + $0x50] sm:$0xf]
  %v1382 = vld [vmem:[%s2 + $0x54] sm:$0xff]
  %v1383 = vld [vmem:[%s2 + $0x5c] sm:$0xf]
  %v1384 = vld [vmem:[%s2 + $0x60] sm:$0xff]
  %v1385 = vld [vmem:[%s2 + $0x68] sm:$0xf]
  %v1386 = vld [vmem:[%s2 + $0x6c] sm:$0xff]
  %v1387 = vld [vmem:[%s2 + $0x74] sm:$0xf]
  %v1388 = vld [vmem:[%s2 + $0x78] sm:$0xff]
  %v1389 = vld [vmem:[%s2 + $0x80] sm:$0xf]
  %v1390 = vld [vmem:[%s2 + $0x84] sm:$0xff]
  %v1391 = vld [vmem:[%s2 + $0x8c] sm:$0xf]
  %v1392 = vld [vmem:[%s2 + $0x90] sm:$0xff]
  %v1393 = vld [vmem:[%s2 + $0x98] sm:$0xf]
  %v1394 = vld [vmem:[%s2 + $0x9c] sm:$0xff]
  %v1395 = vld [vmem:[%s2 + $0xa4] sm:$0xf]
  %v1396 = vld [vmem:[%s2 + $0xa8] sm:$0xff]
  %v1397 = vld [vmem:[%s2 + $0xb0] sm:$0xf]
  %v1398 = vld [vmem:[%s2 + $0xb4] sm:$0xff]
  %v1399 = vld [vmem:[%s2 + $0xbc] sm:$0xf]
  %v1432 = vunpack.c.l.b16 %v1368
  %v1433 = vunpack.c.h.b16 %v1368
  %v1434 = vunpack.c.l.b16 %v1369
  %v1435 = vunpack.c.l.b16 %v1370
  %v1436 = vunpack.c.h.b16 %v1370
  %v1437 = vunpack.c.l.b16 %v1371
  %v1438 = vunpack.c.l.b16 %v1372
  %v1439 = vunpack.c.h.b16 %v1372
  %v1440 = vunpack.c.l.b16 %v1373
  %v1441 = vunpack.c.l.b16 %v1374
  %v1442 = vunpack.c.h.b16 %v1374
  %v1443 = vunpack.c.l.b16 %v1375
  %v1444 = vunpack.c.l.b16 %v1376
  %v1445 = vunpack.c.h.b16 %v1376
  %v1446 = vunpack.c.l.b16 %v1377
  %v1447 = vunpack.c.l.b16 %v1378
  %v1448 = vunpack.c.h.b16 %v1378
  %v1449 = vunpack.c.l.b16 %v1379
  %v1450 = vunpack.c.l.b16 %v1380
  %v1451 = vunpack.c.h.b16 %v1380
  %v1452 = vunpack.c.l.b16 %v1381
  %v1453 = vunpack.c.l.b16 %v1382
  %v1454 = vunpack.c.h.b16 %v1382
  %v1455 = vunpack.c.l.b16 %v1383
  %v1456 = vunpack.c.l.b16 %v1384
  %v1457 = vunpack.c.h.b16 %v1384
  %v1458 = vunpack.c.l.b16 %v1385
  %v1459 = vunpack.c.l.b16 %v1386
  %v1460 = vunpack.c.h.b16 %v1386
  %v1461 = vunpack.c.l.b16 %v1387
  %v1462 = vunpack.c.l.b16 %v1388
  %v1463 = vunpack.c.h.b16 %v1388
  %v1464 = vunpack.c.l.b16 %v1389
  %v1465 = vunpack.c.l.b16 %v1390
  %v1466 = vunpack.c.h.b16 %v1390
  %v1467 = vunpack.c.l.b16 %v1391
  %v1468 = vunpack.c.l.b16 %v1392
  %v1469 = vunpack.c.h.b16 %v1392
  %v1470 = vunpack.c.l.b16 %v1393
  %v1471 = vunpack.c.l.b16 %v1394
  %v1472 = vunpack.c.h.b16 %v1394
  %v1473 = vunpack.c.l.b16 %v1395
  %v1474 = vunpack.c.l.b16 %v1396
  %v1475 = vunpack.c.h.b16 %v1396
  %v1476 = vunpack.c.l.b16 %v1397
  %v1477 = vunpack.c.l.b16 %v1398
  %v1478 = vunpack.c.h.b16 %v1398
  %v1479 = vunpack.c.l.b16 %v1399
  %v1480 = vpack.c.b16 %v1435, %v1432
  %v1481 = vpack.c.b16 %v1436, %v1433
  %v1482 = vpack.c.b16 %v1437, %v1434
  %v1483 = vpack.c.b16 %v1441, %v1438
  %v1484 = vpack.c.b16 %v1442, %v1439
  %v1485 = vpack.c.b16 %v1443, %v1440
  %v1486 = vpack.c.b16 %v1447, %v1444
  %v1487 = vpack.c.b16 %v1448, %v1445
  %v1488 = vpack.c.b16 %v1449, %v1446
  %v1489 = vpack.c.b16 %v1453, %v1450
  %v1490 = vpack.c.b16 %v1454, %v1451
  %v1491 = vpack.c.b16 %v1455, %v1452
  %v1492 = vpack.c.b16 %v1459, %v1456
  %v1493 = vpack.c.b16 %v1460, %v1457
  %v1494 = vpack.c.b16 %v1461, %v1458
  %v1495 = vpack.c.b16 %v1465, %v1462
  %v1496 = vpack.c.b16 %v1466, %v1463
  %v1497 = vpack.c.b16 %v1467, %v1464
  %v1498 = vpack.c.b16 %v1471, %v1468
  %v1499 = vpack.c.b16 %v1472, %v1469
  %v1500 = vpack.c.b16 %v1473, %v1470
  %v1501 = vpack.c.b16 %v1477, %v1474
  %v1502 = vpack.c.b16 %v1478, %v1475
  %v1503 = vpack.c.b16 %v1479, %v1476
  %1528 = vmatpush.bf16.msra.mxu0 %v1501
  %1529 = vmatpush.bf16.msra.mxu0 %v1498
  %1530 = vmatpush.bf16.msra.mxu0 %v1495
  %1531 = vmatpush.bf16.msra.mxu0 %v1492
  %1532 = vmatpush.bf16.msra.mxu0 %v1489
  %1533 = vmatpush.bf16.msra.mxu0 %v1486
  %1534 = vmatpush.bf16.msra.mxu0 %v1483
  %1535 = vmatpush.bf16.msra.mxu0 %v1480
  %1536 = vmatmul.bf16.gmra.mxu0 %v1361
  %v1537 = vpop.f32.mrf.mxu0
  %v1538 = vadd.f32 %v352, %v1537
  %v1539 = vpop.f32.mrf.mxu0
  %1540 = vdwg.mxu0
  %1541 = vmatpush.bf16.msra.mxu0 %v1502
  %1542 = vmatpush.bf16.msra.mxu0 %v1499
  %1543 = vmatpush.bf16.msra.mxu0 %v1496
  %1544 = vmatpush.bf16.msra.mxu0 %v1493
  %1545 = vmatpush.bf16.msra.mxu0 %v1490
  %1546 = vmatpush.bf16.msra.mxu0 %v1487
  %1547 = vmatpush.bf16.msra.mxu0 %v1484
  %1548 = vmatpush.bf16.msra.mxu0 %v1481
  %1549 = vmatmul.bf16.gmra.mxu0 %v1361
  %v1550 = vpop.f32.mrf.mxu0
  %v1551 = vadd.f32 %v353, %v1550
  %v1552 = vpop.f32.mrf.mxu0
  %1553 = vdwg.mxu0
  %1554 = vmatpush.bf16.msra.mxu0 %v1503
  %1555 = vmatpush.bf16.msra.mxu0 %v1500
  %1556 = vmatpush.bf16.msra.mxu0 %v1497
  %1557 = vmatpush.bf16.msra.mxu0 %v1494
  %1558 = vmatpush.bf16.msra.mxu0 %v1491
  %1559 = vmatpush.bf16.msra.mxu0 %v1488
  %1560 = vmatpush.bf16.msra.mxu0 %v1485
  %1561 = vmatpush.bf16.msra.mxu0 %v1482
  %1562 = vmatmul.bf16.gmra.mxu0 %v1361
  %v1563 = vpop.f32.mrf.mxu0
  %v1564 = vadd.f32 %v354, %v1563
  %v1565 = vpop.f32.mrf.mxu0
  %1566 = vdwg.mxu0
  %v1567 = vadd.f32 %v1365, %v1538
  %v1568 = vxor.u32 %v1567, 2147483648
  %v1569 = vmul.f32 %v1568, 1.442695
  %v1570 = vpow.pop %v1569
  %v1571 = vadd.f32 %v1570, 1.0
  %v1572 = vrcp.pop %v1571
  %v1573 = vmul.f32 %v1571, %v1572
  %v1574 = vsub.f32 1.0, %v1573
  %v1575 = vmul.f32 %v1572, %v1574
  %v1576 = vadd.f32 %v1572, %v1575
  %vm1577 = vweird.f32 %v1571
  %vm1578 = vweird.f32 %v1572
  %vm1579 = vmor %vm1577, %vm1578
  %v1580 = vsel %vm1579, %v1572, %v1576
  %v1581 = vand.u32 2147483647, %v1571
  %vm1582 = vcmp.eq.f32.partialorder %v1581, 8.507059e+37
  %v1583 = vand.u32 %v1571, 2147483648
  %v1584 = vor.u32 1.1754944e-38, %v1583
  %v1585 = vsel %vm1582, %v1584, %v1580
  %v1586 = vmul.f32 1.0, %v1585
  %v1587 = vadd.f32 %v1366, %v1551
  %v1588 = vxor.u32 %v1587, 2147483648
  %v1589 = vmul.f32 %v1588, 1.442695
  %v1590 = vpow.pop %v1589
  %v1591 = vadd.f32 %v1590, 1.0
  %v1592 = vrcp.pop %v1591
  %v1593 = vmul.f32 %v1591, %v1592
  %v1594 = vsub.f32 1.0, %v1593
  %v1595 = vmul.f32 %v1592, %v1594
  %v1596 = vadd.f32 %v1592, %v1595
  %vm1597 = vweird.f32 %v1591
  %vm1598 = vweird.f32 %v1592
  %vm1599 = vmor %vm1597, %vm1598
  %v1600 = vsel %vm1599, %v1592, %v1596
  %v1601 = vand.u32 2147483647, %v1591
  %vm1602 = vcmp.eq.f32.partialorder %v1601, 8.507059e+37
  %v1603 = vand.u32 %v1591, 2147483648
  %v1604 = vor.u32 1.1754944e-38, %v1603
  %v1605 = vsel %vm1602, %v1604, %v1600
  %v1606 = vmul.f32 1.0, %v1605
  %v1607 = vmul.f32 %v1586, %v1564
  %v1608 = vadd.f32 %v1367, %v1607
  %v1609 = vtanh.pop %v1608
  %v1610 = vsub.f32 %v1360, %v1609
  %v1611 = vmul.f32 %v1606, %v1610
  %v1612 = vadd.f32 %v1609, %v1611
  %v1613 = vpack.c.bf16 %v1612, %v1612
  %s1614 = scalar_lea.vmem [#allocation3], 16
  %1615 = vst [vmem:[%s1614] sm:$0xf] %v1613
  %s1616 = scalar_lea.vmem [#allocation2], 120
  %v1617 = vld [vmem:[%s1616] sm:$0xff]
  %v1618 = vld [vmem:[%s1616 + $0x8] sm:$0xff]
  %v1619 = vld [vmem:[%s1616 + $0x10] sm:$0xff]
  %v1620 = vld [vmem:[%s2] sm:$0xff]
  %v1621 = vld [vmem:[%s2 + $0x8] sm:$0xf]
  %v1622 = vld [vmem:[%s2 + $0xc] sm:$0xff]
  %v1623 = vld [vmem:[%s2 + $0x14] sm:$0xf]
  %v1624 = vld [vmem:[%s2 + $0x18] sm:$0xff]
  %v1625 = vld [vmem:[%s2 + $0x20] sm:$0xf]
  %v1626 = vld [vmem:[%s2 + $0x24] sm:$0xff]
  %v1627 = vld [vmem:[%s2 + $0x2c] sm:$0xf]
  %v1628 = vld [vmem:[%s2 + $0x30] sm:$0xff]
  %v1629 = vld [vmem:[%s2 + $0x38] sm:$0xf]
  %v1630 = vld [vmem:[%s2 + $0x3c] sm:$0xff]
  %v1631 = vld [vmem:[%s2 + $0x44] sm:$0xf]
  %v1632 = vld [vmem:[%s2 + $0x48] sm:$0xff]
  %v1633 = vld [vmem:[%s2 + $0x50] sm:$0xf]
  %v1634 = vld [vmem:[%s2 + $0x54] sm:$0xff]
  %v1635 = vld [vmem:[%s2 + $0x5c] sm:$0xf]
  %v1636 = vld [vmem:[%s2 + $0x60] sm:$0xff]
  %v1637 = vld [vmem:[%s2 + $0x68] sm:$0xf]
  %v1638 = vld [vmem:[%s2 + $0x6c] sm:$0xff]
  %v1639 = vld [vmem:[%s2 + $0x74] sm:$0xf]
  %v1640 = vld [vmem:[%s2 + $0x78] sm:$0xff]
  %v1641 = vld [vmem:[%s2 + $0x80] sm:$0xf]
  %v1642 = vld [vmem:[%s2 + $0x84] sm:$0xff]
  %v1643 = vld [vmem:[%s2 + $0x8c] sm:$0xf]
  %v1644 = vld [vmem:[%s2 + $0x90] sm:$0xff]
  %v1645 = vld [vmem:[%s2 + $0x98] sm:$0xf]
  %v1646 = vld [vmem:[%s2 + $0x9c] sm:$0xff]
  %v1647 = vld [vmem:[%s2 + $0xa4] sm:$0xf]
  %v1648 = vld [vmem:[%s2 + $0xa8] sm:$0xff]
  %v1649 = vld [vmem:[%s2 + $0xb0] sm:$0xf]
  %v1650 = vld [vmem:[%s2 + $0xb4] sm:$0xff]
  %v1651 = vld [vmem:[%s2 + $0xbc] sm:$0xf]
  %v1684 = vunpack.c.l.b16 %v1620
  %v1685 = vunpack.c.h.b16 %v1620
  %v1686 = vunpack.c.l.b16 %v1621
  %v1687 = vunpack.c.l.b16 %v1622
  %v1688 = vunpack.c.h.b16 %v1622
  %v1689 = vunpack.c.l.b16 %v1623
  %v1690 = vunpack.c.l.b16 %v1624
  %v1691 = vunpack.c.h.b16 %v1624
  %v1692 = vunpack.c.l.b16 %v1625
  %v1693 = vunpack.c.l.b16 %v1626
  %v1694 = vunpack.c.h.b16 %v1626
  %v1695 = vunpack.c.l.b16 %v1627
  %v1696 = vunpack.c.l.b16 %v1628
  %v1697 = vunpack.c.h.b16 %v1628
  %v1698 = vunpack.c.l.b16 %v1629
  %v1699 = vunpack.c.l.b16 %v1630
  %v1700 = vunpack.c.h.b16 %v1630
  %v1701 = vunpack.c.l.b16 %v1631
  %v1702 = vunpack.c.l.b16 %v1632
  %v1703 = vunpack.c.h.b16 %v1632
  %v1704 = vunpack.c.l.b16 %v1633
  %v1705 = vunpack.c.l.b16 %v1634
  %v1706 = vunpack.c.h.b16 %v1634
  %v1707 = vunpack.c.l.b16 %v1635
  %v1708 = vunpack.c.l.b16 %v1636
  %v1709 = vunpack.c.h.b16 %v1636
  %v1710 = vunpack.c.l.b16 %v1637
  %v1711 = vunpack.c.l.b16 %v1638
  %v1712 = vunpack.c.h.b16 %v1638
  %v1713 = vunpack.c.l.b16 %v1639
  %v1714 = vunpack.c.l.b16 %v1640
  %v1715 = vunpack.c.h.b16 %v1640
  %v1716 = vunpack.c.l.b16 %v1641
  %v1717 = vunpack.c.l.b16 %v1642
  %v1718 = vunpack.c.h.b16 %v1642
  %v1719 = vunpack.c.l.b16 %v1643
  %v1720 = vunpack.c.l.b16 %v1644
  %v1721 = vunpack.c.h.b16 %v1644
  %v1722 = vunpack.c.l.b16 %v1645
  %v1723 = vunpack.c.l.b16 %v1646
  %v1724 = vunpack.c.h.b16 %v1646
  %v1725 = vunpack.c.l.b16 %v1647
  %v1726 = vunpack.c.l.b16 %v1648
  %v1727 = vunpack.c.h.b16 %v1648
  %v1728 = vunpack.c.l.b16 %v1649
  %v1729 = vunpack.c.l.b16 %v1650
  %v1730 = vunpack.c.h.b16 %v1650
  %v1731 = vunpack.c.l.b16 %v1651
  %v1732 = vpack.c.b16 %v1687, %v1684
  %v1733 = vpack.c.b16 %v1688, %v1685
  %v1734 = vpack.c.b16 %v1689, %v1686
  %v1735 = vpack.c.b16 %v1693, %v1690
  %v1736 = vpack.c.b16 %v1694, %v1691
  %v1737 = vpack.c.b16 %v1695, %v1692
  %v1738 = vpack.c.b16 %v1699, %v1696
  %v1739 = vpack.c.b16 %v1700, %v1697
  %v1740 = vpack.c.b16 %v1701, %v1698
  %v1741 = vpack.c.b16 %v1705, %v1702
  %v1742 = vpack.c.b16 %v1706, %v1703
  %v1743 = vpack.c.b16 %v1707, %v1704
  %v1744 = vpack.c.b16 %v1711, %v1708
  %v1745 = vpack.c.b16 %v1712, %v1709
  %v1746 = vpack.c.b16 %v1713, %v1710
  %v1747 = vpack.c.b16 %v1717, %v1714
  %v1748 = vpack.c.b16 %v1718, %v1715
  %v1749 = vpack.c.b16 %v1719, %v1716
  %v1750 = vpack.c.b16 %v1723, %v1720
  %v1751 = vpack.c.b16 %v1724, %v1721
  %v1752 = vpack.c.b16 %v1725, %v1722
  %v1753 = vpack.c.b16 %v1729, %v1726
  %v1754 = vpack.c.b16 %v1730, %v1727
  %v1755 = vpack.c.b16 %v1731, %v1728
  %1780 = vmatpush.bf16.msra.mxu0 %v1753
  %1781 = vmatpush.bf16.msra.mxu0 %v1750
  %1782 = vmatpush.bf16.msra.mxu0 %v1747
  %1783 = vmatpush.bf16.msra.mxu0 %v1744
  %1784 = vmatpush.bf16.msra.mxu0 %v1741
  %1785 = vmatpush.bf16.msra.mxu0 %v1738
  %1786 = vmatpush.bf16.msra.mxu0 %v1735
  %1787 = vmatpush.bf16.msra.mxu0 %v1732
  %1788 = vmatmul.bf16.gmra.mxu0 %v1613
  %v1789 = vpop.f32.mrf.mxu0
  %v1790 = vadd.f32 %v352, %v1789
  %v1791 = vpop.f32.mrf.mxu0
  %1792 = vdwg.mxu0
  %1793 = vmatpush.bf16.msra.mxu0 %v1754
  %1794 = vmatpush.bf16.msra.mxu0 %v1751
  %1795 = vmatpush.bf16.msra.mxu0 %v1748
  %1796 = vmatpush.bf16.msra.mxu0 %v1745
  %1797 = vmatpush.bf16.msra.mxu0 %v1742
  %1798 = vmatpush.bf16.msra.mxu0 %v1739
  %1799 = vmatpush.bf16.msra.mxu0 %v1736
  %1800 = vmatpush.bf16.msra.mxu0 %v1733
  %1801 = vmatmul.bf16.gmra.mxu0 %v1613
  %v1802 = vpop.f32.mrf.mxu0
  %v1803 = vadd.f32 %v353, %v1802
  %v1804 = vpop.f32.mrf.mxu0
  %1805 = vdwg.mxu0
  %1806 = vmatpush.bf16.msra.mxu0 %v1755
  %1807 = vmatpush.bf16.msra.mxu0 %v1752
  %1808 = vmatpush.bf16.msra.mxu0 %v1749
  %1809 = vmatpush.bf16.msra.mxu0 %v1746
  %1810 = vmatpush.bf16.msra.mxu0 %v1743
  %1811 = vmatpush.bf16.msra.mxu0 %v1740
  %1812 = vmatpush.bf16.msra.mxu0 %v1737
  %1813 = vmatpush.bf16.msra.mxu0 %v1734
  %1814 = vmatmul.bf16.gmra.mxu0 %v1613
  %v1815 = vpop.f32.mrf.mxu0
  %v1816 = vadd.f32 %v354, %v1815
  %v1817 = vpop.f32.mrf.mxu0
  %1818 = vdwg.mxu0
  %v1819 = vadd.f32 %v1617, %v1790
  %v1820 = vxor.u32 %v1819, 2147483648
  %v1821 = vmul.f32 %v1820, 1.442695
  %v1822 = vpow.pop %v1821
  %v1823 = vadd.f32 %v1822, 1.0
  %v1824 = vrcp.pop %v1823
  %v1825 = vmul.f32 %v1823, %v1824
  %v1826 = vsub.f32 1.0, %v1825
  %v1827 = vmul.f32 %v1824, %v1826
  %v1828 = vadd.f32 %v1824, %v1827
  %vm1829 = vweird.f32 %v1823
  %vm1830 = vweird.f32 %v1824
  %vm1831 = vmor %vm1829, %vm1830
  %v1832 = vsel %vm1831, %v1824, %v1828
  %v1833 = vand.u32 2147483647, %v1823
  %vm1834 = vcmp.eq.f32.partialorder %v1833, 8.507059e+37
  %v1835 = vand.u32 %v1823, 2147483648
  %v1836 = vor.u32 1.1754944e-38, %v1835
  %v1837 = vsel %vm1834, %v1836, %v1832
  %v1838 = vmul.f32 1.0, %v1837
  %v1839 = vadd.f32 %v1618, %v1803
  %v1840 = vxor.u32 %v1839, 2147483648
  %v1841 = vmul.f32 %v1840, 1.442695
  %v1842 = vpow.pop %v1841
  %v1843 = vadd.f32 %v1842, 1.0
  %v1844 = vrcp.pop %v1843
  %v1845 = vmul.f32 %v1843, %v1844
  %v1846 = vsub.f32 1.0, %v1845
  %v1847 = vmul.f32 %v1844, %v1846
  %v1848 = vadd.f32 %v1844, %v1847
  %vm1849 = vweird.f32 %v1843
  %vm1850 = vweird.f32 %v1844
  %vm1851 = vmor %vm1849, %vm1850
  %v1852 = vsel %vm1851, %v1844, %v1848
  %v1853 = vand.u32 2147483647, %v1843
  %vm1854 = vcmp.eq.f32.partialorder %v1853, 8.507059e+37
  %v1855 = vand.u32 %v1843, 2147483648
  %v1856 = vor.u32 1.1754944e-38, %v1855
  %v1857 = vsel %vm1854, %v1856, %v1852
  %v1858 = vmul.f32 1.0, %v1857
  %v1859 = vmul.f32 %v1838, %v1816
  %v1860 = vadd.f32 %v1619, %v1859
  %v1861 = vtanh.pop %v1860
  %v1862 = vsub.f32 %v1612, %v1861
  %v1863 = vmul.f32 %v1858, %v1862
  %v1864 = vadd.f32 %v1861, %v1863
  %v1865 = vpack.c.bf16 %v1864, %v1864
  %s1866 = scalar_lea.vmem [#allocation3], 20
  %1867 = vst [vmem:[%s1866] sm:$0xf] %v1865
  %s1868 = scalar_lea.vmem [#allocation2], 144
  %v1869 = vld [vmem:[%s1868] sm:$0xff]
  %v1870 = vld [vmem:[%s1868 + $0x8] sm:$0xff]
  %v1871 = vld [vmem:[%s1868 + $0x10] sm:$0xff]
  %v1872 = vld [vmem:[%s2] sm:$0xff]
  %v1873 = vld [vmem:[%s2 + $0x8] sm:$0xf]
  %v1874 = vld [vmem:[%s2 + $0xc] sm:$0xff]
  %v1875 = vld [vmem:[%s2 + $0x14] sm:$0xf]
  %v1876 = vld [vmem:[%s2 + $0x18] sm:$0xff]
  %v1877 = vld [vmem:[%s2 + $0x20] sm:$0xf]
  %v1878 = vld [vmem:[%s2 + $0x24] sm:$0xff]
  %v1879 = vld [vmem:[%s2 + $0x2c] sm:$0xf]
  %v1880 = vld [vmem:[%s2 + $0x30] sm:$0xff]
  %v1881 = vld [vmem:[%s2 + $0x38] sm:$0xf]
  %v1882 = vld [vmem:[%s2 + $0x3c] sm:$0xff]
  %v1883 = vld [vmem:[%s2 + $0x44] sm:$0xf]
  %v1884 = vld [vmem:[%s2 + $0x48] sm:$0xff]
  %v1885 = vld [vmem:[%s2 + $0x50] sm:$0xf]
  %v1886 = vld [vmem:[%s2 + $0x54] sm:$0xff]
  %v1887 = vld [vmem:[%s2 + $0x5c] sm:$0xf]
  %v1888 = vld [vmem:[%s2 + $0x60] sm:$0xff]
  %v1889 = vld [vmem:[%s2 + $0x68] sm:$0xf]
  %v1890 = vld [vmem:[%s2 + $0x6c] sm:$0xff]
  %v1891 = vld [vmem:[%s2 + $0x74] sm:$0xf]
  %v1892 = vld [vmem:[%s2 + $0x78] sm:$0xff]
  %v1893 = vld [vmem:[%s2 + $0x80] sm:$0xf]
  %v1894 = vld [vmem:[%s2 + $0x84] sm:$0xff]
  %v1895 = vld [vmem:[%s2 + $0x8c] sm:$0xf]
  %v1896 = vld [vmem:[%s2 + $0x90] sm:$0xff]
  %v1897 = vld [vmem:[%s2 + $0x98] sm:$0xf]
  %v1898 = vld [vmem:[%s2 + $0x9c] sm:$0xff]
  %v1899 = vld [vmem:[%s2 + $0xa4] sm:$0xf]
  %v1900 = vld [vmem:[%s2 + $0xa8] sm:$0xff]
  %v1901 = vld [vmem:[%s2 + $0xb0] sm:$0xf]
  %v1902 = vld [vmem:[%s2 + $0xb4] sm:$0xff]
  %v1903 = vld [vmem:[%s2 + $0xbc] sm:$0xf]
  %v1936 = vunpack.c.l.b16 %v1872
  %v1937 = vunpack.c.h.b16 %v1872
  %v1938 = vunpack.c.l.b16 %v1873
  %v1939 = vunpack.c.l.b16 %v1874
  %v1940 = vunpack.c.h.b16 %v1874
  %v1941 = vunpack.c.l.b16 %v1875
  %v1942 = vunpack.c.l.b16 %v1876
  %v1943 = vunpack.c.h.b16 %v1876
  %v1944 = vunpack.c.l.b16 %v1877
  %v1945 = vunpack.c.l.b16 %v1878
  %v1946 = vunpack.c.h.b16 %v1878
  %v1947 = vunpack.c.l.b16 %v1879
  %v1948 = vunpack.c.l.b16 %v1880
  %v1949 = vunpack.c.h.b16 %v1880
  %v1950 = vunpack.c.l.b16 %v1881
  %v1951 = vunpack.c.l.b16 %v1882
  %v1952 = vunpack.c.h.b16 %v1882
  %v1953 = vunpack.c.l.b16 %v1883
  %v1954 = vunpack.c.l.b16 %v1884
  %v1955 = vunpack.c.h.b16 %v1884
  %v1956 = vunpack.c.l.b16 %v1885
  %v1957 = vunpack.c.l.b16 %v1886
  %v1958 = vunpack.c.h.b16 %v1886
  %v1959 = vunpack.c.l.b16 %v1887
  %v1960 = vunpack.c.l.b16 %v1888
  %v1961 = vunpack.c.h.b16 %v1888
  %v1962 = vunpack.c.l.b16 %v1889
  %v1963 = vunpack.c.l.b16 %v1890
  %v1964 = vunpack.c.h.b16 %v1890
  %v1965 = vunpack.c.l.b16 %v1891
  %v1966 = vunpack.c.l.b16 %v1892
  %v1967 = vunpack.c.h.b16 %v1892
  %v1968 = vunpack.c.l.b16 %v1893
  %v1969 = vunpack.c.l.b16 %v1894
  %v1970 = vunpack.c.h.b16 %v1894
  %v1971 = vunpack.c.l.b16 %v1895
  %v1972 = vunpack.c.l.b16 %v1896
  %v1973 = vunpack.c.h.b16 %v1896
  %v1974 = vunpack.c.l.b16 %v1897
  %v1975 = vunpack.c.l.b16 %v1898
  %v1976 = vunpack.c.h.b16 %v1898
  %v1977 = vunpack.c.l.b16 %v1899
  %v1978 = vunpack.c.l.b16 %v1900
  %v1979 = vunpack.c.h.b16 %v1900
  %v1980 = vunpack.c.l.b16 %v1901
  %v1981 = vunpack.c.l.b16 %v1902
  %v1982 = vunpack.c.h.b16 %v1902
  %v1983 = vunpack.c.l.b16 %v1903
  %v1984 = vpack.c.b16 %v1939, %v1936
  %v1985 = vpack.c.b16 %v1940, %v1937
  %v1986 = vpack.c.b16 %v1941, %v1938
  %v1987 = vpack.c.b16 %v1945, %v1942
  %v1988 = vpack.c.b16 %v1946, %v1943
  %v1989 = vpack.c.b16 %v1947, %v1944
  %v1990 = vpack.c.b16 %v1951, %v1948
  %v1991 = vpack.c.b16 %v1952, %v1949
  %v1992 = vpack.c.b16 %v1953, %v1950
  %v1993 = vpack.c.b16 %v1957, %v1954
  %v1994 = vpack.c.b16 %v1958, %v1955
  %v1995 = vpack.c.b16 %v1959, %v1956
  %v1996 = vpack.c.b16 %v1963, %v1960
  %v1997 = vpack.c.b16 %v1964, %v1961
  %v1998 = vpack.c.b16 %v1965, %v1962
  %v1999 = vpack.c.b16 %v1969, %v1966
  %v2000 = vpack.c.b16 %v1970, %v1967
  %v2001 = vpack.c.b16 %v1971, %v1968
  %v2002 = vpack.c.b16 %v1975, %v1972
  %v2003 = vpack.c.b16 %v1976, %v1973
  %v2004 = vpack.c.b16 %v1977, %v1974
  %v2005 = vpack.c.b16 %v1981, %v1978
  %v2006 = vpack.c.b16 %v1982, %v1979
  %v2007 = vpack.c.b16 %v1983, %v1980
  %2032 = vmatpush.bf16.msra.mxu0 %v2005
  %2033 = vmatpush.bf16.msra.mxu0 %v2002
  %2034 = vmatpush.bf16.msra.mxu0 %v1999
  %2035 = vmatpush.bf16.msra.mxu0 %v1996
  %2036 = vmatpush.bf16.msra.mxu0 %v1993
  %2037 = vmatpush.bf16.msra.mxu0 %v1990
  %2038 = vmatpush.bf16.msra.mxu0 %v1987
  %2039 = vmatpush.bf16.msra.mxu0 %v1984
  %2040 = vmatmul.bf16.gmra.mxu0 %v1865
  %v2041 = vpop.f32.mrf.mxu0
  %v2042 = vadd.f32 %v352, %v2041
  %v2043 = vpop.f32.mrf.mxu0
  %2044 = vdwg.mxu0
  %2045 = vmatpush.bf16.msra.mxu0 %v2006
  %2046 = vmatpush.bf16.msra.mxu0 %v2003
  %2047 = vmatpush.bf16.msra.mxu0 %v2000
  %2048 = vmatpush.bf16.msra.mxu0 %v1997
  %2049 = vmatpush.bf16.msra.mxu0 %v1994
  %2050 = vmatpush.bf16.msra.mxu0 %v1991
  %2051 = vmatpush.bf16.msra.mxu0 %v1988
  %2052 = vmatpush.bf16.msra.mxu0 %v1985
  %2053 = vmatmul.bf16.gmra.mxu0 %v1865
  %v2054 = vpop.f32.mrf.mxu0
  %v2055 = vadd.f32 %v353, %v2054
  %v2056 = vpop.f32.mrf.mxu0
  %2057 = vdwg.mxu0
  %2058 = vmatpush.bf16.msra.mxu0 %v2007
  %2059 = vmatpush.bf16.msra.mxu0 %v2004
  %2060 = vmatpush.bf16.msra.mxu0 %v2001
  %2061 = vmatpush.bf16.msra.mxu0 %v1998
  %2062 = vmatpush.bf16.msra.mxu0 %v1995
  %2063 = vmatpush.bf16.msra.mxu0 %v1992
  %2064 = vmatpush.bf16.msra.mxu0 %v1989
  %2065 = vmatpush.bf16.msra.mxu0 %v1986
  %2066 = vmatmul.bf16.gmra.mxu0 %v1865
  %v2067 = vpop.f32.mrf.mxu0
  %v2068 = vadd.f32 %v354, %v2067
  %v2069 = vpop.f32.mrf.mxu0
  %2070 = vdwg.mxu0
  %v2071 = vadd.f32 %v1869, %v2042
  %v2072 = vxor.u32 %v2071, 2147483648
  %v2073 = vmul.f32 %v2072, 1.442695
  %v2074 = vpow.pop %v2073
  %v2075 = vadd.f32 %v2074, 1.0
  %v2076 = vrcp.pop %v2075
  %v2077 = vmul.f32 %v2075, %v2076
  %v2078 = vsub.f32 1.0, %v2077
  %v2079 = vmul.f32 %v2076, %v2078
  %v2080 = vadd.f32 %v2076, %v2079
  %vm2081 = vweird.f32 %v2075
  %vm2082 = vweird.f32 %v2076
  %vm2083 = vmor %vm2081, %vm2082
  %v2084 = vsel %vm2083, %v2076, %v2080
  %v2085 = vand.u32 2147483647, %v2075
  %vm2086 = vcmp.eq.f32.partialorder %v2085, 8.507059e+37
  %v2087 = vand.u32 %v2075, 2147483648
  %v2088 = vor.u32 1.1754944e-38, %v2087
  %v2089 = vsel %vm2086, %v2088, %v2084
  %v2090 = vmul.f32 1.0, %v2089
  %v2091 = vadd.f32 %v1870, %v2055
  %v2092 = vxor.u32 %v2091, 2147483648
  %v2093 = vmul.f32 %v2092, 1.442695
  %v2094 = vpow.pop %v2093
  %v2095 = vadd.f32 %v2094, 1.0
  %v2096 = vrcp.pop %v2095
  %v2097 = vmul.f32 %v2095, %v2096
  %v2098 = vsub.f32 1.0, %v2097
  %v2099 = vmul.f32 %v2096, %v2098
  %v2100 = vadd.f32 %v2096, %v2099
  %vm2101 = vweird.f32 %v2095
  %vm2102 = vweird.f32 %v2096
  %vm2103 = vmor %vm2101, %vm2102
  %v2104 = vsel %vm2103, %v2096, %v2100
  %v2105 = vand.u32 2147483647, %v2095
  %vm2106 = vcmp.eq.f32.partialorder %v2105, 8.507059e+37
  %v2107 = vand.u32 %v2095, 2147483648
  %v2108 = vor.u32 1.1754944e-38, %v2107
  %v2109 = vsel %vm2106, %v2108, %v2104
  %v2110 = vmul.f32 1.0, %v2109
  %v2111 = vmul.f32 %v2090, %v2068
  %v2112 = vadd.f32 %v1871, %v2111
  %v2113 = vtanh.pop %v2112
  %v2114 = vsub.f32 %v1864, %v2113
  %v2115 = vmul.f32 %v2110, %v2114
  %v2116 = vadd.f32 %v2113, %v2115
  %v2117 = vpack.c.bf16 %v2116, %v2116
  %s2118 = scalar_lea.vmem [#allocation3], 24
  %2119 = vst [vmem:[%s2118] sm:$0xf] %v2117
  %s2120 = scalar_lea.vmem [#allocation2], 168
  %v2121 = vld [vmem:[%s2120] sm:$0xff]
  %v2122 = vld [vmem:[%s2120 + $0x8] sm:$0xff]
  %v2123 = vld [vmem:[%s2120 + $0x10] sm:$0xff]
  %v2124 = vld [vmem:[%s2] sm:$0xff]
  %v2125 = vld [vmem:[%s2 + $0x8] sm:$0xf]
  %v2126 = vld [vmem:[%s2 + $0xc] sm:$0xff]
  %v2127 = vld [vmem:[%s2 + $0x14] sm:$0xf]
  %v2128 = vld [vmem:[%s2 + $0x18] sm:$0xff]
  %v2129 = vld [vmem:[%s2 + $0x20] sm:$0xf]
  %v2130 = vld [vmem:[%s2 + $0x24] sm:$0xff]
  %v2131 = vld [vmem:[%s2 + $0x2c] sm:$0xf]
  %v2132 = vld [vmem:[%s2 + $0x30] sm:$0xff]
  %v2133 = vld [vmem:[%s2 + $0x38] sm:$0xf]
  %v2134 = vld [vmem:[%s2 + $0x3c] sm:$0xff]
  %v2135 = vld [vmem:[%s2 + $0x44] sm:$0xf]
  %v2136 = vld [vmem:[%s2 + $0x48] sm:$0xff]
  %v2137 = vld [vmem:[%s2 + $0x50] sm:$0xf]
  %v2138 = vld [vmem:[%s2 + $0x54] sm:$0xff]
  %v2139 = vld [vmem:[%s2 + $0x5c] sm:$0xf]
  %v2140 = vld [vmem:[%s2 + $0x60] sm:$0xff]
  %v2141 = vld [vmem:[%s2 + $0x68] sm:$0xf]
  %v2142 = vld [vmem:[%s2 + $0x6c] sm:$0xff]
  %v2143 = vld [vmem:[%s2 + $0x74] sm:$0xf]
  %v2144 = vld [vmem:[%s2 + $0x78] sm:$0xff]
  %v2145 = vld [vmem:[%s2 + $0x80] sm:$0xf]
  %v2146 = vld [vmem:[%s2 + $0x84] sm:$0xff]
  %v2147 = vld [vmem:[%s2 + $0x8c] sm:$0xf]
  %v2148 = vld [vmem:[%s2 + $0x90] sm:$0xff]
  %v2149 = vld [vmem:[%s2 + $0x98] sm:$0xf]
  %v2150 = vld [vmem:[%s2 + $0x9c] sm:$0xff]
  %v2151 = vld [vmem:[%s2 + $0xa4] sm:$0xf]
  %v2152 = vld [vmem:[%s2 + $0xa8] sm:$0xff]
  %v2153 = vld [vmem:[%s2 + $0xb0] sm:$0xf]
  %v2154 = vld [vmem:[%s2 + $0xb4] sm:$0xff]
  %v2155 = vld [vmem:[%s2 + $0xbc] sm:$0xf]
  %v2188 = vunpack.c.l.b16 %v2124
  %v2189 = vunpack.c.h.b16 %v2124
  %v2190 = vunpack.c.l.b16 %v2125
  %v2191 = vunpack.c.l.b16 %v2126
  %v2192 = vunpack.c.h.b16 %v2126
  %v2193 = vunpack.c.l.b16 %v2127
  %v2194 = vunpack.c.l.b16 %v2128
  %v2195 = vunpack.c.h.b16 %v2128
  %v2196 = vunpack.c.l.b16 %v2129
  %v2197 = vunpack.c.l.b16 %v2130
  %v2198 = vunpack.c.h.b16 %v2130
  %v2199 = vunpack.c.l.b16 %v2131
  %v2200 = vunpack.c.l.b16 %v2132
  %v2201 = vunpack.c.h.b16 %v2132
  %v2202 = vunpack.c.l.b16 %v2133
  %v2203 = vunpack.c.l.b16 %v2134
  %v2204 = vunpack.c.h.b16 %v2134
  %v2205 = vunpack.c.l.b16 %v2135
  %v2206 = vunpack.c.l.b16 %v2136
  %v2207 = vunpack.c.h.b16 %v2136
  %v2208 = vunpack.c.l.b16 %v2137
  %v2209 = vunpack.c.l.b16 %v2138
  %v2210 = vunpack.c.h.b16 %v2138
  %v2211 = vunpack.c.l.b16 %v2139
  %v2212 = vunpack.c.l.b16 %v2140
  %v2213 = vunpack.c.h.b16 %v2140
  %v2214 = vunpack.c.l.b16 %v2141
  %v2215 = vunpack.c.l.b16 %v2142
  %v2216 = vunpack.c.h.b16 %v2142
  %v2217 = vunpack.c.l.b16 %v2143
  %v2218 = vunpack.c.l.b16 %v2144
  %v2219 = vunpack.c.h.b16 %v2144
  %v2220 = vunpack.c.l.b16 %v2145
  %v2221 = vunpack.c.l.b16 %v2146
  %v2222 = vunpack.c.h.b16 %v2146
  %v2223 = vunpack.c.l.b16 %v2147
  %v2224 = vunpack.c.l.b16 %v2148
  %v2225 = vunpack.c.h.b16 %v2148
  %v2226 = vunpack.c.l.b16 %v2149
  %v2227 = vunpack.c.l.b16 %v2150
  %v2228 = vunpack.c.h.b16 %v2150
  %v2229 = vunpack.c.l.b16 %v2151
  %v2230 = vunpack.c.l.b16 %v2152
  %v2231 = vunpack.c.h.b16 %v2152
  %v2232 = vunpack.c.l.b16 %v2153
  %v2233 = vunpack.c.l.b16 %v2154
  %v2234 = vunpack.c.h.b16 %v2154
  %v2235 = vunpack.c.l.b16 %v2155
  %v2236 = vpack.c.b16 %v2191, %v2188
  %v2237 = vpack.c.b16 %v2192, %v2189
  %v2238 = vpack.c.b16 %v2193, %v2190
  %v2239 = vpack.c.b16 %v2197, %v2194
  %v2240 = vpack.c.b16 %v2198, %v2195
  %v2241 = vpack.c.b16 %v2199, %v2196
  %v2242 = vpack.c.b16 %v2203, %v2200
  %v2243 = vpack.c.b16 %v2204, %v2201
  %v2244 = vpack.c.b16 %v2205, %v2202
  %v2245 = vpack.c.b16 %v2209, %v2206
  %v2246 = vpack.c.b16 %v2210, %v2207
  %v2247 = vpack.c.b16 %v2211, %v2208
  %v2248 = vpack.c.b16 %v2215, %v2212
  %v2249 = vpack.c.b16 %v2216, %v2213
  %v2250 = vpack.c.b16 %v2217, %v2214
  %v2251 = vpack.c.b16 %v2221, %v2218
  %v2252 = vpack.c.b16 %v2222, %v2219
  %v2253 = vpack.c.b16 %v2223, %v2220
  %v2254 = vpack.c.b16 %v2227, %v2224
  %v2255 = vpack.c.b16 %v2228, %v2225
  %v2256 = vpack.c.b16 %v2229, %v2226
  %v2257 = vpack.c.b16 %v2233, %v2230
  %v2258 = vpack.c.b16 %v2234, %v2231
  %v2259 = vpack.c.b16 %v2235, %v2232
  %2284 = vmatpush.bf16.msra.mxu0 %v2257
  %2285 = vmatpush.bf16.msra.mxu0 %v2254
  %2286 = vmatpush.bf16.msra.mxu0 %v2251
  %2287 = vmatpush.bf16.msra.mxu0 %v2248
  %2288 = vmatpush.bf16.msra.mxu0 %v2245
  %2289 = vmatpush.bf16.msra.mxu0 %v2242
  %2290 = vmatpush.bf16.msra.mxu0 %v2239
  %2291 = vmatpush.bf16.msra.mxu0 %v2236
  %2292 = vmatmul.bf16.gmra.mxu0 %v2117
  %v2293 = vpop.f32.mrf.mxu0
  %v2294 = vadd.f32 %v352, %v2293
  %v2295 = vpop.f32.mrf.mxu0
  %2296 = vdwg.mxu0
  %2297 = vmatpush.bf16.msra.mxu0 %v2258
  %2298 = vmatpush.bf16.msra.mxu0 %v2255
  %2299 = vmatpush.bf16.msra.mxu0 %v2252
  %2300 = vmatpush.bf16.msra.mxu0 %v2249
  %2301 = vmatpush.bf16.msra.mxu0 %v2246
  %2302 = vmatpush.bf16.msra.mxu0 %v2243
  %2303 = vmatpush.bf16.msra.mxu0 %v2240
  %2304 = vmatpush.bf16.msra.mxu0 %v2237
  %2305 = vmatmul.bf16.gmra.mxu0 %v2117
  %v2306 = vpop.f32.mrf.mxu0
  %v2307 = vadd.f32 %v353, %v2306
  %v2308 = vpop.f32.mrf.mxu0
  %2309 = vdwg.mxu0
  %2310 = vmatpush.bf16.msra.mxu0 %v2259
  %2311 = vmatpush.bf16.msra.mxu0 %v2256
  %2312 = vmatpush.bf16.msra.mxu0 %v2253
  %2313 = vmatpush.bf16.msra.mxu0 %v2250
  %2314 = vmatpush.bf16.msra.mxu0 %v2247
  %2315 = vmatpush.bf16.msra.mxu0 %v2244
  %2316 = vmatpush.bf16.msra.mxu0 %v2241
  %2317 = vmatpush.bf16.msra.mxu0 %v2238
  %2318 = vmatmul.bf16.gmra.mxu0 %v2117
  %v2319 = vpop.f32.mrf.mxu0
  %v2320 = vadd.f32 %v354, %v2319
  %v2321 = vpop.f32.mrf.mxu0
  %2322 = vdwg.mxu0
  %v2323 = vadd.f32 %v2121, %v2294
  %v2324 = vxor.u32 %v2323, 2147483648
  %v2325 = vmul.f32 %v2324, 1.442695
  %v2326 = vpow.pop %v2325
  %v2327 = vadd.f32 %v2326, 1.0
  %v2328 = vrcp.pop %v2327
  %v2329 = vmul.f32 %v2327, %v2328
  %v2330 = vsub.f32 1.0, %v2329
  %v2331 = vmul.f32 %v2328, %v2330
  %v2332 = vadd.f32 %v2328, %v2331
  %vm2333 = vweird.f32 %v2327
  %vm2334 = vweird.f32 %v2328
  %vm2335 = vmor %vm2333, %vm2334
  %v2336 = vsel %vm2335, %v2328, %v2332
  %v2337 = vand.u32 2147483647, %v2327
  %vm2338 = vcmp.eq.f32.partialorder %v2337, 8.507059e+37
  %v2339 = vand.u32 %v2327, 2147483648
  %v2340 = vor.u32 1.1754944e-38, %v2339
  %v2341 = vsel %vm2338, %v2340, %v2336
  %v2342 = vmul.f32 1.0, %v2341
  %v2343 = vadd.f32 %v2122, %v2307
  %v2344 = vxor.u32 %v2343, 2147483648
  %v2345 = vmul.f32 %v2344, 1.442695
  %v2346 = vpow.pop %v2345
  %v2347 = vadd.f32 %v2346, 1.0
  %v2348 = vrcp.pop %v2347
  %v2349 = vmul.f32 %v2347, %v2348
  %v2350 = vsub.f32 1.0, %v2349
  %v2351 = vmul.f32 %v2348, %v2350
  %v2352 = vadd.f32 %v2348, %v2351
  %vm2353 = vweird.f32 %v2347
  %vm2354 = vweird.f32 %v2348
  %vm2355 = vmor %vm2353, %vm2354
  %v2356 = vsel %vm2355, %v2348, %v2352
  %v2357 = vand.u32 2147483647, %v2347
  %vm2358 = vcmp.eq.f32.partialorder %v2357, 8.507059e+37
  %v2359 = vand.u32 %v2347, 2147483648
  %v2360 = vor.u32 1.1754944e-38, %v2359
  %v2361 = vsel %vm2358, %v2360, %v2356
  %v2362 = vmul.f32 1.0, %v2361
  %v2363 = vmul.f32 %v2342, %v2320
  %v2364 = vadd.f32 %v2123, %v2363
  %v2365 = vtanh.pop %v2364
  %v2366 = vsub.f32 %v2116, %v2365
  %v2367 = vmul.f32 %v2362, %v2366
  %v2368 = vadd.f32 %v2365, %v2367
  %v2369 = vpack.c.bf16 %v2368, %v2368
  %s2370 = scalar_lea.vmem [#allocation3], 28
  %2371 = vst [vmem:[%s2370] sm:$0xf] %v2369
  %v2372 = vld [vmem:[#allocation3] sm:$0xf]
  %v2373 = vld [vmem:[#allocation3 + $0x4] sm:$0xf]
  %v2374 = vld [vmem:[#allocation3 + $0x8] sm:$0xf]
  %v2375 = vld [vmem:[#allocation3 + $0xc] sm:$0xf]
  %v2376 = vld [vmem:[#allocation3 + $0x10] sm:$0xf]
  %v2377 = vld [vmem:[#allocation3 + $0x14] sm:$0xf]
  %v2378 = vld [vmem:[#allocation3 + $0x18] sm:$0xf]
  %v2379 = vld [vmem:[#allocation3 + $0x1c] sm:$0xf]
  %v2380 = vld [vmem:[%s5] sm:$0xff]
  %v2381 = vld [vmem:[%s5 + $0x8] sm:$0xf]
  %v2382 = vld [vmem:[%s5 + $0xc] sm:$0xff]
  %v2383 = vld [vmem:[%s5 + $0x14] sm:$0xf]
  %v2384 = vld [vmem:[%s5 + $0x18] sm:$0xff]
  %v2385 = vld [vmem:[%s5 + $0x20] sm:$0xf]
  %v2386 = vld [vmem:[%s5 + $0x24] sm:$0xff]
  %v2387 = vld [vmem:[%s5 + $0x2c] sm:$0xf]
  %v2388 = vld [vmem:[%s5 + $0x30] sm:$0xff]
  %v2389 = vld [vmem:[%s5 + $0x38] sm:$0xf]
  %v2390 = vld [vmem:[%s5 + $0x3c] sm:$0xff]
  %v2391 = vld [vmem:[%s5 + $0x44] sm:$0xf]
  %v2392 = vld [vmem:[%s5 + $0x48] sm:$0xff]
  %v2393 = vld [vmem:[%s5 + $0x50] sm:$0xf]
  %v2394 = vld [vmem:[%s5 + $0x54] sm:$0xff]
  %v2395 = vld [vmem:[%s5 + $0x5c] sm:$0xf]
  %v2396 = vld [vmem:[%s5 + $0x60] sm:$0xff]
  %v2397 = vld [vmem:[%s5 + $0x68] sm:$0xf]
  %v2398 = vld [vmem:[%s5 + $0x6c] sm:$0xff]
  %v2399 = vld [vmem:[%s5 + $0x74] sm:$0xf]
  %v2400 = vld [vmem:[%s5 + $0x78] sm:$0xff]
  %v2401 = vld [vmem:[%s5 + $0x80] sm:$0xf]
  %v2402 = vld [vmem:[%s5 + $0x84] sm:$0xff]
  %v2403 = vld [vmem:[%s5 + $0x8c] sm:$0xf]
  %v2404 = vld [vmem:[%s5 + $0x90] sm:$0xff]
  %v2405 = vld [vmem:[%s5 + $0x98] sm:$0xf]
  %v2406 = vld [vmem:[%s5 + $0x9c] sm:$0xff]
  %v2407 = vld [vmem:[%s5 + $0xa4] sm:$0xf]
  %v2408 = vld [vmem:[%s5 + $0xa8] sm:$0xff]
  %v2409 = vld [vmem:[%s5 + $0xb0] sm:$0xf]
  %v2410 = vld [vmem:[%s5 + $0xb4] sm:$0xff]
  %v2411 = vld [vmem:[%s5 + $0xbc] sm:$0xf]
  %v2412 = vld [vmem:[%s7] sm:$0x7]
  %v2414 = vperm.slane %v2412, 0
  %v2415 = vperm.slane %v2412, 1
  %v2416 = vperm.slane %v2412, 2
  %v2428 = vunpack.c.l.b16 %v2372
  %v2429 = vunpack.c.l.b16 %v2373
  %v2430 = vunpack.c.l.b16 %v2374
  %v2431 = vunpack.c.l.b16 %v2375
  %v2432 = vunpack.c.l.b16 %v2376
  %v2433 = vunpack.c.l.b16 %v2377
  %v2434 = vunpack.c.l.b16 %v2378
  %v2435 = vunpack.c.l.b16 %v2379
  %v2436 = vpack.c.b16 %v2429, %v2428
  %v2437 = vpack.c.b16 %v2431, %v2430
  %v2438 = vpack.c.b16 %v2433, %v2432
  %v2439 = vpack.c.b16 %v2435, %v2434
  %v2476 = vunpack.c.l.b16 %v2380
  %v2477 = vunpack.c.h.b16 %v2380
  %v2478 = vunpack.c.l.b16 %v2381
  %v2479 = vunpack.c.l.b16 %v2382
  %v2480 = vunpack.c.h.b16 %v2382
  %v2481 = vunpack.c.l.b16 %v2383
  %v2482 = vunpack.c.l.b16 %v2384
  %v2483 = vunpack.c.h.b16 %v2384
  %v2484 = vunpack.c.l.b16 %v2385
  %v2485 = vunpack.c.l.b16 %v2386
  %v2486 = vunpack.c.h.b16 %v2386
  %v2487 = vunpack.c.l.b16 %v2387
  %v2488 = vunpack.c.l.b16 %v2388
  %v2489 = vunpack.c.h.b16 %v2388
  %v2490 = vunpack.c.l.b16 %v2389
  %v2491 = vunpack.c.l.b16 %v2390
  %v2492 = vunpack.c.h.b16 %v2390
  %v2493 = vunpack.c.l.b16 %v2391
  %v2494 = vunpack.c.l.b16 %v2392
  %v2495 = vunpack.c.h.b16 %v2392
  %v2496 = vunpack.c.l.b16 %v2393
  %v2497 = vunpack.c.l.b16 %v2394
  %v2498 = vunpack.c.h.b16 %v2394
  %v2499 = vunpack.c.l.b16 %v2395
  %v2500 = vunpack.c.l.b16 %v2396
  %v2501 = vunpack.c.h.b16 %v2396
  %v2502 = vunpack.c.l.b16 %v2397
  %v2503 = vunpack.c.l.b16 %v2398
  %v2504 = vunpack.c.h.b16 %v2398
  %v2505 = vunpack.c.l.b16 %v2399
  %v2506 = vunpack.c.l.b16 %v2400
  %v2507 = vunpack.c.h.b16 %v2400
  %v2508 = vunpack.c.l.b16 %v2401
  %v2509 = vunpack.c.l.b16 %v2402
  %v2510 = vunpack.c.h.b16 %v2402
  %v2511 = vunpack.c.l.b16 %v2403
  %v2512 = vunpack.c.l.b16 %v2404
  %v2513 = vunpack.c.h.b16 %v2404
  %v2514 = vunpack.c.l.b16 %v2405
  %v2515 = vunpack.c.l.b16 %v2406
  %v2516 = vunpack.c.h.b16 %v2406
  %v2517 = vunpack.c.l.b16 %v2407
  %v2518 = vunpack.c.l.b16 %v2408
  %v2519 = vunpack.c.h.b16 %v2408
  %v2520 = vunpack.c.l.b16 %v2409
  %v2521 = vunpack.c.l.b16 %v2410
  %v2522 = vunpack.c.h.b16 %v2410
  %v2523 = vunpack.c.l.b16 %v2411
  %v2524 = vpack.c.b16 %v2479, %v2476
  %v2525 = vpack.c.b16 %v2480, %v2477
  %v2526 = vpack.c.b16 %v2481, %v2478
  %v2527 = vpack.c.b16 %v2485, %v2482
  %v2528 = vpack.c.b16 %v2486, %v2483
  %v2529 = vpack.c.b16 %v2487, %v2484
  %v2530 = vpack.c.b16 %v2491, %v2488
  %v2531 = vpack.c.b16 %v2492, %v2489
  %v2532 = vpack.c.b16 %v2493, %v2490
  %v2533 = vpack.c.b16 %v2497, %v2494
  %v2534 = vpack.c.b16 %v2498, %v2495
  %v2535 = vpack.c.b16 %v2499, %v2496
  %v2536 = vpack.c.b16 %v2503, %v2500
  %v2537 = vpack.c.b16 %v2504, %v2501
  %v2538 = vpack.c.b16 %v2505, %v2502
  %v2539 = vpack.c.b16 %v2509, %v2506
  %v2540 = vpack.c.b16 %v2510, %v2507
  %v2541 = vpack.c.b16 %v2511, %v2508
  %v2542 = vpack.c.b16 %v2515, %v2512
  %v2543 = vpack.c.b16 %v2516, %v2513
  %v2544 = vpack.c.b16 %v2517, %v2514
  %v2545 = vpack.c.b16 %v2521, %v2518
  %v2546 = vpack.c.b16 %v2522, %v2519
  %v2547 = vpack.c.b16 %v2523, %v2520
  %2572 = vmatpush.bf16.msra.mxu0 %v2545
  %2573 = vmatpush.bf16.msra.mxu0 %v2542
  %2574 = vmatpush.bf16.msra.mxu0 %v2539
  %2575 = vmatpush.bf16.msra.mxu0 %v2536
  %2576 = vmatpush.bf16.msra.mxu0 %v2533
  %2577 = vmatpush.bf16.msra.mxu0 %v2530
  %2578 = vmatpush.bf16.msra.mxu0 %v2527
  %2579 = vmatpush.bf16.msra.mxu0 %v2524
  %2580 = vmatmul.bf16.gmra.mxu0 %v2436
  %v2581 = vpop.f32.mrf.mxu0
  %v2582 = vadd.f32 %v2414, %v2581
  %v2583 = vpop.f32.mrf.mxu0
  %v2584 = vadd.f32 %v2414, %v2583
  %2585 = vmatmul.bf16.gmra.mxu0 %v2437
  %v2586 = vpop.f32.mrf.mxu0
  %v2587 = vadd.f32 %v2414, %v2586
  %v2588 = vpop.f32.mrf.mxu0
  %v2589 = vadd.f32 %v2414, %v2588
  %2590 = vmatmul.bf16.gmra.mxu0 %v2438
  %v2591 = vpop.f32.mrf.mxu0
  %v2592 = vadd.f32 %v2414, %v2591
  %v2593 = vpop.f32.mrf.mxu0
  %v2594 = vadd.f32 %v2414, %v2593
  %2595 = vmatmul.bf16.gmra.mxu0 %v2439
  %v2596 = vpop.f32.mrf.mxu0
  %v2597 = vadd.f32 %v2414, %v2596
  %v2598 = vpop.f32.mrf.mxu0
  %v2599 = vadd.f32 %v2414, %v2598
  %2600 = vdwg.mxu0
  %2601 = vmatpush.bf16.msra.mxu0 %v2546
  %2602 = vmatpush.bf16.msra.mxu0 %v2543
  %2603 = vmatpush.bf16.msra.mxu0 %v2540
  %2604 = vmatpush.bf16.msra.mxu0 %v2537
  %2605 = vmatpush.bf16.msra.mxu0 %v2534
  %2606 = vmatpush.bf16.msra.mxu0 %v2531
  %2607 = vmatpush.bf16.msra.mxu0 %v2528
  %2608 = vmatpush.bf16.msra.mxu0 %v2525
  %2609 = vmatmul.bf16.gmra.mxu0 %v2436
  %v2610 = vpop.f32.mrf.mxu0
  %v2611 = vadd.f32 %v2415, %v2610
  %v2612 = vpop.f32.mrf.mxu0
  %v2613 = vadd.f32 %v2415, %v2612
  %2614 = vmatmul.bf16.gmra.mxu0 %v2437
  %v2615 = vpop.f32.mrf.mxu0
  %v2616 = vadd.f32 %v2415, %v2615
  %v2617 = vpop.f32.mrf.mxu0
  %v2618 = vadd.f32 %v2415, %v2617
  %2619 = vmatmul.bf16.gmra.mxu0 %v2438
  %v2620 = vpop.f32.mrf.mxu0
  %v2621 = vadd.f32 %v2415, %v2620
  %v2622 = vpop.f32.mrf.mxu0
  %v2623 = vadd.f32 %v2415, %v2622
  %2624 = vmatmul.bf16.gmra.mxu0 %v2439
  %v2625 = vpop.f32.mrf.mxu0
  %v2626 = vadd.f32 %v2415, %v2625
  %v2627 = vpop.f32.mrf.mxu0
  %v2628 = vadd.f32 %v2415, %v2627
  %2629 = vdwg.mxu0
  %2630 = vmatpush.bf16.msra.mxu0 %v2547
  %2631 = vmatpush.bf16.msra.mxu0 %v2544
  %2632 = vmatpush.bf16.msra.mxu0 %v2541
  %2633 = vmatpush.bf16.msra.mxu0 %v2538
  %2634 = vmatpush.bf16.msra.mxu0 %v2535
  %2635 = vmatpush.bf16.msra.mxu0 %v2532
  %2636 = vmatpush.bf16.msra.mxu0 %v2529
  %2637 = vmatpush.bf16.msra.mxu0 %v2526
  %2638 = vmatmul.bf16.gmra.mxu0 %v2436
  %v2639 = vpop.f32.mrf.mxu0
  %v2640 = vadd.f32 %v2416, %v2639
  %v2641 = vpop.f32.mrf.mxu0
  %v2642 = vadd.f32 %v2416, %v2641
  %2643 = vmatmul.bf16.gmra.mxu0 %v2437
  %v2644 = vpop.f32.mrf.mxu0
  %v2645 = vadd.f32 %v2416, %v2644
  %v2646 = vpop.f32.mrf.mxu0
  %v2647 = vadd.f32 %v2416, %v2646
  %2648 = vmatmul.bf16.gmra.mxu0 %v2438
  %v2649 = vpop.f32.mrf.mxu0
  %v2650 = vadd.f32 %v2416, %v2649
  %v2651 = vpop.f32.mrf.mxu0
  %v2652 = vadd.f32 %v2416, %v2651
  %2653 = vmatmul.bf16.gmra.mxu0 %v2439
  %v2654 = vpop.f32.mrf.mxu0
  %v2655 = vadd.f32 %v2416, %v2654
  %v2656 = vpop.f32.mrf.mxu0
  %v2657 = vadd.f32 %v2416, %v2656
  %2658 = vdwg.mxu0
  %2659 = vst [vmem:[#allocation2] sm:$0xff] %v2582
  %2660 = vst [vmem:[#allocation2 + $0x8] sm:$0xff] %v2611
  %2661 = vst [vmem:[#allocation2 + $0x10] sm:$0xff] %v2640
  %2662 = vst [vmem:[#allocation2 + $0x18] sm:$0xff] %v2584
  %2663 = vst [vmem:[#allocation2 + $0x20] sm:$0xff] %v2613
  %2664 = vst [vmem:[#allocation2 + $0x28] sm:$0xff] %v2642
  %2665 = vst [vmem:[#allocation2 + $0x30] sm:$0xff] %v2587
  %2666 = vst [vmem:[#allocation2 + $0x38] sm:$0xff] %v2616
  %2667 = vst [vmem:[#allocation2 + $0x40] sm:$0xff] %v2645
  %2668 = vst [vmem:[#allocation2 + $0x48] sm:$0xff] %v2589
  %2669 = vst [vmem:[#allocation2 + $0x50] sm:$0xff] %v2618
  %2670 = vst [vmem:[#allocation2 + $0x58] sm:$0xff] %v2647
  %2671 = vst [vmem:[#allocation2 + $0x60] sm:$0xff] %v2592
  %2672 = vst [vmem:[#allocation2 + $0x68] sm:$0xff] %v2621
  %2673 = vst [vmem:[#allocation2 + $0x70] sm:$0xff] %v2650
  %2674 = vst [vmem:[#allocation2 + $0x78] sm:$0xff] %v2594
  %2675 = vst [vmem:[#allocation2 + $0x80] sm:$0xff] %v2623
  %2676 = vst [vmem:[#allocation2 + $0x88] sm:$0xff] %v2652
  %2677 = vst [vmem:[#allocation2 + $0x90] sm:$0xff] %v2597
  %2678 = vst [vmem:[#allocation2 + $0x98] sm:$0xff] %v2626
  %2679 = vst [vmem:[#allocation2 + $0xa0] sm:$0xff] %v2655
  %2680 = vst [vmem:[#allocation2 + $0xa8] sm:$0xff] %v2599
  %2681 = vst [vmem:[#allocation2 + $0xb0] sm:$0xff] %v2628
  %2682 = vst [vmem:[#allocation2 + $0xb8] sm:$0xff] %v2657
  %v2683 = vld [vmem:[%s8] sm:$0x7]
  %v2685 = vperm.slane %v2683, 0
  %v2686 = vperm.slane %v2683, 1
  %v2687 = vperm.slane %v2683, 2
  %v2691 = vld [vmem:[#allocation2] sm:$0xff]
  %v2692 = vld [vmem:[#allocation2 + $0x8] sm:$0xff]
  %v2693 = vld [vmem:[#allocation2 + $0x10] sm:$0xff]
  %v2694 = vld [vmem:[%s6] sm:$0xff]
  %v2695 = vld [vmem:[%s6 + $0x8] sm:$0xf]
  %v2696 = vld [vmem:[%s6 + $0xc] sm:$0xff]
  %v2697 = vld [vmem:[%s6 + $0x14] sm:$0xf]
  %v2698 = vld [vmem:[%s6 + $0x18] sm:$0xff]
  %v2699 = vld [vmem:[%s6 + $0x20] sm:$0xf]
  %v2700 = vld [vmem:[%s6 + $0x24] sm:$0xff]
  %v2701 = vld [vmem:[%s6 + $0x2c] sm:$0xf]
  %v2702 = vld [vmem:[%s6 + $0x30] sm:$0xff]
  %v2703 = vld [vmem:[%s6 + $0x38] sm:$0xf]
  %v2704 = vld [vmem:[%s6 + $0x3c] sm:$0xff]
  %v2705 = vld [vmem:[%s6 + $0x44] sm:$0xf]
  %v2706 = vld [vmem:[%s6 + $0x48] sm:$0xff]
  %v2707 = vld [vmem:[%s6 + $0x50] sm:$0xf]
  %v2708 = vld [vmem:[%s6 + $0x54] sm:$0xff]
  %v2709 = vld [vmem:[%s6 + $0x5c] sm:$0xf]
  %v2710 = vld [vmem:[%s6 + $0x60] sm:$0xff]
  %v2711 = vld [vmem:[%s6 + $0x68] sm:$0xf]
  %v2712 = vld [vmem:[%s6 + $0x6c] sm:$0xff]
  %v2713 = vld [vmem:[%s6 + $0x74] sm:$0xf]
  %v2714 = vld [vmem:[%s6 + $0x78] sm:$0xff]
  %v2715 = vld [vmem:[%s6 + $0x80] sm:$0xf]
  %v2716 = vld [vmem:[%s6 + $0x84] sm:$0xff]
  %v2717 = vld [vmem:[%s6 + $0x8c] sm:$0xf]
  %v2718 = vld [vmem:[%s6 + $0x90] sm:$0xff]
  %v2719 = vld [vmem:[%s6 + $0x98] sm:$0xf]
  %v2720 = vld [vmem:[%s6 + $0x9c] sm:$0xff]
  %v2721 = vld [vmem:[%s6 + $0xa4] sm:$0xf]
  %v2722 = vld [vmem:[%s6 + $0xa8] sm:$0xff]
  %v2723 = vld [vmem:[%s6 + $0xb0] sm:$0xf]
  %v2724 = vld [vmem:[%s6 + $0xb4] sm:$0xff]
  %v2725 = vld [vmem:[%s6 + $0xbc] sm:$0xf]
  %v2758 = vunpack.c.l.b16 %v2694
  %v2759 = vunpack.c.h.b16 %v2694
  %v2760 = vunpack.c.l.b16 %v2695
  %v2761 = vunpack.c.l.b16 %v2696
  %v2762 = vunpack.c.h.b16 %v2696
  %v2763 = vunpack.c.l.b16 %v2697
  %v2764 = vunpack.c.l.b16 %v2698
  %v2765 = vunpack.c.h.b16 %v2698
  %v2766 = vunpack.c.l.b16 %v2699
  %v2767 = vunpack.c.l.b16 %v2700
  %v2768 = vunpack.c.h.b16 %v2700
  %v2769 = vunpack.c.l.b16 %v2701
  %v2770 = vunpack.c.l.b16 %v2702
  %v2771 = vunpack.c.h.b16 %v2702
  %v2772 = vunpack.c.l.b16 %v2703
  %v2773 = vunpack.c.l.b16 %v2704
  %v2774 = vunpack.c.h.b16 %v2704
  %v2775 = vunpack.c.l.b16 %v2705
  %v2776 = vunpack.c.l.b16 %v2706
  %v2777 = vunpack.c.h.b16 %v2706
  %v2778 = vunpack.c.l.b16 %v2707
  %v2779 = vunpack.c.l.b16 %v2708
  %v2780 = vunpack.c.h.b16 %v2708
  %v2781 = vunpack.c.l.b16 %v2709
  %v2782 = vunpack.c.l.b16 %v2710
  %v2783 = vunpack.c.h.b16 %v2710
  %v2784 = vunpack.c.l.b16 %v2711
  %v2785 = vunpack.c.l.b16 %v2712
  %v2786 = vunpack.c.h.b16 %v2712
  %v2787 = vunpack.c.l.b16 %v2713
  %v2788 = vunpack.c.l.b16 %v2714
  %v2789 = vunpack.c.h.b16 %v2714
  %v2790 = vunpack.c.l.b16 %v2715
  %v2791 = vunpack.c.l.b16 %v2716
  %v2792 = vunpack.c.h.b16 %v2716
  %v2793 = vunpack.c.l.b16 %v2717
  %v2794 = vunpack.c.l.b16 %v2718
  %v2795 = vunpack.c.h.b16 %v2718
  %v2796 = vunpack.c.l.b16 %v2719
  %v2797 = vunpack.c.l.b16 %v2720
  %v2798 = vunpack.c.h.b16 %v2720
  %v2799 = vunpack.c.l.b16 %v2721
  %v2800 = vunpack.c.l.b16 %v2722
  %v2801 = vunpack.c.h.b16 %v2722
  %v2802 = vunpack.c.l.b16 %v2723
  %v2803 = vunpack.c.l.b16 %v2724
  %v2804 = vunpack.c.h.b16 %v2724
  %v2805 = vunpack.c.l.b16 %v2725
  %v2806 = vpack.c.b16 %v2761, %v2758
  %v2807 = vpack.c.b16 %v2762, %v2759
  %v2808 = vpack.c.b16 %v2763, %v2760
  %v2809 = vpack.c.b16 %v2767, %v2764
  %v2810 = vpack.c.b16 %v2768, %v2765
  %v2811 = vpack.c.b16 %v2769, %v2766
  %v2812 = vpack.c.b16 %v2773, %v2770
  %v2813 = vpack.c.b16 %v2774, %v2771
  %v2814 = vpack.c.b16 %v2775, %v2772
  %v2815 = vpack.c.b16 %v2779, %v2776
  %v2816 = vpack.c.b16 %v2780, %v2777
  %v2817 = vpack.c.b16 %v2781, %v2778
  %v2818 = vpack.c.b16 %v2785, %v2782
  %v2819 = vpack.c.b16 %v2786, %v2783
  %v2820 = vpack.c.b16 %v2787, %v2784
  %v2821 = vpack.c.b16 %v2791, %v2788
  %v2822 = vpack.c.b16 %v2792, %v2789
  %v2823 = vpack.c.b16 %v2793, %v2790
  %v2824 = vpack.c.b16 %v2797, %v2794
  %v2825 = vpack.c.b16 %v2798, %v2795
  %v2826 = vpack.c.b16 %v2799, %v2796
  %v2827 = vpack.c.b16 %v2803, %v2800
  %v2828 = vpack.c.b16 %v2804, %v2801
  %v2829 = vpack.c.b16 %v2805, %v2802
  %2854 = vmatpush.bf16.msra.mxu0 %v2827
  %2855 = vmatpush.bf16.msra.mxu0 %v2824
  %2856 = vmatpush.bf16.msra.mxu0 %v2821
  %2857 = vmatpush.bf16.msra.mxu0 %v2818
  %2858 = vmatpush.bf16.msra.mxu0 %v2815
  %2859 = vmatpush.bf16.msra.mxu0 %v2812
  %2860 = vmatpush.bf16.msra.mxu0 %v2809
  %2861 = vmatpush.bf16.msra.mxu0 %v2806
  %2862 = vmatmul.bf16.gmra.mxu0 0
  %v2863 = vpop.f32.mrf.mxu0
  %v2864 = vadd.f32 %v2685, %v2863
  %v2865 = vpop.f32.mrf.mxu0
  %2866 = vdwg.mxu0
  %2867 = vmatpush.bf16.msra.mxu0 %v2828
  %2868 = vmatpush.bf16.msra.mxu0 %v2825
  %2869 = vmatpush.bf16.msra.mxu0 %v2822
  %2870 = vmatpush.bf16.msra.mxu0 %v2819
  %2871 = vmatpush.bf16.msra.mxu0 %v2816
  %2872 = vmatpush.bf16.msra.mxu0 %v2813
  %2873 = vmatpush.bf16.msra.mxu0 %v2810
  %2874 = vmatpush.bf16.msra.mxu0 %v2807
  %2875 = vmatmul.bf16.gmra.mxu0 0
  %v2876 = vpop.f32.mrf.mxu0
  %v2877 = vadd.f32 %v2686, %v2876
  %v2878 = vpop.f32.mrf.mxu0
  %2879 = vdwg.mxu0
  %2880 = vmatpush.bf16.msra.mxu0 %v2829
  %2881 = vmatpush.bf16.msra.mxu0 %v2826
  %2882 = vmatpush.bf16.msra.mxu0 %v2823
  %2883 = vmatpush.bf16.msra.mxu0 %v2820
  %2884 = vmatpush.bf16.msra.mxu0 %v2817
  %2885 = vmatpush.bf16.msra.mxu0 %v2814
  %2886 = vmatpush.bf16.msra.mxu0 %v2811
  %2887 = vmatpush.bf16.msra.mxu0 %v2808
  %2888 = vmatmul.bf16.gmra.mxu0 0
  %v2889 = vpop.f32.mrf.mxu0
  %v2890 = vadd.f32 %v2687, %v2889
  %v2891 = vpop.f32.mrf.mxu0
  %2892 = vdwg.mxu0
  %v2893 = vadd.f32 %v2691, %v2864
  %v2894 = vxor.u32 %v2893, 2147483648
  %v2895 = vmul.f32 %v2894, 1.442695
  %v2896 = vpow.pop %v2895
  %v2897 = vadd.f32 %v2896, 1.0
  %v2898 = vrcp.pop %v2897
  %v2899 = vmul.f32 %v2897, %v2898
  %v2900 = vsub.f32 1.0, %v2899
  %v2901 = vmul.f32 %v2898, %v2900
  %v2902 = vadd.f32 %v2898, %v2901
  %vm2903 = vweird.f32 %v2897
  %vm2904 = vweird.f32 %v2898
  %vm2905 = vmor %vm2903, %vm2904
  %v2906 = vsel %vm2905, %v2898, %v2902
  %v2907 = vand.u32 2147483647, %v2897
  %vm2908 = vcmp.eq.f32.partialorder %v2907, 8.507059e+37
  %v2909 = vand.u32 %v2897, 2147483648
  %v2910 = vor.u32 1.1754944e-38, %v2909
  %v2911 = vsel %vm2908, %v2910, %v2906
  %v2912 = vmul.f32 1.0, %v2911
  %v2913 = vadd.f32 %v2692, %v2877
  %v2914 = vxor.u32 %v2913, 2147483648
  %v2915 = vmul.f32 %v2914, 1.442695
  %v2916 = vpow.pop %v2915
  %v2917 = vadd.f32 %v2916, 1.0
  %v2918 = vrcp.pop %v2917
  %v2919 = vmul.f32 %v2917, %v2918
  %v2920 = vsub.f32 1.0, %v2919
  %v2921 = vmul.f32 %v2918, %v2920
  %v2922 = vadd.f32 %v2918, %v2921
  %vm2923 = vweird.f32 %v2917
  %vm2924 = vweird.f32 %v2918
  %vm2925 = vmor %vm2923, %vm2924
  %v2926 = vsel %vm2925, %v2918, %v2922
  %v2927 = vand.u32 2147483647, %v2917
  %vm2928 = vcmp.eq.f32.partialorder %v2927, 8.507059e+37
  %v2929 = vand.u32 %v2917, 2147483648
  %v2930 = vor.u32 1.1754944e-38, %v2929
  %v2931 = vsel %vm2928, %v2930, %v2926
  %v2932 = vmul.f32 1.0, %v2931
  %v2933 = vmul.f32 %v2912, %v2890
  %v2934 = vadd.f32 %v2693, %v2933
  %v2935 = vtanh.pop %v2934
  %v2936 = vsub.f32 0.0, %v2935
  %v2937 = vmul.f32 %v2932, %v2936
  %v2938 = vadd.f32 %v2935, %v2937
  %v2939 = vld [vmem:[%s608] sm:$0xff]
  %v2940 = vld [vmem:[%s608 + $0x8] sm:$0xff]
  %v2941 = vld [vmem:[%s608 + $0x10] sm:$0xff]
  %v2942 = vpack.c.bf16 %v2938, %v2938
  %2943 = vmatpush.bf16.msra.mxu0 %v2827
  %2944 = vmatpush.bf16.msra.mxu0 %v2824
  %2945 = vmatpush.bf16.msra.mxu0 %v2821
  %2946 = vmatpush.bf16.msra.mxu0 %v2818
  %2947 = vmatpush.bf16.msra.mxu0 %v2815
  %2948 = vmatpush.bf16.msra.mxu0 %v2812
  %2949 = vmatpush.bf16.msra.mxu0 %v2809
  %2950 = vmatpush.bf16.msra.mxu0 %v2806
  %2951 = vmatmul.bf16.gmra.mxu0 %v2942
  %v2952 = vpop.f32.mrf.mxu0
  %v2953 = vadd.f32 %v2685, %v2952
  %v2954 = vpop.f32.mrf.mxu0
  %2955 = vdwg.mxu0
  %2956 = vmatpush.bf16.msra.mxu0 %v2828
  %2957 = vmatpush.bf16.msra.mxu0 %v2825
  %2958 = vmatpush.bf16.msra.mxu0 %v2822
  %2959 = vmatpush.bf16.msra.mxu0 %v2819
  %2960 = vmatpush.bf16.msra.mxu0 %v2816
  %2961 = vmatpush.bf16.msra.mxu0 %v2813
  %2962 = vmatpush.bf16.msra.mxu0 %v2810
  %2963 = vmatpush.bf16.msra.mxu0 %v2807
  %2964 = vmatmul.bf16.gmra.mxu0 %v2942
  %v2965 = vpop.f32.mrf.mxu0
  %v2966 = vadd.f32 %v2686, %v2965
  %v2967 = vpop.f32.mrf.mxu0
  %2968 = vdwg.mxu0
  %2969 = vmatpush.bf16.msra.mxu0 %v2829
  %2970 = vmatpush.bf16.msra.mxu0 %v2826
  %2971 = vmatpush.bf16.msra.mxu0 %v2823
  %2972 = vmatpush.bf16.msra.mxu0 %v2820
  %2973 = vmatpush.bf16.msra.mxu0 %v2817
  %2974 = vmatpush.bf16.msra.mxu0 %v2814
  %2975 = vmatpush.bf16.msra.mxu0 %v2811
  %2976 = vmatpush.bf16.msra.mxu0 %v2808
  %2977 = vmatmul.bf16.gmra.mxu0 %v2942
  %v2978 = vpop.f32.mrf.mxu0
  %v2979 = vadd.f32 %v2687, %v2978
  %v2980 = vpop.f32.mrf.mxu0
  %2981 = vdwg.mxu0
  %v2982 = vadd.f32 %v2939, %v2953
  %v2983 = vxor.u32 %v2982, 2147483648
  %v2984 = vmul.f32 %v2983, 1.442695
  %v2985 = vpow.pop %v2984
  %v2986 = vadd.f32 %v2985, 1.0
  %v2987 = vrcp.pop %v2986
  %v2988 = vmul.f32 %v2986, %v2987
  %v2989 = vsub.f32 1.0, %v2988
  %v2990 = vmul.f32 %v2987, %v2989
  %v2991 = vadd.f32 %v2987, %v2990
  %vm2992 = vweird.f32 %v2986
  %vm2993 = vweird.f32 %v2987
  %vm2994 = vmor %vm2992, %vm2993
  %v2995 = vsel %vm2994, %v2987, %v2991
  %v2996 = vand.u32 2147483647, %v2986
  %vm2997 = vcmp.eq.f32.partialorder %v2996, 8.507059e+37
  %v2998 = vand.u32 %v2986, 2147483648
  %v2999 = vor.u32 1.1754944e-38, %v2998
  %v3000 = vsel %vm2997, %v2999, %v2995
  %v3001 = vmul.f32 1.0, %v3000
  %v3002 = vadd.f32 %v2940, %v2966
  %v3003 = vxor.u32 %v3002, 2147483648
  %v3004 = vmul.f32 %v3003, 1.442695
  %v3005 = vpow.pop %v3004
  %v3006 = vadd.f32 %v3005, 1.0
  %v3007 = vrcp.pop %v3006
  %v3008 = vmul.f32 %v3006, %v3007
  %v3009 = vsub.f32 1.0, %v3008
  %v3010 = vmul.f32 %v3007, %v3009
  %v3011 = vadd.f32 %v3007, %v3010
  %vm3012 = vweird.f32 %v3006
  %vm3013 = vweird.f32 %v3007
  %vm3014 = vmor %vm3012, %vm3013
  %v3015 = vsel %vm3014, %v3007, %v3011
  %v3016 = vand.u32 2147483647, %v3006
  %vm3017 = vcmp.eq.f32.partialorder %v3016, 8.507059e+37
  %v3018 = vand.u32 %v3006, 2147483648
  %v3019 = vor.u32 1.1754944e-38, %v3018
  %v3020 = vsel %vm3017, %v3019, %v3015
  %v3021 = vmul.f32 1.0, %v3020
  %v3022 = vmul.f32 %v3001, %v2979
  %v3023 = vadd.f32 %v2941, %v3022
  %v3024 = vtanh.pop %v3023
  %v3025 = vsub.f32 %v2938, %v3024
  %v3026 = vmul.f32 %v3021, %v3025
  %v3027 = vadd.f32 %v3024, %v3026
  %v3028 = vld [vmem:[%s860] sm:$0xff]
  %v3029 = vld [vmem:[%s860 + $0x8] sm:$0xff]
  %v3030 = vld [vmem:[%s860 + $0x10] sm:$0xff]
  %v3031 = vpack.c.bf16 %v3027, %v3027
  %3032 = vmatpush.bf16.msra.mxu0 %v2827
  %3033 = vmatpush.bf16.msra.mxu0 %v2824
  %3034 = vmatpush.bf16.msra.mxu0 %v2821
  %3035 = vmatpush.bf16.msra.mxu0 %v2818
  %3036 = vmatpush.bf16.msra.mxu0 %v2815
  %3037 = vmatpush.bf16.msra.mxu0 %v2812
  %3038 = vmatpush.bf16.msra.mxu0 %v2809
  %3039 = vmatpush.bf16.msra.mxu0 %v2806
  %3040 = vmatmul.bf16.gmra.mxu0 %v3031
  %v3041 = vpop.f32.mrf.mxu0
  %v3042 = vadd.f32 %v2685, %v3041
  %v3043 = vpop.f32.mrf.mxu0
  %3044 = vdwg.mxu0
  %3045 = vmatpush.bf16.msra.mxu0 %v2828
  %3046 = vmatpush.bf16.msra.mxu0 %v2825
  %3047 = vmatpush.bf16.msra.mxu0 %v2822
  %3048 = vmatpush.bf16.msra.mxu0 %v2819
  %3049 = vmatpush.bf16.msra.mxu0 %v2816
  %3050 = vmatpush.bf16.msra.mxu0 %v2813
  %3051 = vmatpush.bf16.msra.mxu0 %v2810
  %3052 = vmatpush.bf16.msra.mxu0 %v2807
  %3053 = vmatmul.bf16.gmra.mxu0 %v3031
  %v3054 = vpop.f32.mrf.mxu0
  %v3055 = vadd.f32 %v2686, %v3054
  %v3056 = vpop.f32.mrf.mxu0
  %3057 = vdwg.mxu0
  %3058 = vmatpush.bf16.msra.mxu0 %v2829
  %3059 = vmatpush.bf16.msra.mxu0 %v2826
  %3060 = vmatpush.bf16.msra.mxu0 %v2823
  %3061 = vmatpush.bf16.msra.mxu0 %v2820
  %3062 = vmatpush.bf16.msra.mxu0 %v2817
  %3063 = vmatpush.bf16.msra.mxu0 %v2814
  %3064 = vmatpush.bf16.msra.mxu0 %v2811
  %3065 = vmatpush.bf16.msra.mxu0 %v2808
  %3066 = vmatmul.bf16.gmra.mxu0 %v3031
  %v3067 = vpop.f32.mrf.mxu0
  %v3068 = vadd.f32 %v2687, %v3067
  %v3069 = vpop.f32.mrf.mxu0
  %3070 = vdwg.mxu0
  %v3071 = vadd.f32 %v3028, %v3042
  %v3072 = vxor.u32 %v3071, 2147483648
  %v3073 = vmul.f32 %v3072, 1.442695
  %v3074 = vpow.pop %v3073
  %v3075 = vadd.f32 %v3074, 1.0
  %v3076 = vrcp.pop %v3075
  %v3077 = vmul.f32 %v3075, %v3076
  %v3078 = vsub.f32 1.0, %v3077
  %v3079 = vmul.f32 %v3076, %v3078
  %v3080 = vadd.f32 %v3076, %v3079
  %vm3081 = vweird.f32 %v3075
  %vm3082 = vweird.f32 %v3076
  %vm3083 = vmor %vm3081, %vm3082
  %v3084 = vsel %vm3083, %v3076, %v3080
  %v3085 = vand.u32 2147483647, %v3075
  %vm3086 = vcmp.eq.f32.partialorder %v3085, 8.507059e+37
  %v3087 = vand.u32 %v3075, 2147483648
  %v3088 = vor.u32 1.1754944e-38, %v3087
  %v3089 = vsel %vm3086, %v3088, %v3084
  %v3090 = vmul.f32 1.0, %v3089
  %v3091 = vadd.f32 %v3029, %v3055
  %v3092 = vxor.u32 %v3091, 2147483648
  %v3093 = vmul.f32 %v3092, 1.442695
  %v3094 = vpow.pop %v3093
  %v3095 = vadd.f32 %v3094, 1.0
  %v3096 = vrcp.pop %v3095
  %v3097 = vmul.f32 %v3095, %v3096
  %v3098 = vsub.f32 1.0, %v3097
  %v3099 = vmul.f32 %v3096, %v3098
  %v3100 = vadd.f32 %v3096, %v3099
  %vm3101 = vweird.f32 %v3095
  %vm3102 = vweird.f32 %v3096
  %vm3103 = vmor %vm3101, %vm3102
  %v3104 = vsel %vm3103, %v3096, %v3100
  %v3105 = vand.u32 2147483647, %v3095
  %vm3106 = vcmp.eq.f32.partialorder %v3105, 8.507059e+37
  %v3107 = vand.u32 %v3095, 2147483648
  %v3108 = vor.u32 1.1754944e-38, %v3107
  %v3109 = vsel %vm3106, %v3108, %v3104
  %v3110 = vmul.f32 1.0, %v3109
  %v3111 = vmul.f32 %v3090, %v3068
  %v3112 = vadd.f32 %v3030, %v3111
  %v3113 = vtanh.pop %v3112
  %v3114 = vsub.f32 %v3027, %v3113
  %v3115 = vmul.f32 %v3110, %v3114
  %v3116 = vadd.f32 %v3113, %v3115
  %v3117 = vld [vmem:[%s1112] sm:$0xff]
  %v3118 = vld [vmem:[%s1112 + $0x8] sm:$0xff]
  %v3119 = vld [vmem:[%s1112 + $0x10] sm:$0xff]
  %v3120 = vpack.c.bf16 %v3116, %v3116
  %3121 = vmatpush.bf16.msra.mxu0 %v2827
  %3122 = vmatpush.bf16.msra.mxu0 %v2824
  %3123 = vmatpush.bf16.msra.mxu0 %v2821
  %3124 = vmatpush.bf16.msra.mxu0 %v2818
  %3125 = vmatpush.bf16.msra.mxu0 %v2815
  %3126 = vmatpush.bf16.msra.mxu0 %v2812
  %3127 = vmatpush.bf16.msra.mxu0 %v2809
  %3128 = vmatpush.bf16.msra.mxu0 %v2806
  %3129 = vmatmul.bf16.gmra.mxu0 %v3120
  %v3130 = vpop.f32.mrf.mxu0
  %v3131 = vadd.f32 %v2685, %v3130
  %v3132 = vpop.f32.mrf.mxu0
  %3133 = vdwg.mxu0
  %3134 = vmatpush.bf16.msra.mxu0 %v2828
  %3135 = vmatpush.bf16.msra.mxu0 %v2825
  %3136 = vmatpush.bf16.msra.mxu0 %v2822
  %3137 = vmatpush.bf16.msra.mxu0 %v2819
  %3138 = vmatpush.bf16.msra.mxu0 %v2816
  %3139 = vmatpush.bf16.msra.mxu0 %v2813
  %3140 = vmatpush.bf16.msra.mxu0 %v2810
  %3141 = vmatpush.bf16.msra.mxu0 %v2807
  %3142 = vmatmul.bf16.gmra.mxu0 %v3120
  %v3143 = vpop.f32.mrf.mxu0
  %v3144 = vadd.f32 %v2686, %v3143
  %v3145 = vpop.f32.mrf.mxu0
  %3146 = vdwg.mxu0
  %3147 = vmatpush.bf16.msra.mxu0 %v2829
  %3148 = vmatpush.bf16.msra.mxu0 %v2826
  %3149 = vmatpush.bf16.msra.mxu0 %v2823
  %3150 = vmatpush.bf16.msra.mxu0 %v2820
  %3151 = vmatpush.bf16.msra.mxu0 %v2817
  %3152 = vmatpush.bf16.msra.mxu0 %v2814
  %3153 = vmatpush.bf16.msra.mxu0 %v2811
  %3154 = vmatpush.bf16.msra.mxu0 %v2808
  %3155 = vmatmul.bf16.gmra.mxu0 %v3120
  %v3156 = vpop.f32.mrf.mxu0
  %v3157 = vadd.f32 %v2687, %v3156
  %v3158 = vpop.f32.mrf.mxu0
  %3159 = vdwg.mxu0
  %v3160 = vadd.f32 %v3117, %v3131
  %v3161 = vxor.u32 %v3160, 2147483648
  %v3162 = vmul.f32 %v3161, 1.442695
  %v3163 = vpow.pop %v3162
  %v3164 = vadd.f32 %v3163, 1.0
  %v3165 = vrcp.pop %v3164
  %v3166 = vmul.f32 %v3164, %v3165
  %v3167 = vsub.f32 1.0, %v3166
  %v3168 = vmul.f32 %v3165, %v3167
  %v3169 = vadd.f32 %v3165, %v3168
  %vm3170 = vweird.f32 %v3164
  %vm3171 = vweird.f32 %v3165
  %vm3172 = vmor %vm3170, %vm3171
  %v3173 = vsel %vm3172, %v3165, %v3169
  %v3174 = vand.u32 2147483647, %v3164
  %vm3175 = vcmp.eq.f32.partialorder %v3174, 8.507059e+37
  %v3176 = vand.u32 %v3164, 2147483648
  %v3177 = vor.u32 1.1754944e-38, %v3176
  %v3178 = vsel %vm3175, %v3177, %v3173
  %v3179 = vmul.f32 1.0, %v3178
  %v3180 = vadd.f32 %v3118, %v3144
  %v3181 = vxor.u32 %v3180, 2147483648
  %v3182 = vmul.f32 %v3181, 1.442695
  %v3183 = vpow.pop %v3182
  %v3184 = vadd.f32 %v3183, 1.0
  %v3185 = vrcp.pop %v3184
  %v3186 = vmul.f32 %v3184, %v3185
  %v3187 = vsub.f32 1.0, %v3186
  %v3188 = vmul.f32 %v3185, %v3187
  %v3189 = vadd.f32 %v3185, %v3188
  %vm3190 = vweird.f32 %v3184
  %vm3191 = vweird.f32 %v3185
  %vm3192 = vmor %vm3190, %vm3191
  %v3193 = vsel %vm3192, %v3185, %v3189
  %v3194 = vand.u32 2147483647, %v3184
  %vm3195 = vcmp.eq.f32.partialorder %v3194, 8.507059e+37
  %v3196 = vand.u32 %v3184, 2147483648
  %v3197 = vor.u32 1.1754944e-38, %v3196
  %v3198 = vsel %vm3195, %v3197, %v3193
  %v3199 = vmul.f32 1.0, %v3198
  %v3200 = vmul.f32 %v3179, %v3157
  %v3201 = vadd.f32 %v3119, %v3200
  %v3202 = vtanh.pop %v3201
  %v3203 = vsub.f32 %v3116, %v3202
  %v3204 = vmul.f32 %v3199, %v3203
  %v3205 = vadd.f32 %v3202, %v3204
  %v3206 = vld [vmem:[%s1364] sm:$0xff]
  %v3207 = vld [vmem:[%s1364 + $0x8] sm:$0xff]
  %v3208 = vld [vmem:[%s1364 + $0x10] sm:$0xff]
  %v3209 = vpack.c.bf16 %v3205, %v3205
  %3210 = vmatpush.bf16.msra.mxu0 %v2827
  %3211 = vmatpush.bf16.msra.mxu0 %v2824
  %3212 = vmatpush.bf16.msra.mxu0 %v2821
  %3213 = vmatpush.bf16.msra.mxu0 %v2818
  %3214 = vmatpush.bf16.msra.mxu0 %v2815
  %3215 = vmatpush.bf16.msra.mxu0 %v2812
  %3216 = vmatpush.bf16.msra.mxu0 %v2809
  %3217 = vmatpush.bf16.msra.mxu0 %v2806
  %3218 = vmatmul.bf16.gmra.mxu0 %v3209
  %v3219 = vpop.f32.mrf.mxu0
  %v3220 = vadd.f32 %v2685, %v3219
  %v3221 = vpop.f32.mrf.mxu0
  %3222 = vdwg.mxu0
  %3223 = vmatpush.bf16.msra.mxu0 %v2828
  %3224 = vmatpush.bf16.msra.mxu0 %v2825
  %3225 = vmatpush.bf16.msra.mxu0 %v2822
  %3226 = vmatpush.bf16.msra.mxu0 %v2819
  %3227 = vmatpush.bf16.msra.mxu0 %v2816
  %3228 = vmatpush.bf16.msra.mxu0 %v2813
  %3229 = vmatpush.bf16.msra.mxu0 %v2810
  %3230 = vmatpush.bf16.msra.mxu0 %v2807
  %3231 = vmatmul.bf16.gmra.mxu0 %v3209
  %v3232 = vpop.f32.mrf.mxu0
  %v3233 = vadd.f32 %v2686, %v3232
  %v3234 = vpop.f32.mrf.mxu0
  %3235 = vdwg.mxu0
  %3236 = vmatpush.bf16.msra.mxu0 %v2829
  %3237 = vmatpush.bf16.msra.mxu0 %v2826
  %3238 = vmatpush.bf16.msra.mxu0 %v2823
  %3239 = vmatpush.bf16.msra.mxu0 %v2820
  %3240 = vmatpush.bf16.msra.mxu0 %v2817
  %3241 = vmatpush.bf16.msra.mxu0 %v2814
  %3242 = vmatpush.bf16.msra.mxu0 %v2811
  %3243 = vmatpush.bf16.msra.mxu0 %v2808
  %3244 = vmatmul.bf16.gmra.mxu0 %v3209
  %v3245 = vpop.f32.mrf.mxu0
  %v3246 = vadd.f32 %v2687, %v3245
  %v3247 = vpop.f32.mrf.mxu0
  %3248 = vdwg.mxu0
  %v3249 = vadd.f32 %v3206, %v3220
  %v3250 = vxor.u32 %v3249, 2147483648
  %v3251 = vmul.f32 %v3250, 1.442695
  %v3252 = vpow.pop %v3251
  %v3253 = vadd.f32 %v3252, 1.0
  %v3254 = vrcp.pop %v3253
  %v3255 = vmul.f32 %v3253, %v3254
  %v3256 = vsub.f32 1.0, %v3255
  %v3257 = vmul.f32 %v3254, %v3256
  %v3258 = vadd.f32 %v3254, %v3257
  %vm3259 = vweird.f32 %v3253
  %vm3260 = vweird.f32 %v3254
  %vm3261 = vmor %vm3259, %vm3260
  %v3262 = vsel %vm3261, %v3254, %v3258
  %v3263 = vand.u32 2147483647, %v3253
  %vm3264 = vcmp.eq.f32.partialorder %v3263, 8.507059e+37
  %v3265 = vand.u32 %v3253, 2147483648
  %v3266 = vor.u32 1.1754944e-38, %v3265
  %v3267 = vsel %vm3264, %v3266, %v3262
  %v3268 = vmul.f32 1.0, %v3267
  %v3269 = vadd.f32 %v3207, %v3233
  %v3270 = vxor.u32 %v3269, 2147483648
  %v3271 = vmul.f32 %v3270, 1.442695
  %v3272 = vpow.pop %v3271
  %v3273 = vadd.f32 %v3272, 1.0
  %v3274 = vrcp.pop %v3273
  %v3275 = vmul.f32 %v3273, %v3274
  %v3276 = vsub.f32 1.0, %v3275
  %v3277 = vmul.f32 %v3274, %v3276
  %v3278 = vadd.f32 %v3274, %v3277
  %vm3279 = vweird.f32 %v3273
  %vm3280 = vweird.f32 %v3274
  %vm3281 = vmor %vm3279, %vm3280
  %v3282 = vsel %vm3281, %v3274, %v3278
  %v3283 = vand.u32 2147483647, %v3273
  %vm3284 = vcmp.eq.f32.partialorder %v3283, 8.507059e+37
  %v3285 = vand.u32 %v3273, 2147483648
  %v3286 = vor.u32 1.1754944e-38, %v3285
  %v3287 = vsel %vm3284, %v3286, %v3282
  %v3288 = vmul.f32 1.0, %v3287
  %v3289 = vmul.f32 %v3268, %v3246
  %v3290 = vadd.f32 %v3208, %v3289
  %v3291 = vtanh.pop %v3290
  %v3292 = vsub.f32 %v3205, %v3291
  %v3293 = vmul.f32 %v3288, %v3292
  %v3294 = vadd.f32 %v3291, %v3293
  %v3295 = vld [vmem:[%s1616] sm:$0xff]
  %v3296 = vld [vmem:[%s1616 + $0x8] sm:$0xff]
  %v3297 = vld [vmem:[%s1616 + $0x10] sm:$0xff]
  %v3298 = vpack.c.bf16 %v3294, %v3294
  %3299 = vmatpush.bf16.msra.mxu0 %v2827
  %3300 = vmatpush.bf16.msra.mxu0 %v2824
  %3301 = vmatpush.bf16.msra.mxu0 %v2821
  %3302 = vmatpush.bf16.msra.mxu0 %v2818
  %3303 = vmatpush.bf16.msra.mxu0 %v2815
  %3304 = vmatpush.bf16.msra.mxu0 %v2812
  %3305 = vmatpush.bf16.msra.mxu0 %v2809
  %3306 = vmatpush.bf16.msra.mxu0 %v2806
  %3307 = vmatmul.bf16.gmra.mxu0 %v3298
  %v3308 = vpop.f32.mrf.mxu0
  %v3309 = vadd.f32 %v2685, %v3308
  %v3310 = vpop.f32.mrf.mxu0
  %3311 = vdwg.mxu0
  %3312 = vmatpush.bf16.msra.mxu0 %v2828
  %3313 = vmatpush.bf16.msra.mxu0 %v2825
  %3314 = vmatpush.bf16.msra.mxu0 %v2822
  %3315 = vmatpush.bf16.msra.mxu0 %v2819
  %3316 = vmatpush.bf16.msra.mxu0 %v2816
  %3317 = vmatpush.bf16.msra.mxu0 %v2813
  %3318 = vmatpush.bf16.msra.mxu0 %v2810
  %3319 = vmatpush.bf16.msra.mxu0 %v2807
  %3320 = vmatmul.bf16.gmra.mxu0 %v3298
  %v3321 = vpop.f32.mrf.mxu0
  %v3322 = vadd.f32 %v2686, %v3321
  %v3323 = vpop.f32.mrf.mxu0
  %3324 = vdwg.mxu0
  %3325 = vmatpush.bf16.msra.mxu0 %v2829
  %3326 = vmatpush.bf16.msra.mxu0 %v2826
  %3327 = vmatpush.bf16.msra.mxu0 %v2823
  %3328 = vmatpush.bf16.msra.mxu0 %v2820
  %3329 = vmatpush.bf16.msra.mxu0 %v2817
  %3330 = vmatpush.bf16.msra.mxu0 %v2814
  %3331 = vmatpush.bf16.msra.mxu0 %v2811
  %3332 = vmatpush.bf16.msra.mxu0 %v2808
  %3333 = vmatmul.bf16.gmra.mxu0 %v3298
  %v3334 = vpop.f32.mrf.mxu0
  %v3335 = vadd.f32 %v2687, %v3334
  %v3336 = vpop.f32.mrf.mxu0
  %3337 = vdwg.mxu0
  %v3338 = vadd.f32 %v3295, %v3309
  %v3339 = vxor.u32 %v3338, 2147483648
  %v3340 = vmul.f32 %v3339, 1.442695
  %v3341 = vpow.pop %v3340
  %v3342 = vadd.f32 %v3341, 1.0
  %v3343 = vrcp.pop %v3342
  %v3344 = vmul.f32 %v3342, %v3343
  %v3345 = vsub.f32 1.0, %v3344
  %v3346 = vmul.f32 %v3343, %v3345
  %v3347 = vadd.f32 %v3343, %v3346
  %vm3348 = vweird.f32 %v3342
  %vm3349 = vweird.f32 %v3343
  %vm3350 = vmor %vm3348, %vm3349
  %v3351 = vsel %vm3350, %v3343, %v3347
  %v3352 = vand.u32 2147483647, %v3342
  %vm3353 = vcmp.eq.f32.partialorder %v3352, 8.507059e+37
  %v3354 = vand.u32 %v3342, 2147483648
  %v3355 = vor.u32 1.1754944e-38, %v3354
  %v3356 = vsel %vm3353, %v3355, %v3351
  %v3357 = vmul.f32 1.0, %v3356
  %v3358 = vadd.f32 %v3296, %v3322
  %v3359 = vxor.u32 %v3358, 2147483648
  %v3360 = vmul.f32 %v3359, 1.442695
  %v3361 = vpow.pop %v3360
  %v3362 = vadd.f32 %v3361, 1.0
  %v3363 = vrcp.pop %v3362
  %v3364 = vmul.f32 %v3362, %v3363
  %v3365 = vsub.f32 1.0, %v3364
  %v3366 = vmul.f32 %v3363, %v3365
  %v3367 = vadd.f32 %v3363, %v3366
  %vm3368 = vweird.f32 %v3362
  %vm3369 = vweird.f32 %v3363
  %vm3370 = vmor %vm3368, %vm3369
  %v3371 = vsel %vm3370, %v3363, %v3367
  %v3372 = vand.u32 2147483647, %v3362
  %vm3373 = vcmp.eq.f32.partialorder %v3372, 8.507059e+37
  %v3374 = vand.u32 %v3362, 2147483648
  %v3375 = vor.u32 1.1754944e-38, %v3374
  %v3376 = vsel %vm3373, %v3375, %v3371
  %v3377 = vmul.f32 1.0, %v3376
  %v3378 = vmul.f32 %v3357, %v3335
  %v3379 = vadd.f32 %v3297, %v3378
  %v3380 = vtanh.pop %v3379
  %v3381 = vsub.f32 %v3294, %v3380
  %v3382 = vmul.f32 %v3377, %v3381
  %v3383 = vadd.f32 %v3380, %v3382
  %v3384 = vld [vmem:[%s1868] sm:$0xff]
  %v3385 = vld [vmem:[%s1868 + $0x8] sm:$0xff]
  %v3386 = vld [vmem:[%s1868 + $0x10] sm:$0xff]
  %v3387 = vpack.c.bf16 %v3383, %v3383
  %3388 = vmatpush.bf16.msra.mxu0 %v2827
  %3389 = vmatpush.bf16.msra.mxu0 %v2824
  %3390 = vmatpush.bf16.msra.mxu0 %v2821
  %3391 = vmatpush.bf16.msra.mxu0 %v2818
  %3392 = vmatpush.bf16.msra.mxu0 %v2815
  %3393 = vmatpush.bf16.msra.mxu0 %v2812
  %3394 = vmatpush.bf16.msra.mxu0 %v2809
  %3395 = vmatpush.bf16.msra.mxu0 %v2806
  %3396 = vmatmul.bf16.gmra.mxu0 %v3387
  %v3397 = vpop.f32.mrf.mxu0
  %v3398 = vadd.f32 %v2685, %v3397
  %v3399 = vpop.f32.mrf.mxu0
  %3400 = vdwg.mxu0
  %3401 = vmatpush.bf16.msra.mxu0 %v2828
  %3402 = vmatpush.bf16.msra.mxu0 %v2825
  %3403 = vmatpush.bf16.msra.mxu0 %v2822
  %3404 = vmatpush.bf16.msra.mxu0 %v2819
  %3405 = vmatpush.bf16.msra.mxu0 %v2816
  %3406 = vmatpush.bf16.msra.mxu0 %v2813
  %3407 = vmatpush.bf16.msra.mxu0 %v2810
  %3408 = vmatpush.bf16.msra.mxu0 %v2807
  %3409 = vmatmul.bf16.gmra.mxu0 %v3387
  %v3410 = vpop.f32.mrf.mxu0
  %v3411 = vadd.f32 %v2686, %v3410
  %v3412 = vpop.f32.mrf.mxu0
  %3413 = vdwg.mxu0
  %3414 = vmatpush.bf16.msra.mxu0 %v2829
  %3415 = vmatpush.bf16.msra.mxu0 %v2826
  %3416 = vmatpush.bf16.msra.mxu0 %v2823
  %3417 = vmatpush.bf16.msra.mxu0 %v2820
  %3418 = vmatpush.bf16.msra.mxu0 %v2817
  %3419 = vmatpush.bf16.msra.mxu0 %v2814
  %3420 = vmatpush.bf16.msra.mxu0 %v2811
  %3421 = vmatpush.bf16.msra.mxu0 %v2808
  %3422 = vmatmul.bf16.gmra.mxu0 %v3387
  %v3423 = vpop.f32.mrf.mxu0
  %v3424 = vadd.f32 %v2687, %v3423
  %v3425 = vpop.f32.mrf.mxu0
  %3426 = vdwg.mxu0
  %v3427 = vadd.f32 %v3384, %v3398
  %v3428 = vxor.u32 %v3427, 2147483648
  %v3429 = vmul.f32 %v3428, 1.442695
  %v3430 = vpow.pop %v3429
  %v3431 = vadd.f32 %v3430, 1.0
  %v3432 = vrcp.pop %v3431
  %v3433 = vmul.f32 %v3431, %v3432
  %v3434 = vsub.f32 1.0, %v3433
  %v3435 = vmul.f32 %v3432, %v3434
  %v3436 = vadd.f32 %v3432, %v3435
  %vm3437 = vweird.f32 %v3431
  %vm3438 = vweird.f32 %v3432
  %vm3439 = vmor %vm3437, %vm3438
  %v3440 = vsel %vm3439, %v3432, %v3436
  %v3441 = vand.u32 2147483647, %v3431
  %vm3442 = vcmp.eq.f32.partialorder %v3441, 8.507059e+37
  %v3443 = vand.u32 %v3431, 2147483648
  %v3444 = vor.u32 1.1754944e-38, %v3443
  %v3445 = vsel %vm3442, %v3444, %v3440
  %v3446 = vmul.f32 1.0, %v3445
  %v3447 = vadd.f32 %v3385, %v3411
  %v3448 = vxor.u32 %v3447, 2147483648
  %v3449 = vmul.f32 %v3448, 1.442695
  %v3450 = vpow.pop %v3449
  %v3451 = vadd.f32 %v3450, 1.0
  %v3452 = vrcp.pop %v3451
  %v3453 = vmul.f32 %v3451, %v3452
  %v3454 = vsub.f32 1.0, %v3453
  %v3455 = vmul.f32 %v3452, %v3454
  %v3456 = vadd.f32 %v3452, %v3455
  %vm3457 = vweird.f32 %v3451
  %vm3458 = vweird.f32 %v3452
  %vm3459 = vmor %vm3457, %vm3458
  %v3460 = vsel %vm3459, %v3452, %v3456
  %v3461 = vand.u32 2147483647, %v3451
  %vm3462 = vcmp.eq.f32.partialorder %v3461, 8.507059e+37
  %v3463 = vand.u32 %v3451, 2147483648
  %v3464 = vor.u32 1.1754944e-38, %v3463
  %v3465 = vsel %vm3462, %v3464, %v3460
  %v3466 = vmul.f32 1.0, %v3465
  %v3467 = vmul.f32 %v3446, %v3424
  %v3468 = vadd.f32 %v3386, %v3467
  %v3469 = vtanh.pop %v3468
  %v3470 = vsub.f32 %v3383, %v3469
  %v3471 = vmul.f32 %v3466, %v3470
  %v3472 = vadd.f32 %v3469, %v3471
  %v3473 = vld [vmem:[%s2120] sm:$0xff]
  %v3474 = vld [vmem:[%s2120 + $0x8] sm:$0xff]
  %v3475 = vld [vmem:[%s2120 + $0x10] sm:$0xff]
  %v3476 = vpack.c.bf16 %v3472, %v3472
  %3477 = vmatpush.bf16.msra.mxu0 %v2827
  %3478 = vmatpush.bf16.msra.mxu0 %v2824
  %3479 = vmatpush.bf16.msra.mxu0 %v2821
  %3480 = vmatpush.bf16.msra.mxu0 %v2818
  %3481 = vmatpush.bf16.msra.mxu0 %v2815
  %3482 = vmatpush.bf16.msra.mxu0 %v2812
  %3483 = vmatpush.bf16.msra.mxu0 %v2809
  %3484 = vmatpush.bf16.msra.mxu0 %v2806
  %3485 = vmatmul.bf16.gmra.mxu0 %v3476
  %v3486 = vpop.f32.mrf.mxu0
  %v3487 = vadd.f32 %v2685, %v3486
  %v3488 = vpop.f32.mrf.mxu0
  %3489 = vdwg.mxu0
  %3490 = vmatpush.bf16.msra.mxu0 %v2828
  %3491 = vmatpush.bf16.msra.mxu0 %v2825
  %3492 = vmatpush.bf16.msra.mxu0 %v2822
  %3493 = vmatpush.bf16.msra.mxu0 %v2819
  %3494 = vmatpush.bf16.msra.mxu0 %v2816
  %3495 = vmatpush.bf16.msra.mxu0 %v2813
  %3496 = vmatpush.bf16.msra.mxu0 %v2810
  %3497 = vmatpush.bf16.msra.mxu0 %v2807
  %3498 = vmatmul.bf16.gmra.mxu0 %v3476
  %v3499 = vpop.f32.mrf.mxu0
  %v3500 = vadd.f32 %v2686, %v3499
  %v3501 = vpop.f32.mrf.mxu0
  %3502 = vdwg.mxu0
  %3503 = vmatpush.bf16.msra.mxu0 %v2829
  %3504 = vmatpush.bf16.msra.mxu0 %v2826
  %3505 = vmatpush.bf16.msra.mxu0 %v2823
  %3506 = vmatpush.bf16.msra.mxu0 %v2820
  %3507 = vmatpush.bf16.msra.mxu0 %v2817
  %3508 = vmatpush.bf16.msra.mxu0 %v2814
  %3509 = vmatpush.bf16.msra.mxu0 %v2811
  %3510 = vmatpush.bf16.msra.mxu0 %v2808
  %3511 = vmatmul.bf16.gmra.mxu0 %v3476
  %v3512 = vpop.f32.mrf.mxu0
  %v3513 = vadd.f32 %v2687, %v3512
  %v3514 = vpop.f32.mrf.mxu0
  %3515 = vdwg.mxu0
  %v3516 = vadd.f32 %v3473, %v3487
  %v3517 = vxor.u32 %v3516, 2147483648
  %v3518 = vmul.f32 %v3517, 1.442695
  %v3519 = vpow.pop %v3518
  %v3520 = vadd.f32 %v3519, 1.0
  %v3521 = vrcp.pop %v3520
  %v3522 = vmul.f32 %v3520, %v3521
  %v3523 = vsub.f32 1.0, %v3522
  %v3524 = vmul.f32 %v3521, %v3523
  %v3525 = vadd.f32 %v3521, %v3524
  %vm3526 = vweird.f32 %v3520
  %vm3527 = vweird.f32 %v3521
  %vm3528 = vmor %vm3526, %vm3527
  %v3529 = vsel %vm3528, %v3521, %v3525
  %v3530 = vand.u32 2147483647, %v3520
  %vm3531 = vcmp.eq.f32.partialorder %v3530, 8.507059e+37
  %v3532 = vand.u32 %v3520, 2147483648
  %v3533 = vor.u32 1.1754944e-38, %v3532
  %v3534 = vsel %vm3531, %v3533, %v3529
  %v3535 = vmul.f32 1.0, %v3534
  %v3536 = vadd.f32 %v3474, %v3500
  %v3537 = vxor.u32 %v3536, 2147483648
  %v3538 = vmul.f32 %v3537, 1.442695
  %v3539 = vpow.pop %v3538
  %v3540 = vadd.f32 %v3539, 1.0
  %v3541 = vrcp.pop %v3540
  %v3542 = vmul.f32 %v3540, %v3541
  %v3543 = vsub.f32 1.0, %v3542
  %v3544 = vmul.f32 %v3541, %v3543
  %v3545 = vadd.f32 %v3541, %v3544
  %vm3546 = vweird.f32 %v3540
  %vm3547 = vweird.f32 %v3541
  %vm3548 = vmor %vm3546, %vm3547
  %v3549 = vsel %vm3548, %v3541, %v3545
  %v3550 = vand.u32 2147483647, %v3540
  %vm3551 = vcmp.eq.f32.partialorder %v3550, 8.507059e+37
  %v3552 = vand.u32 %v3540, 2147483648
  %v3553 = vor.u32 1.1754944e-38, %v3552
  %v3554 = vsel %vm3551, %v3553, %v3549
  %v3555 = vmul.f32 1.0, %v3554
  %v3556 = vmul.f32 %v3535, %v3513
  %v3557 = vadd.f32 %v3475, %v3556
  %v3558 = vtanh.pop %v3557
  %v3559 = vsub.f32 %v3472, %v3558
  %v3560 = vmul.f32 %v3555, %v3559
  %v3561 = vadd.f32 %v3558, %v3560
  %v3562 = vld [vmem:[%s9] sm:$0xff]
  %v3563 = vld [vmem:[%s9 + $0x8] sm:$0xff]
  %v3564 = vld [vmem:[%s9 + $0x10] sm:$0xff]
  %v3565 = vld [vmem:[%s9 + $0x18] sm:$0xff]
  %v3566 = vld [vmem:[%s9 + $0x20] sm:$0xff]
  %v3567 = vld [vmem:[%s9 + $0x28] sm:$0xff]
  %v3568 = vld [vmem:[%s9 + $0x30] sm:$0xff]
  %v3569 = vld [vmem:[%s9 + $0x38] sm:$0xff]
  %v3570 = vld [vmem:[%s9 + $0x40] sm:$0xff]
  %v3571 = vld [vmem:[%s9 + $0x48] sm:$0xff]
  %v3572 = vld [vmem:[%s9 + $0x50] sm:$0xff]
  %v3573 = vld [vmem:[%s9 + $0x58] sm:$0xff]
  %v3574 = vld [vmem:[%s9 + $0x60] sm:$0xff]
  %v3575 = vld [vmem:[%s9 + $0x68] sm:$0xff]
  %v3576 = vld [vmem:[%s9 + $0x70] sm:$0xff]
  %v3577 = vld [vmem:[%s9 + $0x78] sm:$0xff]
  %v3578 = vld [vmem:[%s10] sm:$0x1]
  %v3580 = vperm.slane %v3578, 0
  %3582 = vmatpush.msra.mxu0 %v3577
  %3583 = vmatpush.msra.mxu0 %v3576
  %3584 = vmatpush.msra.mxu0 %v3575
  %3585 = vmatpush.msra.mxu0 %v3574
  %3586 = vmatpush.msra.mxu0 %v3573
  %3587 = vmatpush.msra.mxu0 %v3572
  %3588 = vmatpush.msra.mxu0 %v3571
  %3589 = vmatpush.msra.mxu0 %v3570
  %3590 = vmatpush.msra.mxu0 %v3569
  %3591 = vmatpush.msra.mxu0 %v3568
  %3592 = vmatpush.msra.mxu0 %v3567
  %3593 = vmatpush.msra.mxu0 %v3566
  %3594 = vmatpush.msra.mxu0 %v3565
  %3595 = vmatpush.msra.mxu0 %v3564
  %3596 = vmatpush.msra.mxu0 %v3563
  %3597 = vmatpush.msra.mxu0 %v3562
  %3598 = vmatmul.f32.gmra.mxu0 %v3561
  %v3599 = vpop.f32.mrf.mxu0
  %v3600 = vadd.f32 %v3580, %v3599
  %3601 = vdwg.mxu0
  %3602 = vst [vmem:[%s11] sm:$0xff] %v3600
  // Predicated region
  $region46: #{gru_model_forward.1} parent=0 // pred_check
    _
  $region47: #{gru_model_forward.1} parent=0 // pred_check_branch
    %3604 = sbr.rel (0) target = $region49
  $region48: #{gru_model_forward.1} parent=0 // pred_region
    _
  $region49: #{gru_model_forward.1} parent=0 // pred_fallthru
    _
  // Predicated region
  $region50: #{gru_model_forward.1} parent=0 // pred_check
    _
  $region51: #{gru_model_forward.1} parent=0 // pred_check_branch
    %3606 = sbr.rel (0) target = $region53
  $region52: #{gru_model_forward.1} parent=0 // pred_region
    _
  $region53: #{gru_model_forward.1} parent=0 // pred_fallthru
    _

</llo_original>
